<compile_context>
chip_gen: v7x
topology: tpu7x:2x2x1
jax: 0.10.0
libtpu: 0.0.40
codegen_flags: <defaults>
</compile_context>

<pallas_src>
import functools

import jax
import jax.numpy as jnp
from jax import lax
from jax.experimental import pallas as pl
from jax.experimental.pallas import tpu as pltpu


_VMEM_LIMIT = 48 * 1024 * 1024   # explicit scoped-VMEM budget (< v7x's 64 MiB physical)
_MAX_SPATIAL_TILE = 2048         # lane-tile for the flattened spatial axis


def _pick_tile(n, max_tile=_MAX_SPATIAL_TILE, align=128):
    """Largest lane-aligned tile that divides n (falls back to the full axis)."""
    if n <= max_tile:
        return n
    t = (max_tile // align) * align
    while t >= align:
        if n % t == 0:
            return t
        t -= align
    return n


# ---------------------------------------------------------------------------
# Shared-weight channel matmul (1x1 conv), spatial axis tiled
# ---------------------------------------------------------------------------

def _wx_kernel(w_ref, x_ref, o_ref):
    # w: (M, K) shared weight (resident), x block: (1, K, TN), out block: (1, M, TN)
    o_ref[0] = jnp.dot(w_ref[...], x_ref[0],
                       preferred_element_type=jnp.float32).astype(o_ref.dtype)


def wx_matmul(w, x, out_dtype=None):
    """(M, K) @ (B, K, N) -> (B, M, N). Weight stays resident; N is tiled so the
    pipeline double-buffers lane-dense blocks instead of loading whole slabs."""
    B, K, N = x.shape
    M = w.shape[0]
    tn = _pick_tile(N)
    out_dtype = out_dtype or x.dtype
    return pl.pallas_call(
        _wx_kernel,
        out_shape=jax.ShapeDtypeStruct((B, M, N), out_dtype),
        grid=(B, N // tn),
        in_specs=[pl.BlockSpec((M, K), lambda b, n: (0, 0)),
                  pl.BlockSpec((1, K, tn), lambda b, n: (b, 0, n))],
        out_specs=pl.BlockSpec((1, M, tn), lambda b, n: (b, 0, n)),
        compiler_params=pltpu.CompilerParams(
            dimension_semantics=("parallel", "parallel"),
            vmem_limit_bytes=_VMEM_LIMIT),
    )(w, x)


# ---------------------------------------------------------------------------
# Fused (1x1 kv conv) o (3x3 "deformable" conv) as one in-kernel 9-tap conv
# ---------------------------------------------------------------------------

def _conv3x3_kernel(w_ref, x_ref, o_ref, *, Wp, L):
    # w_ref: (9, Cout, Cin) bf16 (resident); x_ref: (1, Cin, Hp*Wp + 2) f32
    # o_ref: (1, Cout, H*Wp) bf16 -- columns j in [W, Wp) of each row are junk
    # (flat-offset trick) and are stripped in the wrapper.
    xb = x_ref[0].astype(jnp.bfloat16)            # single cast of the resident block
    acc = jnp.zeros(o_ref.shape[1:], jnp.float32)
    for ky in range(3):
        for kx in range(3):
            off = ky * Wp + kx                    # static offset -> VMEM slice, no HBM re-read
            acc += jnp.dot(w_ref[ky * 3 + kx], xb[:, off:off + L],
                           preferred_element_type=jnp.float32)
    o_ref[0] = acc.astype(o_ref.dtype)


def fused_kv_conv(w_kv, w_kvconv, x):
    """kv_conv(kv(x)) collapsed into one 3x3/pad1 conv on x. Returns (B, 2C, H*W) bf16."""
    B, Cin, H, W = x.shape
    Cout = w_kvconv.shape[0]
    Hp, Wp = H + 2, W + 2
    L = H * Wp

    # Algebraic fusion of the 1x1 conv into the 3x3 conv (both linear, bias-free).
    w_eff = jnp.einsum('omyx,mc->ocyx', w_kvconv, w_kv)
    w9 = jnp.transpose(w_eff, (2, 3, 0, 1)).reshape(9, Cout, Cin).astype(jnp.bfloat16)

    xp = jnp.pad(x, ((0, 0), (0, 0), (1, 1), (1, 1))).reshape(B, Cin, Hp * Wp)
    xp = jnp.pad(xp, ((0, 0), (0, 0), (0, 2)))    # slack so every tap slice stays in bounds

    kernel = functools.partial(_conv3x3_kernel, Wp=Wp, L=L)
    y = pl.pallas_call(
        kernel,
        out_shape=jax.ShapeDtypeStruct((B, Cout, L), jnp.bfloat16),
        grid=(B,),
        in_specs=[pl.BlockSpec((9, Cout, Cin), lambda b: (0, 0, 0)),
                  pl.BlockSpec((1, Cin, Hp * Wp + 2), lambda b: (b, 0, 0))],
        out_specs=pl.BlockSpec((1, Cout, L), lambda b: (b, 0, 0)),
        compiler_params=pltpu.CompilerParams(
            dimension_semantics=("parallel",),
            vmem_limit_bytes=_VMEM_LIMIT),
    )(w9, xp)
    # Strip the Wp-stride junk columns introduced by the flat 9-tap trick.
    return y.reshape(B, Cout, H, Wp)[:, :, :, :W].reshape(B, Cout, H * W)


# ---------------------------------------------------------------------------
# Attention: flash-style score kernel (streams HW) + attn@v kernel (streams HW)
# ---------------------------------------------------------------------------

def _attn_scores_kernel(t_ref, q_ref, k_ref, attn_ref, g_acc, qq_acc, kk_acc):
    t = pl.program_id(1)

    @pl.when(t == 0)
    def _():
        g_acc[...] = jnp.zeros_like(g_acc)
        qq_acc[...] = jnp.zeros_like(qq_acc)
        kk_acc[...] = jnp.zeros_like(kk_acc)

    q = q_ref[0]                                   # (NH, DH, THW)
    k = k_ref[0]                                   # (NH, DH, THW) bf16
    q32 = q.astype(jnp.float32)
    k32 = k.astype(jnp.float32)

    # Accumulate raw gram matrix and squared row norms over the HW tiles (MXU bf16, f32 acc).
    g_acc[...] += jnp.einsum('hiw,hjw->hij', q.astype(jnp.bfloat16), k,
                             preferred_element_type=jnp.float32)
    qq_acc[...] += jnp.sum(q32 * q32, axis=-1, keepdims=True)             # (NH, DH, 1)
    ones_row = jnp.ones(q.shape[:1] + (1,) + q.shape[-1:], jnp.float32)
    kk_acc[...] += jnp.einsum('hxw,hjw->hxj', ones_row, k32 * k32,
                              preferred_element_type=jnp.float32)         # (NH, 1, DH)

    @pl.when(t == pl.num_programs(1) - 1)
    def _():
        eps2 = jnp.float32(1e-24)                  # F.normalize eps=1e-12 applied to ||.||^2
        q_inv = lax.rsqrt(jnp.maximum(qq_acc[...], eps2))                 # EUP rsqrt
        k_inv = lax.rsqrt(jnp.maximum(kk_acc[...], eps2))
        s = g_acc[...] * q_inv * k_inv * t_ref[...]
        s = s - jnp.max(s, axis=-1, keepdims=True)
        e = jnp.exp(s)
        attn = e * pl.reciprocal(jnp.sum(e, axis=-1, keepdims=True), approx=False)
        attn_ref[0] = attn.astype(attn_ref.dtype)


def mdta_attention_scores(temperature, q, k):
    """softmax(normalize(q) @ normalize(k)^T * temperature) per (batch, head).

    q: (B, NH, DH, HW) f32; k: (B, NH, DH, HW) bf16 -> attn (B, NH, DH, DH) f32.
    HW is streamed in lane-aligned tiles (normalisation factored out of the matmul),
    so peak VMEM is bounded regardless of resolution."""
    B, NH, DH, HW = q.shape
    thw = _pick_tile(HW)
    return pl.pallas_call(
        _attn_scores_kernel,
        out_shape=jax.ShapeDtypeStruct((B, NH, DH, DH), jnp.float32),
        grid=(B, HW // thw),
        in_specs=[pl.BlockSpec((NH, 1, 1), lambda b, t: (0, 0, 0)),
                  pl.BlockSpec((1, NH, DH, thw), lambda b, t: (b, 0, 0, t)),
                  pl.BlockSpec((1, NH, DH, thw), lambda b, t: (b, 0, 0, t))],
        out_specs=pl.BlockSpec((1, NH, DH, DH), lambda b, t: (b, 0, 0, 0)),
        scratch_shapes=[pltpu.VMEM((NH, DH, DH), jnp.float32),
                        pltpu.VMEM((NH, DH, 1), jnp.float32),
                        pltpu.VMEM((NH, 1, DH), jnp.float32)],
        compiler_params=pltpu.CompilerParams(
            dimension_semantics=("parallel", "arbitrary"),
            vmem_limit_bytes=_VMEM_LIMIT),
    )(temperature, q, k)


def _attn_apply_kernel(a_ref, v_ref, o_ref):
    o_ref[0] = jnp.einsum('hij,hjw->hiw', a_ref[0].astype(jnp.bfloat16), v_ref[0],
                          preferred_element_type=jnp.float32).astype(o_ref.dtype)


def mdta_attention_apply(attn, v):
    """attn (B, NH, DH, DH) f32 @ v (B, NH, DH, HW) bf16 -> (B, NH, DH, HW) bf16, HW tiled."""
    B, NH, DH, HW = v.shape
    thw = _pick_tile(HW)
    return pl.pallas_call(
        _attn_apply_kernel,
        out_shape=jax.ShapeDtypeStruct((B, NH, DH, HW), jnp.bfloat16),
        grid=(B, HW // thw),
        in_specs=[pl.BlockSpec((1, NH, DH, DH), lambda b, t: (b, 0, 0, 0)),
                  pl.BlockSpec((1, NH, DH, thw), lambda b, t: (b, 0, 0, t))],
        out_specs=pl.BlockSpec((1, NH, DH, thw), lambda b, t: (b, 0, 0, t)),
        compiler_params=pltpu.CompilerParams(
            dimension_semantics=("parallel", "parallel"),
            vmem_limit_bytes=_VMEM_LIMIT),
    )(attn, v)


# ---------------------------------------------------------------------------
# packed_attn @ unpacked_attn: all the tiny (dh, dh) matmuls in ONE grid step
# ---------------------------------------------------------------------------

def _attn_prod_kernel(a_ref, b_ref, o_ref):
    o_ref[...] = jnp.einsum('bij,bjk->bik', a_ref[...], b_ref[...],
                            preferred_element_type=jnp.float32).astype(o_ref.dtype)


def attn_product(a, b):
    return pl.pallas_call(
        _attn_prod_kernel,
        out_shape=jax.ShapeDtypeStruct(a.shape, jnp.float32),
    )(a, b)


# ---------------------------------------------------------------------------
# Module wiring
# ---------------------------------------------------------------------------

def init_mdta_params(key, channels, num_heads):
    k1, k2, k3 = jax.random.split(key, 3)
    return {
        # temperature init = ones (per nn.Parameter(torch.ones(1, heads, 1, 1)))
        "temperature": jnp.ones((num_heads,), jnp.float32),
        "w_kv": 0.1 * jax.random.normal(k1, (2 * channels, channels), jnp.float32),
        "w_kvconv": 0.1 * jax.random.normal(k2, (2 * channels, 2 * channels, 3, 3),
                                            jnp.float32),
        "w_proj": 0.1 * jax.random.normal(k3, (channels, channels), jnp.float32),
    }


def mdta_forward(prm, x, q_raw, num_heads):
    """One MDTA block. x, q_raw: (B, C, H, W) f32 (q is L2-normalised in-kernel).
    Returns (out (B,C,H,W) f32, attn (B, NH, dh, dh) f32)."""
    B, C, H, W = x.shape
    HW = H * W
    dh = C // num_heads

    kv = fused_kv_conv(prm["w_kv"], prm["w_kvconv"], x)           # (B, 2C, HW) bf16
    k = kv[:, :C].reshape(B, num_heads, dh, HW)
    v = kv[:, C:].reshape(B, num_heads, dh, HW)

    qh = q_raw.reshape(B, num_heads, dh, HW)
    temp = prm["temperature"].reshape(num_heads, 1, 1).astype(jnp.float32)

    attn = mdta_attention_scores(temp, qh, k)                     # (B, NH, dh, dh) f32
    ctx = mdta_attention_apply(attn, v)                           # (B, NH, dh, HW) bf16

    out = wx_matmul(prm["w_proj"].astype(jnp.bfloat16),
                    ctx.reshape(B, C, HW),
                    out_dtype=jnp.float32).reshape(B, C, H, W)    # project_out (1x1, no bias)
    return out, attn


def nested_mdta_forward(params, x, p, num_heads):
    # Pack attention: q = normalize(p) (done inside the score kernel).
    packed, packed_attn = mdta_forward(params["pack"], x, p, num_heads)
    # Unpack attention: reference feeds normalize(p) and re-normalises it;
    # normalize is idempotent (up to eps), so raw p is fed and q never hits HBM.
    unpacked, unpacked_attn = mdta_forward(params["unpack"], packed, p, num_heads)

    B, NH, dh, _ = packed_attn.shape
    prod = attn_product(packed_attn.reshape(B * NH, dh, dh),
                        unpacked_attn.reshape(B * NH, dh, dh)).reshape(B, NH, dh, dh)
    return unpacked, packed, prod


# ---------------------------------------------------------------------------

if __name__ == "__main__":
    B, C, H, W = 2, 8, 16, 16
    NUM_HEADS = 2

    key = jax.random.PRNGKey(0)
    kx, kp, kpack, kunpack = jax.random.split(key, 4)
    x = jax.random.normal(kx, (B, C, H, W), jnp.float32)
    p = jax.random.normal(kp, (B, C, H, W), jnp.float32)

    params = {
        "pack": init_mdta_params(kpack, C, NUM_HEADS),
        "unpack": init_mdta_params(kunpack, C, NUM_HEADS),
    }

    fwd = jax.jit(functools.partial(nested_mdta_forward, num_heads=NUM_HEADS))
    unpacked_context, packed_context, attn_prod = fwd(params, x, p)
    jax.block_until_ready((unpacked_context, packed_context, attn_prod))

    assert unpacked_context.shape == (B, C, H, W)
    assert packed_context.shape == (B, C, H, W)
    assert attn_prod.shape == (B, NUM_HEADS, C // NUM_HEADS, C // NUM_HEADS)
    print("KERNEL_OK")
</pallas_src>

<mosaic_0001>
module attributes {stable_mosaic.version = 11 : i64} {
  func.func @_conv3x3_kernel(%arg0: i32, %arg1: memref<9x16x8xbf16, #tpu.memory_space<vmem>>, %arg2: memref<1x8x326xf32, #tpu.memory_space<vmem>>, %arg3: memref<1x16x288xbf16, #tpu.memory_space<vmem>>) attributes {dimension_semantics = [#tpu.dimension_semantics<parallel>], iteration_bounds = array<i64: 2>, scalar_prefetch = 0 : i64, scratch_operands = 0 : i64, tpu.core_type = #tpu.core_type<tc>, window_params = [{pipeline_mode = #tpu.pipeline_mode<synchronous>, transform_indices = @transform_0, window_bounds = array<i64: 9, 16, 8>}, {transform_indices = @transform_1, window_bounds = array<i64: 1, 8, 326>}, {transform_indices = @transform_2, window_bounds = array<i64: 1, 16, 288>}]} {
    %c0 = arith.constant 0 : index
    %c0_0 = arith.constant 0 : index
    %c0_1 = arith.constant 0 : index
    %0 = vector.load %arg2[%c0, %c0_0, %c0_1] : memref<1x8x326xf32, #tpu.memory_space<vmem>>, vector<1x8x326xf32>
    %1 = vector.shape_cast %0 : vector<1x8x326xf32> to vector<8x326xf32>
    %2 = arith.truncf %1 : vector<8x326xf32> to vector<8x326xbf16>
    %cst = arith.constant 0.000000e+00 : f32
    %3 = vector.broadcast %cst : f32 to vector<16x288xf32>
    %c0_2 = arith.constant 0 : index
    %c0_3 = arith.constant 0 : index
    %c0_4 = arith.constant 0 : index
    %4 = vector.load %arg1[%c0_2, %c0_3, %c0_4] : memref<9x16x8xbf16, #tpu.memory_space<vmem>>, vector<1x16x8xbf16>
    %5 = vector.shape_cast %4 : vector<1x16x8xbf16> to vector<16x8xbf16>
    %6 = vector.extract_strided_slice %2 {offsets = [0, 0], sizes = [8, 288], strides = [1, 1]} : vector<8x326xbf16> to vector<8x288xbf16>
    %cst_5 = arith.constant dense<0.000000e+00> : vector<16x288xf32>
    %7 = tpu.matmul %5, %6, %cst_5 {dimension_numbers = #tpu.dot_dimension_numbers<[1], [0], [0], [1], [0, 0, 1, 1], [], []>} : vector<16x8xbf16>, vector<8x288xbf16>, vector<16x288xf32> -> vector<16x288xf32>
    %8 = arith.addf %3, %7 : vector<16x288xf32>
    %c1 = arith.constant 1 : index
    %c0_6 = arith.constant 0 : index
    %c0_7 = arith.constant 0 : index
    %9 = vector.load %arg1[%c1, %c0_6, %c0_7] : memref<9x16x8xbf16, #tpu.memory_space<vmem>>, vector<1x16x8xbf16>
    %10 = vector.shape_cast %9 : vector<1x16x8xbf16> to vector<16x8xbf16>
    %11 = vector.extract_strided_slice %2 {offsets = [0, 1], sizes = [8, 288], strides = [1, 1]} : vector<8x326xbf16> to vector<8x288xbf16>
    %cst_8 = arith.constant dense<0.000000e+00> : vector<16x288xf32>
    %12 = tpu.matmul %10, %11, %cst_8 {dimension_numbers = #tpu.dot_dimension_numbers<[1], [0], [0], [1], [0, 0, 1, 1], [], []>} : vector<16x8xbf16>, vector<8x288xbf16>, vector<16x288xf32> -> vector<16x288xf32>
    %13 = arith.addf %8, %12 : vector<16x288xf32>
    %c2 = arith.constant 2 : index
    %c0_9 = arith.constant 0 : index
    %c0_10 = arith.constant 0 : index
    %14 = vector.load %arg1[%c2, %c0_9, %c0_10] : memref<9x16x8xbf16, #tpu.memory_space<vmem>>, vector<1x16x8xbf16>
    %15 = vector.shape_cast %14 : vector<1x16x8xbf16> to vector<16x8xbf16>
    %16 = vector.extract_strided_slice %2 {offsets = [0, 2], sizes = [8, 288], strides = [1, 1]} : vector<8x326xbf16> to vector<8x288xbf16>
    %cst_11 = arith.constant dense<0.000000e+00> : vector<16x288xf32>
    %17 = tpu.matmul %15, %16, %cst_11 {dimension_numbers = #tpu.dot_dimension_numbers<[1], [0], [0], [1], [0, 0, 1, 1], [], []>} : vector<16x8xbf16>, vector<8x288xbf16>, vector<16x288xf32> -> vector<16x288xf32>
    %18 = arith.addf %13, %17 : vector<16x288xf32>
    %c3 = arith.constant 3 : index
    %c0_12 = arith.constant 0 : index
    %c0_13 = arith.constant 0 : index
    %19 = vector.load %arg1[%c3, %c0_12, %c0_13] : memref<9x16x8xbf16, #tpu.memory_space<vmem>>, vector<1x16x8xbf16>
    %20 = vector.shape_cast %19 : vector<1x16x8xbf16> to vector<16x8xbf16>
    %21 = vector.extract_strided_slice %2 {offsets = [0, 18], sizes = [8, 288], strides = [1, 1]} : vector<8x326xbf16> to vector<8x288xbf16>
    %cst_14 = arith.constant dense<0.000000e+00> : vector<16x288xf32>
    %22 = tpu.matmul %20, %21, %cst_14 {dimension_numbers = #tpu.dot_dimension_numbers<[1], [0], [0], [1], [0, 0, 1, 1], [], []>} : vector<16x8xbf16>, vector<8x288xbf16>, vector<16x288xf32> -> vector<16x288xf32>
    %23 = arith.addf %18, %22 : vector<16x288xf32>
    %c4 = arith.constant 4 : index
    %c0_15 = arith.constant 0 : index
    %c0_16 = arith.constant 0 : index
    %24 = vector.load %arg1[%c4, %c0_15, %c0_16] : memref<9x16x8xbf16, #tpu.memory_space<vmem>>, vector<1x16x8xbf16>
    %25 = vector.shape_cast %24 : vector<1x16x8xbf16> to vector<16x8xbf16>
    %26 = vector.extract_strided_slice %2 {offsets = [0, 19], sizes = [8, 288], strides = [1, 1]} : vector<8x326xbf16> to vector<8x288xbf16>
    %cst_17 = arith.constant dense<0.000000e+00> : vector<16x288xf32>
    %27 = tpu.matmul %25, %26, %cst_17 {dimension_numbers = #tpu.dot_dimension_numbers<[1], [0], [0], [1], [0, 0, 1, 1], [], []>} : vector<16x8xbf16>, vector<8x288xbf16>, vector<16x288xf32> -> vector<16x288xf32>
    %28 = arith.addf %23, %27 : vector<16x288xf32>
    %c5 = arith.constant 5 : index
    %c0_18 = arith.constant 0 : index
    %c0_19 = arith.constant 0 : index
    %29 = vector.load %arg1[%c5, %c0_18, %c0_19] : memref<9x16x8xbf16, #tpu.memory_space<vmem>>, vector<1x16x8xbf16>
    %30 = vector.shape_cast %29 : vector<1x16x8xbf16> to vector<16x8xbf16>
    %31 = vector.extract_strided_slice %2 {offsets = [0, 20], sizes = [8, 288], strides = [1, 1]} : vector<8x326xbf16> to vector<8x288xbf16>
    %cst_20 = arith.constant dense<0.000000e+00> : vector<16x288xf32>
    %32 = tpu.matmul %30, %31, %cst_20 {dimension_numbers = #tpu.dot_dimension_numbers<[1], [0], [0], [1], [0, 0, 1, 1], [], []>} : vector<16x8xbf16>, vector<8x288xbf16>, vector<16x288xf32> -> vector<16x288xf32>
    %33 = arith.addf %28, %32 : vector<16x288xf32>
    %c6 = arith.constant 6 : index
    %c0_21 = arith.constant 0 : index
    %c0_22 = arith.constant 0 : index
    %34 = vector.load %arg1[%c6, %c0_21, %c0_22] : memref<9x16x8xbf16, #tpu.memory_space<vmem>>, vector<1x16x8xbf16>
    %35 = vector.shape_cast %34 : vector<1x16x8xbf16> to vector<16x8xbf16>
    %36 = vector.extract_strided_slice %2 {offsets = [0, 36], sizes = [8, 288], strides = [1, 1]} : vector<8x326xbf16> to vector<8x288xbf16>
    %cst_23 = arith.constant dense<0.000000e+00> : vector<16x288xf32>
    %37 = tpu.matmul %35, %36, %cst_23 {dimension_numbers = #tpu.dot_dimension_numbers<[1], [0], [0], [1], [0, 0, 1, 1], [], []>} : vector<16x8xbf16>, vector<8x288xbf16>, vector<16x288xf32> -> vector<16x288xf32>
    %38 = arith.addf %33, %37 : vector<16x288xf32>
    %c7 = arith.constant 7 : index
    %c0_24 = arith.constant 0 : index
    %c0_25 = arith.constant 0 : index
    %39 = vector.load %arg1[%c7, %c0_24, %c0_25] : memref<9x16x8xbf16, #tpu.memory_space<vmem>>, vector<1x16x8xbf16>
    %40 = vector.shape_cast %39 : vector<1x16x8xbf16> to vector<16x8xbf16>
    %41 = vector.extract_strided_slice %2 {offsets = [0, 37], sizes = [8, 288], strides = [1, 1]} : vector<8x326xbf16> to vector<8x288xbf16>
    %cst_26 = arith.constant dense<0.000000e+00> : vector<16x288xf32>
    %42 = tpu.matmul %40, %41, %cst_26 {dimension_numbers = #tpu.dot_dimension_numbers<[1], [0], [0], [1], [0, 0, 1, 1], [], []>} : vector<16x8xbf16>, vector<8x288xbf16>, vector<16x288xf32> -> vector<16x288xf32>
    %43 = arith.addf %38, %42 : vector<16x288xf32>
    %c8 = arith.constant 8 : index
    %c0_27 = arith.constant 0 : index
    %c0_28 = arith.constant 0 : index
    %44 = vector.load %arg1[%c8, %c0_27, %c0_28] : memref<9x16x8xbf16, #tpu.memory_space<vmem>>, vector<1x16x8xbf16>
    %45 = vector.shape_cast %44 : vector<1x16x8xbf16> to vector<16x8xbf16>
    %46 = vector.extract_strided_slice %2 {offsets = [0, 38], sizes = [8, 288], strides = [1, 1]} : vector<8x326xbf16> to vector<8x288xbf16>
    %cst_29 = arith.constant dense<0.000000e+00> : vector<16x288xf32>
    %47 = tpu.matmul %45, %46, %cst_29 {dimension_numbers = #tpu.dot_dimension_numbers<[1], [0], [0], [1], [0, 0, 1, 1], [], []>} : vector<16x8xbf16>, vector<8x288xbf16>, vector<16x288xf32> -> vector<16x288xf32>
    %48 = arith.addf %43, %47 : vector<16x288xf32>
    %49 = arith.truncf %48 : vector<16x288xf32> to vector<16x288xbf16>
    %c0_30 = arith.constant 0 : index
    %c0_31 = arith.constant 0 : index
    %c0_32 = arith.constant 0 : index
    %50 = vector.load %arg3[%c0_30, %c0_31, %c0_32] : memref<1x16x288xbf16, #tpu.memory_space<vmem>>, vector<1x16x288xbf16>
    %51 = vector.shape_cast %50 : vector<1x16x288xbf16> to vector<16x288xbf16>
    %52 = vector.shape_cast %49 : vector<16x288xbf16> to vector<1x16x288xbf16>
    tpu.vector_store %arg3[%c0_30, %c0_31, %c0_32], %52 {strides = array<i32>} : memref<1x16x288xbf16, #tpu.memory_space<vmem>>, vector<1x16x288xbf16>,
    return
  }
  func.func @transform_0(%arg0: i32) -> (i32, i32, i32) {
    %c0_i32 = arith.constant 0 : i32
    %c0_i32_0 = arith.constant 0 : i32
    %c0_i32_1 = arith.constant 0 : i32
    %c0_i32_2 = arith.constant 0 : i32
    return %c0_i32, %c0_i32_0, %c0_i32_1 : i32, i32, i32
  }
  func.func @transform_1(%arg0: i32) -> (i32, i32, i32) {
    %c0_i32 = arith.constant 0 : i32
    %c0_i32_0 = arith.constant 0 : i32
    %c0_i32_1 = arith.constant 0 : i32
    return %arg0, %c0_i32, %c0_i32_0 : i32, i32, i32
  }
  func.func @transform_2(%arg0: i32) -> (i32, i32, i32) {
    %c0_i32 = arith.constant 0 : i32
    %c0_i32_0 = arith.constant 0 : i32
    %c0_i32_1 = arith.constant 0 : i32
    return %arg0, %c0_i32, %c0_i32_0 : i32, i32, i32
  }
}

module attributes {stable_mosaic.version = 11 : i64} {
  func.func @_attn_scores_kernel(%arg0: i32, %arg1: i32, %arg2: memref<2x1x1xf32, #tpu.memory_space<vmem>>, %arg3: memref<1x2x4x256xf32, #tpu.memory_space<vmem>>, %arg4: memref<1x2x4x256xbf16, #tpu.memory_space<vmem>>, %arg5: memref<1x2x4x4xf32, #tpu.memory_space<vmem>>, %arg6: memref<2x4x4xf32, #tpu.memory_space<vmem>>, %arg7: memref<2x4x1xf32, #tpu.memory_space<vmem>>, %arg8: memref<2x1x4xf32, #tpu.memory_space<vmem>>) attributes {dimension_semantics = [#tpu.dimension_semantics<parallel>, #tpu.dimension_semantics<arbitrary>], iteration_bounds = array<i64: 2, 1>, scalar_prefetch = 0 : i64, scratch_operands = 3 : i64, tpu.core_type = #tpu.core_type<tc>, window_params = [{pipeline_mode = #tpu.pipeline_mode<synchronous>, transform_indices = @transform_0, window_bounds = array<i64: 2, 1, 1>}, {transform_indices = @transform_1, window_bounds = array<i64: 1, 2, 4, 256>}, {transform_indices = @transform_2, window_bounds = array<i64: 1, 2, 4, 256>}, {transform_indices = @transform_3, window_bounds = array<i64: 1, 2, 4, 4>}]} {
    %c0_i32 = arith.constant 0 : i32
    %0 = arith.cmpi eq, %arg1, %c0_i32 : i32
    %1 = arith.extui %0 : i1 to i32
    %c0_i32_0 = arith.constant 0 : i32
    %2 = arith.cmpi ne, %1, %c0_i32_0 : i32
    scf.if %2 {
      %cst_31 = arith.constant 0.000000e+00 : f32
      %28 = vector.broadcast %cst_31 : f32 to vector<2x4x4xf32>
      %c0_32 = arith.constant 0 : index
      %c0_33 = arith.constant 0 : index
      %c0_34 = arith.constant 0 : index
      %29 = vector.load %arg6[%c0_32, %c0_33, %c0_34] : memref<2x4x4xf32, #tpu.memory_space<vmem>>, vector<2x4x4xf32>
      tpu.vector_store %arg6[%c0_32, %c0_33, %c0_34], %28 {strides = array<i32>} : memref<2x4x4xf32, #tpu.memory_space<vmem>>, vector<2x4x4xf32>,
      %cst_35 = arith.constant 0.000000e+00 : f32
      %30 = vector.broadcast %cst_35 : f32 to vector<2x4x1xf32>
      %c0_36 = arith.constant 0 : index
      %c0_37 = arith.constant 0 : index
      %c0_38 = arith.constant 0 : index
      %31 = vector.load %arg7[%c0_36, %c0_37, %c0_38] : memref<2x4x1xf32, #tpu.memory_space<vmem>>, vector<2x4x1xf32>
      tpu.vector_store %arg7[%c0_36, %c0_37, %c0_38], %30 {strides = array<i32>} : memref<2x4x1xf32, #tpu.memory_space<vmem>>, vector<2x4x1xf32>,
      %cst_39 = arith.constant 0.000000e+00 : f32
      %32 = vector.broadcast %cst_39 : f32 to vector<2x1x4xf32>
      %c0_40 = arith.constant 0 : index
      %c0_41 = arith.constant 0 : index
      %c0_42 = arith.constant 0 : index
      %33 = vector.load %arg8[%c0_40, %c0_41, %c0_42] : memref<2x1x4xf32, #tpu.memory_space<vmem>>, vector<2x1x4xf32>
      tpu.vector_store %arg8[%c0_40, %c0_41, %c0_42], %32 {strides = array<i32>} : memref<2x1x4xf32, #tpu.memory_space<vmem>>, vector<2x1x4xf32>,
    } else {
    }
    %c0 = arith.constant 0 : index
    %c0_1 = arith.constant 0 : index
    %c0_2 = arith.constant 0 : index
    %c0_3 = arith.constant 0 : index
    %3 = vector.load %arg3[%c0, %c0_1, %c0_2, %c0_3] : memref<1x2x4x256xf32, #tpu.memory_space<vmem>>, vector<1x2x4x256xf32>
    %4 = vector.shape_cast %3 : vector<1x2x4x256xf32> to vector<2x4x256xf32>
    %c0_4 = arith.constant 0 : index
    %c0_5 = arith.constant 0 : index
    %c0_6 = arith.constant 0 : index
    %c0_7 = arith.constant 0 : index
    %5 = vector.load %arg4[%c0_4, %c0_5, %c0_6, %c0_7] : memref<1x2x4x256xbf16, #tpu.memory_space<vmem>>, vector<1x2x4x256xbf16>
    %6 = vector.shape_cast %5 : vector<1x2x4x256xbf16> to vector<2x4x256xbf16>
    %7 = arith.extf %6 : vector<2x4x256xbf16> to vector<2x4x256xf32>
    %c0_8 = arith.constant 0 : index
    %c0_9 = arith.constant 0 : index
    %c0_10 = arith.constant 0 : index
    %8 = vector.load %arg6[%c0_8, %c0_9, %c0_10] : memref<2x4x4xf32, #tpu.memory_space<vmem>>, vector<2x4x4xf32>
    %9 = arith.truncf %4 : vector<2x4x256xf32> to vector<2x4x256xbf16>
    "tpu.trace_start"() <{level = 10 : i32, message = "hiw,hjw->hij"}> : () -> ()
    %cst = arith.constant dense<0.000000e+00> : vector<2x4x4xf32>
    %10 = tpu.matmul %9, %6, %cst {dimension_numbers = #tpu.dot_dimension_numbers<[2], [2], [1], [1], [0, 0, 0, 1, 1, 1], [0], [0]>} : vector<2x4x256xbf16>, vector<2x4x256xbf16>, vector<2x4x4xf32> -> vector<2x4x4xf32>
    "tpu.trace_stop"() : () -> ()
    %11 = arith.addf %8, %10 : vector<2x4x4xf32>
    %c0_11 = arith.constant 0 : index
    %c0_12 = arith.constant 0 : index
    %c0_13 = arith.constant 0 : index
    %12 = vector.load %arg6[%c0_11, %c0_12, %c0_13] : memref<2x4x4xf32, #tpu.memory_space<vmem>>, vector<2x4x4xf32>
    tpu.vector_store %arg6[%c0_11, %c0_12, %c0_13], %11 {strides = array<i32>} : memref<2x4x4xf32, #tpu.memory_space<vmem>>, vector<2x4x4xf32>,
    %c0_14 = arith.constant 0 : index
    %c0_15 = arith.constant 0 : index
    %c0_16 = arith.constant 0 : index
    %13 = vector.load %arg7[%c0_14, %c0_15, %c0_16] : memref<2x4x1xf32, #tpu.memory_space<vmem>>, vector<2x4x1xf32>
    %14 = arith.mulf %4, %4 : vector<2x4x256xf32>
    %cst_17 = arith.constant dense<0.000000e+00> : vector<2x4xf32>
    %15 = vector.multi_reduction <add>, %14, %cst_17 [2] : vector<2x4x256xf32> to vector<2x4xf32>
    %16 = vector.shape_cast %15 : vector<2x4xf32> to vector<2x4x1xf32>
    %17 = arith.addf %13, %16 : vector<2x4x1xf32>
    %c0_18 = arith.constant 0 : index
    %c0_19 = arith.constant 0 : index
    %c0_20 = arith.constant 0 : index
    %18 = vector.load %arg7[%c0_18, %c0_19, %c0_20] : memref<2x4x1xf32, #tpu.memory_space<vmem>>, vector<2x4x1xf32>
    tpu.vector_store %arg7[%c0_18, %c0_19, %c0_20], %17 {strides = array<i32>} : memref<2x4x1xf32, #tpu.memory_space<vmem>>, vector<2x4x1xf32>,
    %cst_21 = arith.constant 1.000000e+00 : f32
    %19 = vector.broadcast %cst_21 : f32 to vector<2x1x256xf32>
    %c0_22 = arith.constant 0 : index
    %c0_23 = arith.constant 0 : index
    %c0_24 = arith.constant 0 : index
    %20 = vector.load %arg8[%c0_22, %c0_23, %c0_24] : memref<2x1x4xf32, #tpu.memory_space<vmem>>, vector<2x1x4xf32>
    %21 = arith.mulf %7, %7 : vector<2x4x256xf32>
    "tpu.trace_start"() <{level = 10 : i32, message = "hxw,hjw->hxj"}> : () -> ()
    %cst_25 = arith.constant dense<0.000000e+00> : vector<2x1x4xf32>
    %22 = tpu.matmul %19, %21, %cst_25 {dimension_numbers = #tpu.dot_dimension_numbers<[2], [2], [1], [1], [0, 0, 0, 1, 1, 1], [0], [0]>} : vector<2x1x256xf32>, vector<2x4x256xf32>, vector<2x1x4xf32> -> vector<2x1x4xf32>
    "tpu.trace_stop"() : () -> ()
    %23 = arith.addf %20, %22 : vector<2x1x4xf32>
    %c0_26 = arith.constant 0 : index
    %c0_27 = arith.constant 0 : index
    %c0_28 = arith.constant 0 : index
    %24 = vector.load %arg8[%c0_26, %c0_27, %c0_28] : memref<2x1x4xf32, #tpu.memory_space<vmem>>, vector<2x1x4xf32>
    tpu.vector_store %arg8[%c0_26, %c0_27, %c0_28], %23 {strides = array<i32>} : memref<2x1x4xf32, #tpu.memory_space<vmem>>, vector<2x1x4xf32>,
    %c0_i32_29 = arith.constant 0 : i32
    %25 = arith.cmpi eq, %arg1, %c0_i32_29 : i32
    %26 = arith.extui %25 : i1 to i32
    %c0_i32_30 = arith.constant 0 : i32
    %27 = arith.cmpi ne, %26, %c0_i32_30 : i32
    scf.if %27 {
      %c0_31 = arith.constant 0 : index
      %c0_32 = arith.constant 0 : index
      %c0_33 = arith.constant 0 : index
      %28 = vector.load %arg7[%c0_31, %c0_32, %c0_33] : memref<2x4x1xf32, #tpu.memory_space<vmem>>, vector<2x4x1xf32>
      %cst_34 = arith.constant 1.000000e-24 : f32
      %29 = vector.broadcast %cst_34 : f32 to vector<2x4x1xf32>
      %30 = arith.maximumf %28, %29 : vector<2x4x1xf32>
      %31 = math.rsqrt %30 : vector<2x4x1xf32>
      %c0_35 = arith.constant 0 : index
      %c0_36 = arith.constant 0 : index
      %c0_37 = arith.constant 0 : index
      %32 = vector.load %arg8[%c0_35, %c0_36, %c0_37] : memref<2x1x4xf32, #tpu.memory_space<vmem>>, vector<2x1x4xf32>
      %cst_38 = arith.constant 1.000000e-24 : f32
      %33 = vector.broadcast %cst_38 : f32 to vector<2x1x4xf32>
      %34 = arith.maximumf %32, %33 : vector<2x1x4xf32>
      %35 = math.rsqrt %34 : vector<2x1x4xf32>
      %c0_39 = arith.constant 0 : index
      %c0_40 = arith.constant 0 : index
      %c0_41 = arith.constant 0 : index
      %36 = vector.load %arg6[%c0_39, %c0_40, %c0_41] : memref<2x4x4xf32, #tpu.memory_space<vmem>>, vector<2x4x4xf32>
      %37 = vector.broadcast %31 : vector<2x4x1xf32> to vector<2x4x4xf32>
      %38 = arith.mulf %36, %37 : vector<2x4x4xf32>
      %39 = vector.broadcast %35 : vector<2x1x4xf32> to vector<2x4x4xf32>
      %40 = arith.mulf %38, %39 : vector<2x4x4xf32>
      %c0_42 = arith.constant 0 : index
      %c0_43 = arith.constant 0 : index
      %c0_44 = arith.constant 0 : index
      %41 = vector.load %arg2[%c0_42, %c0_43, %c0_44] : memref<2x1x1xf32, #tpu.memory_space<vmem>>, vector<2x1x1xf32>
      %42 = vector.broadcast %41 : vector<2x1x1xf32> to vector<2x4x4xf32>
      %43 = arith.mulf %40, %42 : vector<2x4x4xf32>
      %cst_45 = arith.constant dense<0xFF800000> : vector<2x4xf32>
      %44 = vector.multi_reduction <maximumf>, %43, %cst_45 [2] : vector<2x4x4xf32> to vector<2x4xf32>
      %45 = vector.shape_cast %44 : vector<2x4xf32> to vector<2x4x1xf32>
      %46 = vector.broadcast %45 : vector<2x4x1xf32> to vector<2x4x4xf32>
      %47 = arith.subf %43, %46 : vector<2x4x4xf32>
      %48 = math.exp %47 : vector<2x4x4xf32>
      %cst_46 = arith.constant dense<0.000000e+00> : vector<2x4xf32>
      %49 = vector.multi_reduction <add>, %48, %cst_46 [2] : vector<2x4x4xf32> to vector<2x4xf32>
      %50 = vector.shape_cast %49 : vector<2x4xf32> to vector<2x4x1xf32>
      %51 = tpu.reciprocal %50 : vector<2x4x1xf32> -> vector<2x4x1xf32>
      %52 = vector.broadcast %51 : vector<2x4x1xf32> to vector<2x4x4xf32>
      %53 = arith.mulf %48, %52 : vector<2x4x4xf32>
      %c0_47 = arith.constant 0 : index
      %c0_48 = arith.constant 0 : index
      %c0_49 = arith.constant 0 : index
      %c0_50 = arith.constant 0 : index
      %54 = vector.load %arg5[%c0_47, %c0_48, %c0_49, %c0_50] : memref<1x2x4x4xf32, #tpu.memory_space<vmem>>, vector<1x2x4x4xf32>
      %55 = vector.shape_cast %54 : vector<1x2x4x4xf32> to vector<2x4x4xf32>
      %56 = vector.shape_cast %53 : vector<2x4x4xf32> to vector<1x2x4x4xf32>
      tpu.vector_store %arg5[%c0_47, %c0_48, %c0_49, %c0_50], %56 {strides = array<i32>} : memref<1x2x4x4xf32, #tpu.memory_space<vmem>>, vector<1x2x4x4xf32>,
    } else {
    }
    return
  }
  func.func @transform_0(%arg0: i32, %arg1: i32) -> (i32, i32, i32) {
    %c0_i32 = arith.constant 0 : i32
    %c0_i32_0 = arith.constant 0 : i32
    %c0_i32_1 = arith.constant 0 : i32
    %c0_i32_2 = arith.constant 0 : i32
    return %c0_i32, %c0_i32_0, %c0_i32_1 : i32, i32, i32
  }
  func.func @transform_1(%arg0: i32, %arg1: i32) -> (i32, i32, i32, i32) {
    %c0_i32 = arith.constant 0 : i32
    %c0_i32_0 = arith.constant 0 : i32
    %c0_i32_1 = arith.constant 0 : i32
    return %arg0, %c0_i32, %c0_i32_0, %arg1 : i32, i32, i32, i32
  }
  func.func @transform_2(%arg0: i32, %arg1: i32) -> (i32, i32, i32, i32) {
    %c0_i32 = arith.constant 0 : i32
    %c0_i32_0 = arith.constant 0 : i32
    %c0_i32_1 = arith.constant 0 : i32
    return %arg0, %c0_i32, %c0_i32_0, %arg1 : i32, i32, i32, i32
  }
  func.func @transform_3(%arg0: i32, %arg1: i32) -> (i32, i32, i32, i32) {
    %c0_i32 = arith.constant 0 : i32
    %c0_i32_0 = arith.constant 0 : i32
    %c0_i32_1 = arith.constant 0 : i32
    %c0_i32_2 = arith.constant 0 : i32
    return %arg0, %c0_i32, %c0_i32_0, %c0_i32_1 : i32, i32, i32, i32
  }
}

module attributes {stable_mosaic.version = 11 : i64} {
  func.func @_attn_apply_kernel(%arg0: i32, %arg1: i32, %arg2: memref<1x2x4x4xf32, #tpu.memory_space<vmem>>, %arg3: memref<1x2x4x256xbf16, #tpu.memory_space<vmem>>, %arg4: memref<1x2x4x256xbf16, #tpu.memory_space<vmem>>) attributes {dimension_semantics = [#tpu.dimension_semantics<parallel>, #tpu.dimension_semantics<parallel>], iteration_bounds = array<i64: 2, 1>, scalar_prefetch = 0 : i64, scratch_operands = 0 : i64, tpu.core_type = #tpu.core_type<tc>, window_params = [{transform_indices = @transform_0, window_bounds = array<i64: 1, 2, 4, 4>}, {transform_indices = @transform_1, window_bounds = array<i64: 1, 2, 4, 256>}, {transform_indices = @transform_2, window_bounds = array<i64: 1, 2, 4, 256>}]} {
    %c0 = arith.constant 0 : index
    %c0_0 = arith.constant 0 : index
    %c0_1 = arith.constant 0 : index
    %c0_2 = arith.constant 0 : index
    %0 = vector.load %arg2[%c0, %c0_0, %c0_1, %c0_2] : memref<1x2x4x4xf32, #tpu.memory_space<vmem>>, vector<1x2x4x4xf32>
    %1 = vector.shape_cast %0 : vector<1x2x4x4xf32> to vector<2x4x4xf32>
    %2 = arith.truncf %1 : vector<2x4x4xf32> to vector<2x4x4xbf16>
    %c0_3 = arith.constant 0 : index
    %c0_4 = arith.constant 0 : index
    %c0_5 = arith.constant 0 : index
    %c0_6 = arith.constant 0 : index
    %3 = vector.load %arg3[%c0_3, %c0_4, %c0_5, %c0_6] : memref<1x2x4x256xbf16, #tpu.memory_space<vmem>>, vector<1x2x4x256xbf16>
    %4 = vector.shape_cast %3 : vector<1x2x4x256xbf16> to vector<2x4x256xbf16>
    "tpu.trace_start"() <{level = 10 : i32, message = "hij,hjw->hiw"}> : () -> ()
    %cst = arith.constant dense<0.000000e+00> : vector<2x4x256xf32>
    %5 = tpu.matmul %2, %4, %cst {dimension_numbers = #tpu.dot_dimension_numbers<[2], [1], [1], [2], [0, 0, 0, 1, 1, 2], [0], [0]>} : vector<2x4x4xbf16>, vector<2x4x256xbf16>, vector<2x4x256xf32> -> vector<2x4x256xf32>
    "tpu.trace_stop"() : () -> ()
    %6 = arith.truncf %5 : vector<2x4x256xf32> to vector<2x4x256xbf16>
    %c0_7 = arith.constant 0 : index
    %c0_8 = arith.constant 0 : index
    %c0_9 = arith.constant 0 : index
    %c0_10 = arith.constant 0 : index
    %7 = vector.load %arg4[%c0_7, %c0_8, %c0_9, %c0_10] : memref<1x2x4x256xbf16, #tpu.memory_space<vmem>>, vector<1x2x4x256xbf16>
    %8 = vector.shape_cast %7 : vector<1x2x4x256xbf16> to vector<2x4x256xbf16>
    %9 = vector.shape_cast %6 : vector<2x4x256xbf16> to vector<1x2x4x256xbf16>
    tpu.vector_store %arg4[%c0_7, %c0_8, %c0_9, %c0_10], %9 {strides = array<i32>} : memref<1x2x4x256xbf16, #tpu.memory_space<vmem>>, vector<1x2x4x256xbf16>,
    return
  }
  func.func @transform_0(%arg0: i32, %arg1: i32) -> (i32, i32, i32, i32) {
    %c0_i32 = arith.constant 0 : i32
    %c0_i32_0 = arith.constant 0 : i32
    %c0_i32_1 = arith.constant 0 : i32
    %c0_i32_2 = arith.constant 0 : i32
    return %arg0, %c0_i32, %c0_i32_0, %c0_i32_1 : i32, i32, i32, i32
  }
  func.func @transform_1(%arg0: i32, %arg1: i32) -> (i32, i32, i32, i32) {
    %c0_i32 = arith.constant 0 : i32
    %c0_i32_0 = arith.constant 0 : i32
    %c0_i32_1 = arith.constant 0 : i32
    return %arg0, %c0_i32, %c0_i32_0, %arg1 : i32, i32, i32, i32
  }
  func.func @transform_2(%arg0: i32, %arg1: i32) -> (i32, i32, i32, i32) {
    %c0_i32 = arith.constant 0 : i32
    %c0_i32_0 = arith.constant 0 : i32
    %c0_i32_1 = arith.constant 0 : i32
    return %arg0, %c0_i32, %c0_i32_0, %arg1 : i32, i32, i32, i32
  }
}

module attributes {stable_mosaic.version = 11 : i64} {
  func.func @_wx_kernel(%arg0: i32, %arg1: i32, %arg2: memref<8x8xbf16, #tpu.memory_space<vmem>>, %arg3: memref<1x8x256xbf16, #tpu.memory_space<vmem>>, %arg4: memref<1x8x256xf32, #tpu.memory_space<vmem>>) attributes {dimension_semantics = [#tpu.dimension_semantics<parallel>, #tpu.dimension_semantics<parallel>], iteration_bounds = array<i64: 2, 1>, scalar_prefetch = 0 : i64, scratch_operands = 0 : i64, tpu.core_type = #tpu.core_type<tc>, window_params = [{pipeline_mode = #tpu.pipeline_mode<synchronous>, transform_indices = @transform_0, window_bounds = array<i64: 8, 8>}, {transform_indices = @transform_1, window_bounds = array<i64: 1, 8, 256>}, {transform_indices = @transform_2, window_bounds = array<i64: 1, 8, 256>}]} {
    %c0 = arith.constant 0 : index
    %c0_0 = arith.constant 0 : index
    %0 = vector.load %arg2[%c0, %c0_0] : memref<8x8xbf16, #tpu.memory_space<vmem>>, vector<8x8xbf16>
    %c0_1 = arith.constant 0 : index
    %c0_2 = arith.constant 0 : index
    %c0_3 = arith.constant 0 : index
    %1 = vector.load %arg3[%c0_1, %c0_2, %c0_3] : memref<1x8x256xbf16, #tpu.memory_space<vmem>>, vector<1x8x256xbf16>
    %2 = vector.shape_cast %1 : vector<1x8x256xbf16> to vector<8x256xbf16>
    %cst = arith.constant dense<0.000000e+00> : vector<8x256xf32>
    %3 = tpu.matmul %0, %2, %cst {dimension_numbers = #tpu.dot_dimension_numbers<[1], [0], [0], [1], [0, 0, 1, 1], [], []>} : vector<8x8xbf16>, vector<8x256xbf16>, vector<8x256xf32> -> vector<8x256xf32>
    %c0_4 = arith.constant 0 : index
    %c0_5 = arith.constant 0 : index
    %c0_6 = arith.constant 0 : index
    %4 = vector.load %arg4[%c0_4, %c0_5, %c0_6] : memref<1x8x256xf32, #tpu.memory_space<vmem>>, vector<1x8x256xf32>
    %5 = vector.shape_cast %4 : vector<1x8x256xf32> to vector<8x256xf32>
    %6 = vector.shape_cast %3 : vector<8x256xf32> to vector<1x8x256xf32>
    tpu.vector_store %arg4[%c0_4, %c0_5, %c0_6], %6 {strides = array<i32>} : memref<1x8x256xf32, #tpu.memory_space<vmem>>, vector<1x8x256xf32>,
    return
  }
  func.func @transform_0(%arg0: i32, %arg1: i32) -> (i32, i32) {
    %c0_i32 = arith.constant 0 : i32
    %c0_i32_0 = arith.constant 0 : i32
    %c0_i32_1 = arith.constant 0 : i32
    return %c0_i32, %c0_i32_0 : i32, i32
  }
  func.func @transform_1(%arg0: i32, %arg1: i32) -> (i32, i32, i32) {
    %c0_i32 = arith.constant 0 : i32
    %c0_i32_0 = arith.constant 0 : i32
    return %arg0, %c0_i32, %arg1 : i32, i32, i32
  }
  func.func @transform_2(%arg0: i32, %arg1: i32) -> (i32, i32, i32) {
    %c0_i32 = arith.constant 0 : i32
    %c0_i32_0 = arith.constant 0 : i32
    return %arg0, %c0_i32, %arg1 : i32, i32, i32
  }
}

module attributes {stable_mosaic.version = 11 : i64} {
  func.func @_attn_prod_kernel(%arg0: memref<4x4x4xf32, #tpu.memory_space<vmem>>, %arg1: memref<4x4x4xf32, #tpu.memory_space<vmem>>, %arg2: memref<4x4x4xf32, #tpu.memory_space<vmem>>) attributes {dimension_semantics = [], scalar_prefetch = 0 : i64, scratch_operands = 0 : i64, tpu.core_type = #tpu.core_type<tc>} {
    %c0 = arith.constant 0 : index
    %c0_0 = arith.constant 0 : index
    %c0_1 = arith.constant 0 : index
    %0 = vector.load %arg0[%c0, %c0_0, %c0_1] : memref<4x4x4xf32, #tpu.memory_space<vmem>>, vector<4x4x4xf32>
    %c0_2 = arith.constant 0 : index
    %c0_3 = arith.constant 0 : index
    %c0_4 = arith.constant 0 : index
    %1 = vector.load %arg1[%c0_2, %c0_3, %c0_4] : memref<4x4x4xf32, #tpu.memory_space<vmem>>, vector<4x4x4xf32>
    "tpu.trace_start"() <{level = 10 : i32, message = "bij,bjk->bik"}> : () -> ()
    %cst = arith.constant dense<0.000000e+00> : vector<4x4x4xf32>
    %2 = tpu.matmul %0, %1, %cst {dimension_numbers = #tpu.dot_dimension_numbers<[2], [1], [1], [2], [0, 0, 0, 1, 1, 2], [0], [0]>} : vector<4x4x4xf32>, vector<4x4x4xf32>, vector<4x4x4xf32> -> vector<4x4x4xf32>
    "tpu.trace_stop"() : () -> ()
    %c0_5 = arith.constant 0 : index
    %c0_6 = arith.constant 0 : index
    %c0_7 = arith.constant 0 : index
    %3 = vector.load %arg2[%c0_5, %c0_6, %c0_7] : memref<4x4x4xf32, #tpu.memory_space<vmem>>, vector<4x4x4xf32>
    tpu.vector_store %arg2[%c0_5, %c0_6, %c0_7], %2 {strides = array<i32>} : memref<4x4x4xf32, #tpu.memory_space<vmem>>, vector<4x4x4xf32>,
    return
  }
}

</mosaic_0001>

<llo_original>
// kernel: nested_mdta_forward.9
$region0: #{nested_mdta_forward.9}
  #allocation0 [shape = 'u32[]', space=smem, size = 0x4, offset = 0x4, fixed_abs, tag = 'smem constant byte address 0x4 - core index']
  #allocation1 [shape = 'u32[144,128]{1,0:T(1,128)}', space=vmem, size = 0x12000, scoped, tag = 'internal scratch']
  %s0 = inlined_call_operand.vmem [shape: bf16[9,16,8], index: 0, kind: input, shape index: {}]
  %s1 = inlined_call_operand.vmem [shape: f32[2,8,326], index: 1, kind: input, shape index: {}]
  %s2 = inlined_call_operand.vmem [shape: bf16[2,16,288], index: 2, kind: output, shape index: {}]
  %s3 = sld [smem:[#allocation0]]
  $region41: #{nested_mdta_forward.9} parent=0
    _
  %s5 = ssub.s32 1, %s3
  %s6 = scalar_select 0, %s5, %s3
  loop: start=0, step=1, limit=4
  $region2: #{nested_mdta_forward.9} parent=0 // loop_pre_header
    _
  $region3: #{nested_mdta_forward.9} parent=0 // loop_header
    %s8 = sphi 0, %s12
    %p9 = scmp.ge.s32.totalorder %s8, 4
    %s16 = sphi 0, %s16
    %s18 = sphi 0, %s16
    %s19 = sphi 0, %s18
    %s33 = sphi 0, %s19
    %s39 = sphi 0, %s41
    %s42 = sphi 0, %s39
    %s43 = sphi 0, %s42
    %s59 = sphi 0, %s43
    %s65 = sphi 0, %s67
    %s68 = sphi 0, %s65
    %s69 = sphi 0, %s68
    %s85 = sphi 0, %s69
  $region4: #{nested_mdta_forward.9} parent=0 // loop_header_branch
    %11 = sbr.rel (%p9) target = $region8
  $region5: #{nested_mdta_forward.9} parent=0 // loop_body
    %s13 = ssub.s32 %s8, 1
    %s14 = ssub.s32 %s8, 2
    %s15 = sadd.s32 %s8, 1
    %s17 = sadd.s32 %s16, 1
    %p20 = scmp.eq.s32.totalorder %s8, 1
    %p21 = scmp.ne.s32.totalorder %s16, %s18
    %p22 = scmp.eq.s32.totalorder %s8, 0
    %p23 = por %p21, %p22
    %p24 = scmp.ne.s32.totalorder %s16, %s18
    %p25 = scmp.eq.s32.totalorder %s13, 1
    %p26 = por %p24, %p25
    %p27 = scmp.ne.s32.totalorder %s18, %s19
    %p28 = scmp.eq.s32.totalorder %s13, 0
    %p29 = por %p27, %p28
    %p30 = scmp.ne.s32.totalorder %s18, %s19
    %p31 = scmp.eq.s32.totalorder %s14, 1
    %p32 = por %p30, %p31
    %p34 = scmp.ne.s32.totalorder %s19, %s33
    %p35 = scmp.eq.s32.totalorder %s14, 0
    %p36 = por %p34, %p35
    %s37 = ssub.s32 %s8, %s15
    %p38 = scmp.eq.s32.totalorder %s37, 0
    %s40 = sadd.s32 %s39, 1
    %s41 = scalar_select %p38, %s39, %s40
    %p44 = pneg %p38
    %p45 = scmp.eq.s32.totalorder %s8, 1
    %p46 = por %p44, %p45
    %p47 = scmp.ne.s32.totalorder %s39, %s42
    %p48 = scmp.eq.s32.totalorder %s8, 0
    %p49 = por %p47, %p48
    %p50 = scmp.ne.s32.totalorder %s39, %s42
    %p51 = scmp.eq.s32.totalorder %s13, 1
    %p52 = por %p50, %p51
    %p53 = scmp.ne.s32.totalorder %s42, %s43
    %p54 = scmp.eq.s32.totalorder %s13, 0
    %p55 = por %p53, %p54
    %p56 = scmp.ne.s32.totalorder %s42, %s43
    %p57 = scmp.eq.s32.totalorder %s14, 1
    %p58 = por %p56, %p57
    %p60 = scmp.ne.s32.totalorder %s43, %s59
    %p61 = scmp.eq.s32.totalorder %s14, 0
    %p62 = por %p60, %p61
    %s63 = ssub.s32 %s8, %s15
    %p64 = scmp.eq.s32.totalorder %s63, 0
    %s66 = sadd.s32 %s65, 1
    %s67 = scalar_select %p64, %s65, %s66
    %p70 = pneg %p64
    %p71 = scmp.eq.s32.totalorder %s8, 1
    %p72 = por %p70, %p71
    %p73 = scmp.ne.s32.totalorder %s65, %s68
    %p74 = scmp.eq.s32.totalorder %s8, 0
    %p75 = por %p73, %p74
    %p76 = scmp.ne.s32.totalorder %s65, %s68
    %p77 = scmp.eq.s32.totalorder %s13, 1
    %p78 = por %p76, %p77
    %p79 = scmp.ne.s32.totalorder %s68, %s69
    %p80 = scmp.eq.s32.totalorder %s13, 0
    %p81 = por %p79, %p80
    %p82 = scmp.ne.s32.totalorder %s68, %s69
    %p83 = scmp.eq.s32.totalorder %s14, 1
    %p84 = por %p82, %p83
    %p86 = scmp.ne.s32.totalorder %s69, %s85
    %p87 = scmp.eq.s32.totalorder %s14, 0
    %p88 = por %p86, %p87
    %p89 = scmp.le.s32.totalorder 1, %s8
    %p90 = scmp.lt.s32.totalorder %s8, 3
    %p91 = pnand %p89, %p90
    %p92 = pneg %p91
    // Predicated region
    $region9: #{nested_mdta_forward.9} parent=5 // pred_check
      _
    $region10: #{nested_mdta_forward.9} parent=5 // pred_check_branch
      %94 = sbr.rel (%p91) target = $region12
    $region11: #{nested_mdta_forward.9} parent=5 // pred_region
      %s95 = ssub.s32 %s8, 1
      // Predicated region
      $region13: #{nested_mdta_forward.9} parent=11 // pred_check
        %p96 = pneg %p29
      $region14: #{nested_mdta_forward.9} parent=11 // pred_check_branch
        %98 = sbr.rel (%p96) target = $region16
      $region15: #{nested_mdta_forward.9} parent=11 // pred_region
        _
      $region16: #{nested_mdta_forward.9} parent=11 // pred_fallthru
        _
    $region12: #{nested_mdta_forward.9} parent=5 // pred_fallthru
      _
    %p99 = scmp.lt.s32.totalorder %s8, 2
    // Predicated region
    $region17: #{nested_mdta_forward.9} parent=5 // pred_check
      %p100 = pneg %p99
    $region18: #{nested_mdta_forward.9} parent=5 // pred_check_branch
      %102 = sbr.rel (%p100) target = $region20
    $region19: #{nested_mdta_forward.9} parent=5 // pred_region
      // Predicated region
      $region21: #{nested_mdta_forward.9} parent=19 // pred_check
        %p103 = pneg %p49
      $region22: #{nested_mdta_forward.9} parent=19 // pred_check_branch
        %105 = sbr.rel (%p103) target = $region24
      $region23: #{nested_mdta_forward.9} parent=19 // pred_region
        %p106 = scmp.lt.s32.totalorder %s8, 1
        %s107 = scalar_select %p106, %s8, 1
        %s108 = smul.addr %s107, 3
        %s109 = smul.addr %s108, 8
        %s110 = scalar_lea.vmem %s1, %s109
      $region24: #{nested_mdta_forward.9} parent=19 // pred_fallthru
        _
    $region20: #{nested_mdta_forward.9} parent=5 // pred_fallthru
      _
    %p111 = scmp.le.s32.totalorder 1, %s8
    %p112 = scmp.lt.s32.totalorder %s8, 3
    %p113 = pnand %p111, %p112
    %p114 = pneg %p113
    // Predicated region
    $region25: #{nested_mdta_forward.9} parent=5 // pred_check
      _
    $region26: #{nested_mdta_forward.9} parent=5 // pred_check_branch
      %116 = sbr.rel (%p113) target = $region28
    $region27: #{nested_mdta_forward.9} parent=5 // pred_region
      %s117 = ssub.s32 %s8, 1
      %p118 = pneg %p29
      %p119 = pneg %p26
      %p120 = scmp.lt.s32.totalorder %s13, 1
      %s121 = scalar_select %p120, %s13, 1
      %s122 = smul.addr %s121, 3
      %s123 = smul.addr %s122, 8
      %s124 = scalar_lea.vmem %s1, %s123
      %p125 = pneg %p55
      %p126 = pneg %p52
      %p127 = pneg %p81
      %p128 = pneg %p78
      %p129 = scmp.lt.s32.totalorder %s13, 1
      %s130 = scalar_select %p129, %s13, 1
      %s131 = smul.addr %s130, 6
      %s132 = smul.addr %s131, 4
      %s133 = scalar_lea.vmem %s2, %s132
      %p134 = scmp.lt.s32.totalorder %s13, 1
      %s135 = scalar_select %p134, %s13, 1
      %s136 = smul.addr %s135, 3
      %s137 = smul.addr %s136, 8
      %s138 = scalar_lea.vmem %s1, %s137
      %p139 = scmp.lt.s32.totalorder %s13, 1
      %s140 = scalar_select %p139, %s13, 1
      %s141 = smul.addr %s140, 6
      %s142 = smul.addr %s141, 4
      %s143 = scalar_lea.vmem %s2, %s142
      %v145 = vld [vmem:[%s138] sm:$0xff]
      %v146 = vld [vmem:[%s138 + $0x8] sm:$0xff]
      %v147 = vld [vmem:[%s138 + $0x10] sm:$0xff]
      %v148 = vpack.c.bf16 %v145, %v145
      %v149 = vpack.c.bf16 %v146, %v146
      %v150 = vpack.c.bf16 %v147, %v147
      %v151 = vld [vmem:[%s0] sm:$0xf]
      %v152 = vld [vmem:[%s0 + $0x4] sm:$0xf]
      %s153 = scalar_lea.vmem %s0, 8
      %v154 = vld [vmem:[%s153] sm:$0xf]
      %v155 = vld [vmem:[%s153 + $0x4] sm:$0xf]
      %v158 = vunpack.c.l.b16 %v154
      %v159 = vunpack.c.l.b16 %v155
      %v160 = vpack.c.b16 %v159, %v158
      %164 = vrot.lane.b32.xlu0 %v148, 127
      %v165 = vpop.permute.xlu0 %164
      %166 = vrot.lane.b32.xlu0 %v149, 127
      %v167 = vpop.permute.xlu0 %166
      %168 = vrot.lane.b32.xlu0 %v150, 127
      %v169 = vpop.permute.xlu0 %168
      %vm170 = vcmask 1039360
      %v171 = vsel %vm170, %v165, %v167
      %v172 = vsel %vm170, %v167, %v169
      %vm173 = vcmask 64512
      %v175 = vsel %vm173, %v160, 0
      %vm177 = vcmask 1043456
      %v179 = vsel %vm177, %v171, 0
      %v182 = vsel %vm177, %v172, 0
      %v185 = vsel %vm177, %v169, 0
      %187 = vmatprep.subr.bf16.mxu0 %v182
      %188 = vmatpush1.bf16.msra.mxu0 %v179
      %189 = vmatprep.subr.bf16.mxu0 0
      %190 = vmatpush1.bf16.msra.mxu0 0
      %191 = vmatprep.subr.bf16.mxu0 0
      %192 = vmatpush1.bf16.msra.mxu0 0
      %193 = vmatprep.subr.bf16.mxu0 0
      %194 = vmatpush1.bf16.msra.mxu0 0
      %195 = vmatprep.subr.bf16.mxu0 0
      %196 = vmatpush1.bf16.msra.mxu0 0
      %197 = vmatprep.subr.bf16.mxu0 0
      %198 = vmatpush1.bf16.msra.mxu0 0
      %199 = vmatprep.subr.bf16.mxu0 0
      %200 = vmatpush1.bf16.msra.mxu0 0
      %201 = vmatprep.subr.bf16.mxu0 0
      %202 = vmatpush1.bf16.msra.mxu0 0
      %203 = vmatprep.subr.bf16.mxu0 0
      %204 = vmatpush1.bf16.msra.mxu0 0
      %205 = vmatprep.subr.bf16.mxu0 0
      %206 = vmatpush1.bf16.msra.mxu0 0
      %207 = vmatprep.subr.bf16.mxu0 0
      %208 = vmatpush1.bf16.msra.mxu0 0
      %209 = vmatprep.subr.bf16.mxu0 0
      %210 = vmatpush1.bf16.msra.mxu0 0
      %211 = vmatprep.subr.bf16.mxu0 0
      %212 = vmatpush1.bf16.msra.mxu0 0
      %213 = vmatprep.subr.bf16.mxu0 0
      %214 = vmatpush1.bf16.msra.mxu0 0
      %215 = vmatprep.subr.bf16.mxu0 0
      %216 = vmatpush1.bf16.msra.mxu0 0
      %217 = vmatprep.subr.bf16.mxu0 0
      %218 = vmatpush1.bf16.msra.mxu0 0
      %219 = vmatprep.mubr.bf16.mxu0 0
      %220 = vmatmul.mubr.bf16.gmra.mrb[0].mxu0 %v175
      %v221 = vpop.f32.mrb[0].mxu0
      %v222 = vadd.f32 0.0, %v221
      %v223 = vpop.f32.mrb[0].mxu0
      %v224 = vadd.f32 0.0, %v223
      %v225 = vpop.f32.mrb[0].mxu0
      %v226 = vadd.f32 0.0, %v225
      %v227 = vpop.f32.mrb[0].mxu0
      %v228 = vadd.f32 0.0, %v227
      %229 = vdwg.mxu0
      %230 = vmatprep.subr.bf16.mxu0 0
      %231 = vmatpush1.bf16.msra.mxu0 %v185
      %232 = vmatprep.subr.bf16.mxu0 0
      %233 = vmatpush1.bf16.msra.mxu0 0
      %234 = vmatprep.subr.bf16.mxu0 0
      %235 = vmatpush1.bf16.msra.mxu0 0
      %236 = vmatprep.subr.bf16.mxu0 0
      %237 = vmatpush1.bf16.msra.mxu0 0
      %238 = vmatprep.subr.bf16.mxu0 0
      %239 = vmatpush1.bf16.msra.mxu0 0
      %240 = vmatprep.subr.bf16.mxu0 0
      %241 = vmatpush1.bf16.msra.mxu0 0
      %242 = vmatprep.subr.bf16.mxu0 0
      %243 = vmatpush1.bf16.msra.mxu0 0
      %244 = vmatprep.subr.bf16.mxu0 0
      %245 = vmatpush1.bf16.msra.mxu0 0
      %246 = vmatprep.subr.bf16.mxu0 0
      %247 = vmatpush1.bf16.msra.mxu0 0
      %248 = vmatprep.subr.bf16.mxu0 0
      %249 = vmatpush1.bf16.msra.mxu0 0
      %250 = vmatprep.subr.bf16.mxu0 0
      %251 = vmatpush1.bf16.msra.mxu0 0
      %252 = vmatprep.subr.bf16.mxu0 0
      %253 = vmatpush1.bf16.msra.mxu0 0
      %254 = vmatprep.subr.bf16.mxu0 0
      %255 = vmatpush1.bf16.msra.mxu0 0
      %256 = vmatprep.subr.bf16.mxu0 0
      %257 = vmatpush1.bf16.msra.mxu0 0
      %258 = vmatprep.subr.bf16.mxu0 0
      %259 = vmatpush1.bf16.msra.mxu0 0
      %260 = vmatprep.subr.bf16.mxu0 0
      %261 = vmatpush1.bf16.msra.mxu0 0
      %262 = vmatprep.mubr.bf16.mxu0 0
      %263 = vmatmul.mubr.bf16.gmra.mrb[0].mxu0 %v175
      %v264 = vpop.f32.mrb[0].mxu0
      %v265 = vadd.f32 0.0, %v264
      %v266 = vpop.f32.mrb[0].mxu0
      %v267 = vpop.f32.mrb[0].mxu0
      %v268 = vadd.f32 0.0, %v267
      %v269 = vpop.f32.mrb[0].mxu0
      %270 = vdwg.mxu0
      %v273 = vunpack.c.l.b16 %v151
      %v274 = vunpack.c.l.b16 %v152
      %v275 = vpack.c.b16 %v274, %v273
      %v277 = vsel %vm173, %v275, 0
      %v280 = vsel %vm177, %v148, 0
      %v283 = vsel %vm177, %v149, 0
      %v286 = vsel %vm177, %v150, 0
      %288 = vmatprep.subr.bf16.mxu0 %v283
      %289 = vmatpush1.bf16.msra.mxu0 %v280
      %290 = vmatprep.subr.bf16.mxu0 0
      %291 = vmatpush1.bf16.msra.mxu0 0
      %292 = vmatprep.subr.bf16.mxu0 0
      %293 = vmatpush1.bf16.msra.mxu0 0
      %294 = vmatprep.subr.bf16.mxu0 0
      %295 = vmatpush1.bf16.msra.mxu0 0
      %296 = vmatprep.subr.bf16.mxu0 0
      %297 = vmatpush1.bf16.msra.mxu0 0
      %298 = vmatprep.subr.bf16.mxu0 0
      %299 = vmatpush1.bf16.msra.mxu0 0
      %300 = vmatprep.subr.bf16.mxu0 0
      %301 = vmatpush1.bf16.msra.mxu0 0
      %302 = vmatprep.subr.bf16.mxu0 0
      %303 = vmatpush1.bf16.msra.mxu0 0
      %304 = vmatprep.subr.bf16.mxu0 0
      %305 = vmatpush1.bf16.msra.mxu0 0
      %306 = vmatprep.subr.bf16.mxu0 0
      %307 = vmatpush1.bf16.msra.mxu0 0
      %308 = vmatprep.subr.bf16.mxu0 0
      %309 = vmatpush1.bf16.msra.mxu0 0
      %310 = vmatprep.subr.bf16.mxu0 0
      %311 = vmatpush1.bf16.msra.mxu0 0
      %312 = vmatprep.subr.bf16.mxu0 0
      %313 = vmatpush1.bf16.msra.mxu0 0
      %314 = vmatprep.subr.bf16.mxu0 0
      %315 = vmatpush1.bf16.msra.mxu0 0
      %316 = vmatprep.subr.bf16.mxu0 0
      %317 = vmatpush1.bf16.msra.mxu0 0
      %318 = vmatprep.subr.bf16.mxu0 0
      %319 = vmatpush1.bf16.msra.mxu0 0
      %320 = vmatprep.mubr.bf16.mxu0 0
      %321 = vmatmul.mubr.bf16.gmra.mrb[0].mxu0 %v277
      %v322 = vpop.f32.mrb[0].mxu0
      %v323 = vadd.f32 %v222, %v322
      %v324 = vpop.f32.mrb[0].mxu0
      %v325 = vadd.f32 %v224, %v324
      %v326 = vpop.f32.mrb[0].mxu0
      %v327 = vadd.f32 %v226, %v326
      %v328 = vpop.f32.mrb[0].mxu0
      %v329 = vadd.f32 %v228, %v328
      %330 = vdwg.mxu0
      %331 = vmatprep.subr.bf16.mxu0 0
      %332 = vmatpush1.bf16.msra.mxu0 %v286
      %333 = vmatprep.subr.bf16.mxu0 0
      %334 = vmatpush1.bf16.msra.mxu0 0
      %335 = vmatprep.subr.bf16.mxu0 0
      %336 = vmatpush1.bf16.msra.mxu0 0
      %337 = vmatprep.subr.bf16.mxu0 0
      %338 = vmatpush1.bf16.msra.mxu0 0
      %339 = vmatprep.subr.bf16.mxu0 0
      %340 = vmatpush1.bf16.msra.mxu0 0
      %341 = vmatprep.subr.bf16.mxu0 0
      %342 = vmatpush1.bf16.msra.mxu0 0
      %343 = vmatprep.subr.bf16.mxu0 0
      %344 = vmatpush1.bf16.msra.mxu0 0
      %345 = vmatprep.subr.bf16.mxu0 0
      %346 = vmatpush1.bf16.msra.mxu0 0
      %347 = vmatprep.subr.bf16.mxu0 0
      %348 = vmatpush1.bf16.msra.mxu0 0
      %349 = vmatprep.subr.bf16.mxu0 0
      %350 = vmatpush1.bf16.msra.mxu0 0
      %351 = vmatprep.subr.bf16.mxu0 0
      %352 = vmatpush1.bf16.msra.mxu0 0
      %353 = vmatprep.subr.bf16.mxu0 0
      %354 = vmatpush1.bf16.msra.mxu0 0
      %355 = vmatprep.subr.bf16.mxu0 0
      %356 = vmatpush1.bf16.msra.mxu0 0
      %357 = vmatprep.subr.bf16.mxu0 0
      %358 = vmatpush1.bf16.msra.mxu0 0
      %359 = vmatprep.subr.bf16.mxu0 0
      %360 = vmatpush1.bf16.msra.mxu0 0
      %361 = vmatprep.subr.bf16.mxu0 0
      %362 = vmatpush1.bf16.msra.mxu0 0
      %363 = vmatprep.mubr.bf16.mxu0 0
      %364 = vmatmul.mubr.bf16.gmra.mrb[0].mxu0 %v277
      %v365 = vpop.f32.mrb[0].mxu0
      %v366 = vadd.f32 %v265, %v365
      %v367 = vpop.f32.mrb[0].mxu0
      %v368 = vpop.f32.mrb[0].mxu0
      %v369 = vadd.f32 %v268, %v368
      %v370 = vpop.f32.mrb[0].mxu0
      %371 = vdwg.mxu0
      %s372 = scalar_lea.vmem %s0, 16
      %v373 = vld [vmem:[%s372] sm:$0xf]
      %v374 = vld [vmem:[%s372 + $0x4] sm:$0xf]
      %v377 = vunpack.c.l.b16 %v373
      %v378 = vunpack.c.l.b16 %v374
      %v379 = vpack.c.b16 %v378, %v377
      %380 = vrot.lane.b32.xlu0 %v148, 126
      %v381 = vpop.permute.xlu0 %380
      %382 = vrot.lane.b32.xlu0 %v149, 126
      %v383 = vpop.permute.xlu0 %382
      %384 = vrot.lane.b32.xlu0 %v150, 126
      %v385 = vpop.permute.xlu0 %384
      %vm386 = vcmask 1031168
      %v387 = vsel %vm386, %v381, %v383
      %v388 = vsel %vm386, %v383, %v385
      %v390 = vsel %vm173, %v379, 0
      %v393 = vsel %vm177, %v387, 0
      %v396 = vsel %vm177, %v388, 0
      %v399 = vsel %vm177, %v385, 0
      %401 = vmatprep.subr.bf16.mxu0 %v396
      %402 = vmatpush1.bf16.msra.mxu0 %v393
      %403 = vmatprep.subr.bf16.mxu0 0
      %404 = vmatpush1.bf16.msra.mxu0 0
      %405 = vmatprep.subr.bf16.mxu0 0
      %406 = vmatpush1.bf16.msra.mxu0 0
      %407 = vmatprep.subr.bf16.mxu0 0
      %408 = vmatpush1.bf16.msra.mxu0 0
      %409 = vmatprep.subr.bf16.mxu0 0
      %410 = vmatpush1.bf16.msra.mxu0 0
      %411 = vmatprep.subr.bf16.mxu0 0
      %412 = vmatpush1.bf16.msra.mxu0 0
      %413 = vmatprep.subr.bf16.mxu0 0
      %414 = vmatpush1.bf16.msra.mxu0 0
      %415 = vmatprep.subr.bf16.mxu0 0
      %416 = vmatpush1.bf16.msra.mxu0 0
      %417 = vmatprep.subr.bf16.mxu0 0
      %418 = vmatpush1.bf16.msra.mxu0 0
      %419 = vmatprep.subr.bf16.mxu0 0
      %420 = vmatpush1.bf16.msra.mxu0 0
      %421 = vmatprep.subr.bf16.mxu0 0
      %422 = vmatpush1.bf16.msra.mxu0 0
      %423 = vmatprep.subr.bf16.mxu0 0
      %424 = vmatpush1.bf16.msra.mxu0 0
      %425 = vmatprep.subr.bf16.mxu0 0
      %426 = vmatpush1.bf16.msra.mxu0 0
      %427 = vmatprep.subr.bf16.mxu0 0
      %428 = vmatpush1.bf16.msra.mxu0 0
      %429 = vmatprep.subr.bf16.mxu0 0
      %430 = vmatpush1.bf16.msra.mxu0 0
      %431 = vmatprep.subr.bf16.mxu0 0
      %432 = vmatpush1.bf16.msra.mxu0 0
      %433 = vmatprep.mubr.bf16.mxu0 0
      %434 = vmatmul.mubr.bf16.gmra.mrb[0].mxu0 %v390
      %v435 = vpop.f32.mrb[0].mxu0
      %v436 = vadd.f32 0.0, %v435
      %v437 = vpop.f32.mrb[0].mxu0
      %v438 = vadd.f32 0.0, %v437
      %v439 = vpop.f32.mrb[0].mxu0
      %v440 = vadd.f32 0.0, %v439
      %v441 = vpop.f32.mrb[0].mxu0
      %v442 = vadd.f32 0.0, %v441
      %443 = vdwg.mxu0
      %444 = vmatprep.subr.bf16.mxu0 0
      %445 = vmatpush1.bf16.msra.mxu0 %v399
      %446 = vmatprep.subr.bf16.mxu0 0
      %447 = vmatpush1.bf16.msra.mxu0 0
      %448 = vmatprep.subr.bf16.mxu0 0
      %449 = vmatpush1.bf16.msra.mxu0 0
      %450 = vmatprep.subr.bf16.mxu0 0
      %451 = vmatpush1.bf16.msra.mxu0 0
      %452 = vmatprep.subr.bf16.mxu0 0
      %453 = vmatpush1.bf16.msra.mxu0 0
      %454 = vmatprep.subr.bf16.mxu0 0
      %455 = vmatpush1.bf16.msra.mxu0 0
      %456 = vmatprep.subr.bf16.mxu0 0
      %457 = vmatpush1.bf16.msra.mxu0 0
      %458 = vmatprep.subr.bf16.mxu0 0
      %459 = vmatpush1.bf16.msra.mxu0 0
      %460 = vmatprep.subr.bf16.mxu0 0
      %461 = vmatpush1.bf16.msra.mxu0 0
      %462 = vmatprep.subr.bf16.mxu0 0
      %463 = vmatpush1.bf16.msra.mxu0 0
      %464 = vmatprep.subr.bf16.mxu0 0
      %465 = vmatpush1.bf16.msra.mxu0 0
      %466 = vmatprep.subr.bf16.mxu0 0
      %467 = vmatpush1.bf16.msra.mxu0 0
      %468 = vmatprep.subr.bf16.mxu0 0
      %469 = vmatpush1.bf16.msra.mxu0 0
      %470 = vmatprep.subr.bf16.mxu0 0
      %471 = vmatpush1.bf16.msra.mxu0 0
      %472 = vmatprep.subr.bf16.mxu0 0
      %473 = vmatpush1.bf16.msra.mxu0 0
      %474 = vmatprep.subr.bf16.mxu0 0
      %475 = vmatpush1.bf16.msra.mxu0 0
      %476 = vmatprep.mubr.bf16.mxu0 0
      %477 = vmatmul.mubr.bf16.gmra.mrb[0].mxu0 %v390
      %v478 = vpop.f32.mrb[0].mxu0
      %v479 = vadd.f32 0.0, %v478
      %v480 = vpop.f32.mrb[0].mxu0
      %v481 = vpop.f32.mrb[0].mxu0
      %v482 = vadd.f32 0.0, %v481
      %v483 = vpop.f32.mrb[0].mxu0
      %484 = vdwg.mxu0
      %v485 = vadd.f32 %v323, %v436
      %v486 = vadd.f32 %v325, %v438
      %v487 = vadd.f32 %v366, %v479
      %v488 = vadd.f32 %v327, %v440
      %v489 = vadd.f32 %v329, %v442
      %v490 = vadd.f32 %v369, %v482
      %s491 = scalar_lea.vmem %s0, 24
      %v492 = vld [vmem:[%s491] sm:$0xf]
      %v493 = vld [vmem:[%s491 + $0x4] sm:$0xf]
      %v496 = vunpack.c.l.b16 %v492
      %v497 = vunpack.c.l.b16 %v493
      %v498 = vpack.c.b16 %v497, %v496
      %499 = vrot.lane.b32.xlu0 %v148, 110
      %v500 = vpop.permute.xlu0 %499
      %501 = vrot.lane.b32.xlu0 %v149, 110
      %v502 = vpop.permute.xlu0 %501
      %503 = vrot.lane.b32.xlu0 %v150, 110
      %v504 = vpop.permute.xlu0 %503
      %vm505 = vcmask 900096
      %v506 = vsel %vm505, %v500, %v502
      %v507 = vsel %vm505, %v502, %v504
      %v509 = vsel %vm173, %v498, 0
      %v512 = vsel %vm177, %v506, 0
      %v515 = vsel %vm177, %v507, 0
      %v518 = vsel %vm177, %v504, 0
      %520 = vmatprep.subr.bf16.mxu0 %v515
      %521 = vmatpush1.bf16.msra.mxu0 %v512
      %522 = vmatprep.subr.bf16.mxu0 0
      %523 = vmatpush1.bf16.msra.mxu0 0
      %524 = vmatprep.subr.bf16.mxu0 0
      %525 = vmatpush1.bf16.msra.mxu0 0
      %526 = vmatprep.subr.bf16.mxu0 0
      %527 = vmatpush1.bf16.msra.mxu0 0
      %528 = vmatprep.subr.bf16.mxu0 0
      %529 = vmatpush1.bf16.msra.mxu0 0
      %530 = vmatprep.subr.bf16.mxu0 0
      %531 = vmatpush1.bf16.msra.mxu0 0
      %532 = vmatprep.subr.bf16.mxu0 0
      %533 = vmatpush1.bf16.msra.mxu0 0
      %534 = vmatprep.subr.bf16.mxu0 0
      %535 = vmatpush1.bf16.msra.mxu0 0
      %536 = vmatprep.subr.bf16.mxu0 0
      %537 = vmatpush1.bf16.msra.mxu0 0
      %538 = vmatprep.subr.bf16.mxu0 0
      %539 = vmatpush1.bf16.msra.mxu0 0
      %540 = vmatprep.subr.bf16.mxu0 0
      %541 = vmatpush1.bf16.msra.mxu0 0
      %542 = vmatprep.subr.bf16.mxu0 0
      %543 = vmatpush1.bf16.msra.mxu0 0
      %544 = vmatprep.subr.bf16.mxu0 0
      %545 = vmatpush1.bf16.msra.mxu0 0
      %546 = vmatprep.subr.bf16.mxu0 0
      %547 = vmatpush1.bf16.msra.mxu0 0
      %548 = vmatprep.subr.bf16.mxu0 0
      %549 = vmatpush1.bf16.msra.mxu0 0
      %550 = vmatprep.subr.bf16.mxu0 0
      %551 = vmatpush1.bf16.msra.mxu0 0
      %552 = vmatprep.mubr.bf16.mxu0 0
      %553 = vmatmul.mubr.bf16.gmra.mrb[0].mxu0 %v509
      %v554 = vpop.f32.mrb[0].mxu0
      %v555 = vadd.f32 0.0, %v554
      %v556 = vpop.f32.mrb[0].mxu0
      %v557 = vadd.f32 0.0, %v556
      %v558 = vpop.f32.mrb[0].mxu0
      %v559 = vadd.f32 0.0, %v558
      %v560 = vpop.f32.mrb[0].mxu0
      %v561 = vadd.f32 0.0, %v560
      %562 = vdwg.mxu0
      %563 = vmatprep.subr.bf16.mxu0 0
      %564 = vmatpush1.bf16.msra.mxu0 %v518
      %565 = vmatprep.subr.bf16.mxu0 0
      %566 = vmatpush1.bf16.msra.mxu0 0
      %567 = vmatprep.subr.bf16.mxu0 0
      %568 = vmatpush1.bf16.msra.mxu0 0
      %569 = vmatprep.subr.bf16.mxu0 0
      %570 = vmatpush1.bf16.msra.mxu0 0
      %571 = vmatprep.subr.bf16.mxu0 0
      %572 = vmatpush1.bf16.msra.mxu0 0
      %573 = vmatprep.subr.bf16.mxu0 0
      %574 = vmatpush1.bf16.msra.mxu0 0
      %575 = vmatprep.subr.bf16.mxu0 0
      %576 = vmatpush1.bf16.msra.mxu0 0
      %577 = vmatprep.subr.bf16.mxu0 0
      %578 = vmatpush1.bf16.msra.mxu0 0
      %579 = vmatprep.subr.bf16.mxu0 0
      %580 = vmatpush1.bf16.msra.mxu0 0
      %581 = vmatprep.subr.bf16.mxu0 0
      %582 = vmatpush1.bf16.msra.mxu0 0
      %583 = vmatprep.subr.bf16.mxu0 0
      %584 = vmatpush1.bf16.msra.mxu0 0
      %585 = vmatprep.subr.bf16.mxu0 0
      %586 = vmatpush1.bf16.msra.mxu0 0
      %587 = vmatprep.subr.bf16.mxu0 0
      %588 = vmatpush1.bf16.msra.mxu0 0
      %589 = vmatprep.subr.bf16.mxu0 0
      %590 = vmatpush1.bf16.msra.mxu0 0
      %591 = vmatprep.subr.bf16.mxu0 0
      %592 = vmatpush1.bf16.msra.mxu0 0
      %593 = vmatprep.subr.bf16.mxu0 0
      %594 = vmatpush1.bf16.msra.mxu0 0
      %595 = vmatprep.mubr.bf16.mxu0 0
      %596 = vmatmul.mubr.bf16.gmra.mrb[0].mxu0 %v509
      %v597 = vpop.f32.mrb[0].mxu0
      %v598 = vadd.f32 0.0, %v597
      %v599 = vpop.f32.mrb[0].mxu0
      %v600 = vpop.f32.mrb[0].mxu0
      %v601 = vadd.f32 0.0, %v600
      %v602 = vpop.f32.mrb[0].mxu0
      %603 = vdwg.mxu0
      %v604 = vadd.f32 %v485, %v555
      %v605 = vadd.f32 %v486, %v557
      %v606 = vadd.f32 %v487, %v598
      %v607 = vadd.f32 %v488, %v559
      %v608 = vadd.f32 %v489, %v561
      %v609 = vadd.f32 %v490, %v601
      %s610 = scalar_lea.vmem %s0, 32
      %v611 = vld [vmem:[%s610] sm:$0xf]
      %v612 = vld [vmem:[%s610 + $0x4] sm:$0xf]
      %v615 = vunpack.c.l.b16 %v611
      %v616 = vunpack.c.l.b16 %v612
      %v617 = vpack.c.b16 %v616, %v615
      %618 = vrot.lane.b32.xlu0 %v148, 109
      %v619 = vpop.permute.xlu0 %618
      %620 = vrot.lane.b32.xlu0 %v149, 109
      %v621 = vpop.permute.xlu0 %620
      %622 = vrot.lane.b32.xlu0 %v150, 109
      %v623 = vpop.permute.xlu0 %622
      %vm624 = vcmask 891904
      %v625 = vsel %vm624, %v619, %v621
      %v626 = vsel %vm624, %v621, %v623
      %v628 = vsel %vm173, %v617, 0
      %v631 = vsel %vm177, %v625, 0
      %v634 = vsel %vm177, %v626, 0
      %v637 = vsel %vm177, %v623, 0
      %639 = vmatprep.subr.bf16.mxu0 %v634
      %640 = vmatpush1.bf16.msra.mxu0 %v631
      %641 = vmatprep.subr.bf16.mxu0 0
      %642 = vmatpush1.bf16.msra.mxu0 0
      %643 = vmatprep.subr.bf16.mxu0 0
      %644 = vmatpush1.bf16.msra.mxu0 0
      %645 = vmatprep.subr.bf16.mxu0 0
      %646 = vmatpush1.bf16.msra.mxu0 0
      %647 = vmatprep.subr.bf16.mxu0 0
      %648 = vmatpush1.bf16.msra.mxu0 0
      %649 = vmatprep.subr.bf16.mxu0 0
      %650 = vmatpush1.bf16.msra.mxu0 0
      %651 = vmatprep.subr.bf16.mxu0 0
      %652 = vmatpush1.bf16.msra.mxu0 0
      %653 = vmatprep.subr.bf16.mxu0 0
      %654 = vmatpush1.bf16.msra.mxu0 0
      %655 = vmatprep.subr.bf16.mxu0 0
      %656 = vmatpush1.bf16.msra.mxu0 0
      %657 = vmatprep.subr.bf16.mxu0 0
      %658 = vmatpush1.bf16.msra.mxu0 0
      %659 = vmatprep.subr.bf16.mxu0 0
      %660 = vmatpush1.bf16.msra.mxu0 0
      %661 = vmatprep.subr.bf16.mxu0 0
      %662 = vmatpush1.bf16.msra.mxu0 0
      %663 = vmatprep.subr.bf16.mxu0 0
      %664 = vmatpush1.bf16.msra.mxu0 0
      %665 = vmatprep.subr.bf16.mxu0 0
      %666 = vmatpush1.bf16.msra.mxu0 0
      %667 = vmatprep.subr.bf16.mxu0 0
      %668 = vmatpush1.bf16.msra.mxu0 0
      %669 = vmatprep.subr.bf16.mxu0 0
      %670 = vmatpush1.bf16.msra.mxu0 0
      %671 = vmatprep.mubr.bf16.mxu0 0
      %672 = vmatmul.mubr.bf16.gmra.mrb[0].mxu0 %v628
      %v673 = vpop.f32.mrb[0].mxu0
      %v674 = vadd.f32 0.0, %v673
      %v675 = vpop.f32.mrb[0].mxu0
      %v676 = vadd.f32 0.0, %v675
      %v677 = vpop.f32.mrb[0].mxu0
      %v678 = vadd.f32 0.0, %v677
      %v679 = vpop.f32.mrb[0].mxu0
      %v680 = vadd.f32 0.0, %v679
      %681 = vdwg.mxu0
      %682 = vmatprep.subr.bf16.mxu0 0
      %683 = vmatpush1.bf16.msra.mxu0 %v637
      %684 = vmatprep.subr.bf16.mxu0 0
      %685 = vmatpush1.bf16.msra.mxu0 0
      %686 = vmatprep.subr.bf16.mxu0 0
      %687 = vmatpush1.bf16.msra.mxu0 0
      %688 = vmatprep.subr.bf16.mxu0 0
      %689 = vmatpush1.bf16.msra.mxu0 0
      %690 = vmatprep.subr.bf16.mxu0 0
      %691 = vmatpush1.bf16.msra.mxu0 0
      %692 = vmatprep.subr.bf16.mxu0 0
      %693 = vmatpush1.bf16.msra.mxu0 0
      %694 = vmatprep.subr.bf16.mxu0 0
      %695 = vmatpush1.bf16.msra.mxu0 0
      %696 = vmatprep.subr.bf16.mxu0 0
      %697 = vmatpush1.bf16.msra.mxu0 0
      %698 = vmatprep.subr.bf16.mxu0 0
      %699 = vmatpush1.bf16.msra.mxu0 0
      %700 = vmatprep.subr.bf16.mxu0 0
      %701 = vmatpush1.bf16.msra.mxu0 0
      %702 = vmatprep.subr.bf16.mxu0 0
      %703 = vmatpush1.bf16.msra.mxu0 0
      %704 = vmatprep.subr.bf16.mxu0 0
      %705 = vmatpush1.bf16.msra.mxu0 0
      %706 = vmatprep.subr.bf16.mxu0 0
      %707 = vmatpush1.bf16.msra.mxu0 0
      %708 = vmatprep.subr.bf16.mxu0 0
      %709 = vmatpush1.bf16.msra.mxu0 0
      %710 = vmatprep.subr.bf16.mxu0 0
      %711 = vmatpush1.bf16.msra.mxu0 0
      %712 = vmatprep.subr.bf16.mxu0 0
      %713 = vmatpush1.bf16.msra.mxu0 0
      %714 = vmatprep.mubr.bf16.mxu0 0
      %715 = vmatmul.mubr.bf16.gmra.mrb[0].mxu0 %v628
      %v716 = vpop.f32.mrb[0].mxu0
      %v717 = vadd.f32 0.0, %v716
      %v718 = vpop.f32.mrb[0].mxu0
      %v719 = vpop.f32.mrb[0].mxu0
      %v720 = vadd.f32 0.0, %v719
      %v721 = vpop.f32.mrb[0].mxu0
      %722 = vdwg.mxu0
      %v723 = vadd.f32 %v604, %v674
      %v724 = vadd.f32 %v605, %v676
      %v725 = vadd.f32 %v606, %v717
      %v726 = vadd.f32 %v607, %v678
      %v727 = vadd.f32 %v608, %v680
      %v728 = vadd.f32 %v609, %v720
      %s729 = scalar_lea.vmem %s0, 40
      %v730 = vld [vmem:[%s729] sm:$0xf]
      %v731 = vld [vmem:[%s729 + $0x4] sm:$0xf]
      %v734 = vunpack.c.l.b16 %v730
      %v735 = vunpack.c.l.b16 %v731
      %v736 = vpack.c.b16 %v735, %v734
      %737 = vrot.lane.b32.xlu0 %v148, 108
      %v738 = vpop.permute.xlu0 %737
      %739 = vrot.lane.b32.xlu0 %v149, 108
      %v740 = vpop.permute.xlu0 %739
      %741 = vrot.lane.b32.xlu0 %v150, 108
      %v742 = vpop.permute.xlu0 %741
      %vm743 = vcmask 883712
      %v744 = vsel %vm743, %v738, %v740
      %v745 = vsel %vm743, %v740, %v742
      %v747 = vsel %vm173, %v736, 0
      %v750 = vsel %vm177, %v744, 0
      %v753 = vsel %vm177, %v745, 0
      %v756 = vsel %vm177, %v742, 0
      %758 = vmatprep.subr.bf16.mxu0 %v753
      %759 = vmatpush1.bf16.msra.mxu0 %v750
      %760 = vmatprep.subr.bf16.mxu0 0
      %761 = vmatpush1.bf16.msra.mxu0 0
      %762 = vmatprep.subr.bf16.mxu0 0
      %763 = vmatpush1.bf16.msra.mxu0 0
      %764 = vmatprep.subr.bf16.mxu0 0
      %765 = vmatpush1.bf16.msra.mxu0 0
      %766 = vmatprep.subr.bf16.mxu0 0
      %767 = vmatpush1.bf16.msra.mxu0 0
      %768 = vmatprep.subr.bf16.mxu0 0
      %769 = vmatpush1.bf16.msra.mxu0 0
      %770 = vmatprep.subr.bf16.mxu0 0
      %771 = vmatpush1.bf16.msra.mxu0 0
      %772 = vmatprep.subr.bf16.mxu0 0
      %773 = vmatpush1.bf16.msra.mxu0 0
      %774 = vmatprep.subr.bf16.mxu0 0
      %775 = vmatpush1.bf16.msra.mxu0 0
      %776 = vmatprep.subr.bf16.mxu0 0
      %777 = vmatpush1.bf16.msra.mxu0 0
      %778 = vmatprep.subr.bf16.mxu0 0
      %779 = vmatpush1.bf16.msra.mxu0 0
      %780 = vmatprep.subr.bf16.mxu0 0
      %781 = vmatpush1.bf16.msra.mxu0 0
      %782 = vmatprep.subr.bf16.mxu0 0
      %783 = vmatpush1.bf16.msra.mxu0 0
      %784 = vmatprep.subr.bf16.mxu0 0
      %785 = vmatpush1.bf16.msra.mxu0 0
      %786 = vmatprep.subr.bf16.mxu0 0
      %787 = vmatpush1.bf16.msra.mxu0 0
      %788 = vmatprep.subr.bf16.mxu0 0
      %789 = vmatpush1.bf16.msra.mxu0 0
      %790 = vmatprep.mubr.bf16.mxu0 0
      %791 = vmatmul.mubr.bf16.gmra.mrb[0].mxu0 %v747
      %v792 = vpop.f32.mrb[0].mxu0
      %v793 = vadd.f32 0.0, %v792
      %v794 = vpop.f32.mrb[0].mxu0
      %v795 = vadd.f32 0.0, %v794
      %v796 = vpop.f32.mrb[0].mxu0
      %v797 = vadd.f32 0.0, %v796
      %v798 = vpop.f32.mrb[0].mxu0
      %v799 = vadd.f32 0.0, %v798
      %800 = vdwg.mxu0
      %801 = vmatprep.subr.bf16.mxu0 0
      %802 = vmatpush1.bf16.msra.mxu0 %v756
      %803 = vmatprep.subr.bf16.mxu0 0
      %804 = vmatpush1.bf16.msra.mxu0 0
      %805 = vmatprep.subr.bf16.mxu0 0
      %806 = vmatpush1.bf16.msra.mxu0 0
      %807 = vmatprep.subr.bf16.mxu0 0
      %808 = vmatpush1.bf16.msra.mxu0 0
      %809 = vmatprep.subr.bf16.mxu0 0
      %810 = vmatpush1.bf16.msra.mxu0 0
      %811 = vmatprep.subr.bf16.mxu0 0
      %812 = vmatpush1.bf16.msra.mxu0 0
      %813 = vmatprep.subr.bf16.mxu0 0
      %814 = vmatpush1.bf16.msra.mxu0 0
      %815 = vmatprep.subr.bf16.mxu0 0
      %816 = vmatpush1.bf16.msra.mxu0 0
      %817 = vmatprep.subr.bf16.mxu0 0
      %818 = vmatpush1.bf16.msra.mxu0 0
      %819 = vmatprep.subr.bf16.mxu0 0
      %820 = vmatpush1.bf16.msra.mxu0 0
      %821 = vmatprep.subr.bf16.mxu0 0
      %822 = vmatpush1.bf16.msra.mxu0 0
      %823 = vmatprep.subr.bf16.mxu0 0
      %824 = vmatpush1.bf16.msra.mxu0 0
      %825 = vmatprep.subr.bf16.mxu0 0
      %826 = vmatpush1.bf16.msra.mxu0 0
      %827 = vmatprep.subr.bf16.mxu0 0
      %828 = vmatpush1.bf16.msra.mxu0 0
      %829 = vmatprep.subr.bf16.mxu0 0
      %830 = vmatpush1.bf16.msra.mxu0 0
      %831 = vmatprep.subr.bf16.mxu0 0
      %832 = vmatpush1.bf16.msra.mxu0 0
      %833 = vmatprep.mubr.bf16.mxu0 0
      %834 = vmatmul.mubr.bf16.gmra.mrb[0].mxu0 %v747
      %v835 = vpop.f32.mrb[0].mxu0
      %v836 = vadd.f32 0.0, %v835
      %v837 = vpop.f32.mrb[0].mxu0
      %v838 = vpop.f32.mrb[0].mxu0
      %v839 = vadd.f32 0.0, %v838
      %v840 = vpop.f32.mrb[0].mxu0
      %841 = vdwg.mxu0
      %v842 = vadd.f32 %v723, %v793
      %v843 = vadd.f32 %v724, %v795
      %v844 = vadd.f32 %v725, %v836
      %v845 = vadd.f32 %v726, %v797
      %v846 = vadd.f32 %v727, %v799
      %v847 = vadd.f32 %v728, %v839
      %s848 = scalar_lea.vmem %s0, 48
      %v849 = vld [vmem:[%s848] sm:$0xf]
      %v850 = vld [vmem:[%s848 + $0x4] sm:$0xf]
      %v853 = vunpack.c.l.b16 %v849
      %v854 = vunpack.c.l.b16 %v850
      %v855 = vpack.c.b16 %v854, %v853
      %856 = vrot.lane.b32.xlu0 %v148, 92
      %v857 = vpop.permute.xlu0 %856
      %858 = vrot.lane.b32.xlu0 %v149, 92
      %v859 = vpop.permute.xlu0 %858
      %860 = vrot.lane.b32.xlu0 %v150, 92
      %v861 = vpop.permute.xlu0 %860
      %vm862 = vcmask 752640
      %v863 = vsel %vm862, %v857, %v859
      %v864 = vsel %vm862, %v859, %v861
      %v866 = vsel %vm173, %v855, 0
      %v869 = vsel %vm177, %v863, 0
      %v872 = vsel %vm177, %v864, 0
      %v875 = vsel %vm177, %v861, 0
      %877 = vmatprep.subr.bf16.mxu0 %v872
      %878 = vmatpush1.bf16.msra.mxu0 %v869
      %879 = vmatprep.subr.bf16.mxu0 0
      %880 = vmatpush1.bf16.msra.mxu0 0
      %881 = vmatprep.subr.bf16.mxu0 0
      %882 = vmatpush1.bf16.msra.mxu0 0
      %883 = vmatprep.subr.bf16.mxu0 0
      %884 = vmatpush1.bf16.msra.mxu0 0
      %885 = vmatprep.subr.bf16.mxu0 0
      %886 = vmatpush1.bf16.msra.mxu0 0
      %887 = vmatprep.subr.bf16.mxu0 0
      %888 = vmatpush1.bf16.msra.mxu0 0
      %889 = vmatprep.subr.bf16.mxu0 0
      %890 = vmatpush1.bf16.msra.mxu0 0
      %891 = vmatprep.subr.bf16.mxu0 0
      %892 = vmatpush1.bf16.msra.mxu0 0
      %893 = vmatprep.subr.bf16.mxu0 0
      %894 = vmatpush1.bf16.msra.mxu0 0
      %895 = vmatprep.subr.bf16.mxu0 0
      %896 = vmatpush1.bf16.msra.mxu0 0
      %897 = vmatprep.subr.bf16.mxu0 0
      %898 = vmatpush1.bf16.msra.mxu0 0
      %899 = vmatprep.subr.bf16.mxu0 0
      %900 = vmatpush1.bf16.msra.mxu0 0
      %901 = vmatprep.subr.bf16.mxu0 0
      %902 = vmatpush1.bf16.msra.mxu0 0
      %903 = vmatprep.subr.bf16.mxu0 0
      %904 = vmatpush1.bf16.msra.mxu0 0
      %905 = vmatprep.subr.bf16.mxu0 0
      %906 = vmatpush1.bf16.msra.mxu0 0
      %907 = vmatprep.subr.bf16.mxu0 0
      %908 = vmatpush1.bf16.msra.mxu0 0
      %909 = vmatprep.mubr.bf16.mxu0 0
      %910 = vmatmul.mubr.bf16.gmra.mrb[0].mxu0 %v866
      %v911 = vpop.f32.mrb[0].mxu0
      %v912 = vadd.f32 0.0, %v911
      %v913 = vpop.f32.mrb[0].mxu0
      %v914 = vadd.f32 0.0, %v913
      %v915 = vpop.f32.mrb[0].mxu0
      %v916 = vadd.f32 0.0, %v915
      %v917 = vpop.f32.mrb[0].mxu0
      %v918 = vadd.f32 0.0, %v917
      %919 = vdwg.mxu0
      %920 = vmatprep.subr.bf16.mxu0 0
      %921 = vmatpush1.bf16.msra.mxu0 %v875
      %922 = vmatprep.subr.bf16.mxu0 0
      %923 = vmatpush1.bf16.msra.mxu0 0
      %924 = vmatprep.subr.bf16.mxu0 0
      %925 = vmatpush1.bf16.msra.mxu0 0
      %926 = vmatprep.subr.bf16.mxu0 0
      %927 = vmatpush1.bf16.msra.mxu0 0
      %928 = vmatprep.subr.bf16.mxu0 0
      %929 = vmatpush1.bf16.msra.mxu0 0
      %930 = vmatprep.subr.bf16.mxu0 0
      %931 = vmatpush1.bf16.msra.mxu0 0
      %932 = vmatprep.subr.bf16.mxu0 0
      %933 = vmatpush1.bf16.msra.mxu0 0
      %934 = vmatprep.subr.bf16.mxu0 0
      %935 = vmatpush1.bf16.msra.mxu0 0
      %936 = vmatprep.subr.bf16.mxu0 0
      %937 = vmatpush1.bf16.msra.mxu0 0
      %938 = vmatprep.subr.bf16.mxu0 0
      %939 = vmatpush1.bf16.msra.mxu0 0
      %940 = vmatprep.subr.bf16.mxu0 0
      %941 = vmatpush1.bf16.msra.mxu0 0
      %942 = vmatprep.subr.bf16.mxu0 0
      %943 = vmatpush1.bf16.msra.mxu0 0
      %944 = vmatprep.subr.bf16.mxu0 0
      %945 = vmatpush1.bf16.msra.mxu0 0
      %946 = vmatprep.subr.bf16.mxu0 0
      %947 = vmatpush1.bf16.msra.mxu0 0
      %948 = vmatprep.subr.bf16.mxu0 0
      %949 = vmatpush1.bf16.msra.mxu0 0
      %950 = vmatprep.subr.bf16.mxu0 0
      %951 = vmatpush1.bf16.msra.mxu0 0
      %952 = vmatprep.mubr.bf16.mxu0 0
      %953 = vmatmul.mubr.bf16.gmra.mrb[0].mxu0 %v866
      %v954 = vpop.f32.mrb[0].mxu0
      %v955 = vadd.f32 0.0, %v954
      %v956 = vpop.f32.mrb[0].mxu0
      %v957 = vpop.f32.mrb[0].mxu0
      %v958 = vadd.f32 0.0, %v957
      %v959 = vpop.f32.mrb[0].mxu0
      %960 = vdwg.mxu0
      %v961 = vadd.f32 %v842, %v912
      %v962 = vadd.f32 %v843, %v914
      %v963 = vadd.f32 %v844, %v955
      %v964 = vadd.f32 %v845, %v916
      %v965 = vadd.f32 %v846, %v918
      %v966 = vadd.f32 %v847, %v958
      %s967 = scalar_lea.vmem %s0, 56
      %v968 = vld [vmem:[%s967] sm:$0xf]
      %v969 = vld [vmem:[%s967 + $0x4] sm:$0xf]
      %v972 = vunpack.c.l.b16 %v968
      %v973 = vunpack.c.l.b16 %v969
      %v974 = vpack.c.b16 %v973, %v972
      %975 = vrot.lane.b32.xlu0 %v148, 91
      %v976 = vpop.permute.xlu0 %975
      %977 = vrot.lane.b32.xlu0 %v149, 91
      %v978 = vpop.permute.xlu0 %977
      %979 = vrot.lane.b32.xlu0 %v150, 91
      %v980 = vpop.permute.xlu0 %979
      %vm981 = vcmask 744448
      %v982 = vsel %vm981, %v976, %v978
      %v983 = vsel %vm981, %v978, %v980
      %v985 = vsel %vm173, %v974, 0
      %v988 = vsel %vm177, %v982, 0
      %v991 = vsel %vm177, %v983, 0
      %v994 = vsel %vm177, %v980, 0
      %996 = vmatprep.subr.bf16.mxu0 %v991
      %997 = vmatpush1.bf16.msra.mxu0 %v988
      %998 = vmatprep.subr.bf16.mxu0 0
      %999 = vmatpush1.bf16.msra.mxu0 0
      %1000 = vmatprep.subr.bf16.mxu0 0
      %1001 = vmatpush1.bf16.msra.mxu0 0
      %1002 = vmatprep.subr.bf16.mxu0 0
      %1003 = vmatpush1.bf16.msra.mxu0 0
      %1004 = vmatprep.subr.bf16.mxu0 0
      %1005 = vmatpush1.bf16.msra.mxu0 0
      %1006 = vmatprep.subr.bf16.mxu0 0
      %1007 = vmatpush1.bf16.msra.mxu0 0
      %1008 = vmatprep.subr.bf16.mxu0 0
      %1009 = vmatpush1.bf16.msra.mxu0 0
      %1010 = vmatprep.subr.bf16.mxu0 0
      %1011 = vmatpush1.bf16.msra.mxu0 0
      %1012 = vmatprep.subr.bf16.mxu0 0
      %1013 = vmatpush1.bf16.msra.mxu0 0
      %1014 = vmatprep.subr.bf16.mxu0 0
      %1015 = vmatpush1.bf16.msra.mxu0 0
      %1016 = vmatprep.subr.bf16.mxu0 0
      %1017 = vmatpush1.bf16.msra.mxu0 0
      %1018 = vmatprep.subr.bf16.mxu0 0
      %1019 = vmatpush1.bf16.msra.mxu0 0
      %1020 = vmatprep.subr.bf16.mxu0 0
      %1021 = vmatpush1.bf16.msra.mxu0 0
      %1022 = vmatprep.subr.bf16.mxu0 0
      %1023 = vmatpush1.bf16.msra.mxu0 0
      %1024 = vmatprep.subr.bf16.mxu0 0
      %1025 = vmatpush1.bf16.msra.mxu0 0
      %1026 = vmatprep.subr.bf16.mxu0 0
      %1027 = vmatpush1.bf16.msra.mxu0 0
      %1028 = vmatprep.mubr.bf16.mxu0 0
      %1029 = vmatmul.mubr.bf16.gmra.mrb[0].mxu0 %v985
      %v1030 = vpop.f32.mrb[0].mxu0
      %v1031 = vadd.f32 0.0, %v1030
      %v1032 = vpop.f32.mrb[0].mxu0
      %v1033 = vadd.f32 0.0, %v1032
      %v1034 = vpop.f32.mrb[0].mxu0
      %v1035 = vadd.f32 0.0, %v1034
      %v1036 = vpop.f32.mrb[0].mxu0
      %v1037 = vadd.f32 0.0, %v1036
      %1038 = vdwg.mxu0
      %1039 = vmatprep.subr.bf16.mxu0 0
      %1040 = vmatpush1.bf16.msra.mxu0 %v994
      %1041 = vmatprep.subr.bf16.mxu0 0
      %1042 = vmatpush1.bf16.msra.mxu0 0
      %1043 = vmatprep.subr.bf16.mxu0 0
      %1044 = vmatpush1.bf16.msra.mxu0 0
      %1045 = vmatprep.subr.bf16.mxu0 0
      %1046 = vmatpush1.bf16.msra.mxu0 0
      %1047 = vmatprep.subr.bf16.mxu0 0
      %1048 = vmatpush1.bf16.msra.mxu0 0
      %1049 = vmatprep.subr.bf16.mxu0 0
      %1050 = vmatpush1.bf16.msra.mxu0 0
      %1051 = vmatprep.subr.bf16.mxu0 0
      %1052 = vmatpush1.bf16.msra.mxu0 0
      %1053 = vmatprep.subr.bf16.mxu0 0
      %1054 = vmatpush1.bf16.msra.mxu0 0
      %1055 = vmatprep.subr.bf16.mxu0 0
      %1056 = vmatpush1.bf16.msra.mxu0 0
      %1057 = vmatprep.subr.bf16.mxu0 0
      %1058 = vmatpush1.bf16.msra.mxu0 0
      %1059 = vmatprep.subr.bf16.mxu0 0
      %1060 = vmatpush1.bf16.msra.mxu0 0
      %1061 = vmatprep.subr.bf16.mxu0 0
      %1062 = vmatpush1.bf16.msra.mxu0 0
      %1063 = vmatprep.subr.bf16.mxu0 0
      %1064 = vmatpush1.bf16.msra.mxu0 0
      %1065 = vmatprep.subr.bf16.mxu0 0
      %1066 = vmatpush1.bf16.msra.mxu0 0
      %1067 = vmatprep.subr.bf16.mxu0 0
      %1068 = vmatpush1.bf16.msra.mxu0 0
      %1069 = vmatprep.subr.bf16.mxu0 0
      %1070 = vmatpush1.bf16.msra.mxu0 0
      %1071 = vmatprep.mubr.bf16.mxu0 0
      %1072 = vmatmul.mubr.bf16.gmra.mrb[0].mxu0 %v985
      %v1073 = vpop.f32.mrb[0].mxu0
      %v1074 = vadd.f32 0.0, %v1073
      %v1075 = vpop.f32.mrb[0].mxu0
      %v1076 = vpop.f32.mrb[0].mxu0
      %v1077 = vadd.f32 0.0, %v1076
      %v1078 = vpop.f32.mrb[0].mxu0
      %1079 = vdwg.mxu0
      %v1080 = vadd.f32 %v961, %v1031
      %v1081 = vadd.f32 %v962, %v1033
      %v1082 = vadd.f32 %v963, %v1074
      %v1083 = vadd.f32 %v964, %v1035
      %v1084 = vadd.f32 %v965, %v1037
      %v1085 = vadd.f32 %v966, %v1077
      %s1086 = scalar_lea.vmem %s0, 64
      %v1087 = vld [vmem:[%s1086] sm:$0xf]
      %v1088 = vld [vmem:[%s1086 + $0x4] sm:$0xf]
      %v1091 = vunpack.c.l.b16 %v1087
      %v1092 = vunpack.c.l.b16 %v1088
      %v1093 = vpack.c.b16 %v1092, %v1091
      %1094 = vrot.lane.b32.xlu0 %v148, 90
      %v1095 = vpop.permute.xlu0 %1094
      %1096 = vrot.lane.b32.xlu0 %v149, 90
      %v1097 = vpop.permute.xlu0 %1096
      %1098 = vrot.lane.b32.xlu0 %v150, 90
      %v1099 = vpop.permute.xlu0 %1098
      %vm1100 = vcmask 736256
      %v1101 = vsel %vm1100, %v1095, %v1097
      %v1102 = vsel %vm1100, %v1097, %v1099
      %v1104 = vsel %vm173, %v1093, 0
      %v1107 = vsel %vm177, %v1101, 0
      %v1110 = vsel %vm177, %v1102, 0
      %v1113 = vsel %vm177, %v1099, 0
      %1115 = vmatprep.subr.bf16.mxu0 %v1110
      %1116 = vmatpush1.bf16.msra.mxu0 %v1107
      %1117 = vmatprep.subr.bf16.mxu0 0
      %1118 = vmatpush1.bf16.msra.mxu0 0
      %1119 = vmatprep.subr.bf16.mxu0 0
      %1120 = vmatpush1.bf16.msra.mxu0 0
      %1121 = vmatprep.subr.bf16.mxu0 0
      %1122 = vmatpush1.bf16.msra.mxu0 0
      %1123 = vmatprep.subr.bf16.mxu0 0
      %1124 = vmatpush1.bf16.msra.mxu0 0
      %1125 = vmatprep.subr.bf16.mxu0 0
      %1126 = vmatpush1.bf16.msra.mxu0 0
      %1127 = vmatprep.subr.bf16.mxu0 0
      %1128 = vmatpush1.bf16.msra.mxu0 0
      %1129 = vmatprep.subr.bf16.mxu0 0
      %1130 = vmatpush1.bf16.msra.mxu0 0
      %1131 = vmatprep.subr.bf16.mxu0 0
      %1132 = vmatpush1.bf16.msra.mxu0 0
      %1133 = vmatprep.subr.bf16.mxu0 0
      %1134 = vmatpush1.bf16.msra.mxu0 0
      %1135 = vmatprep.subr.bf16.mxu0 0
      %1136 = vmatpush1.bf16.msra.mxu0 0
      %1137 = vmatprep.subr.bf16.mxu0 0
      %1138 = vmatpush1.bf16.msra.mxu0 0
      %1139 = vmatprep.subr.bf16.mxu0 0
      %1140 = vmatpush1.bf16.msra.mxu0 0
      %1141 = vmatprep.subr.bf16.mxu0 0
      %1142 = vmatpush1.bf16.msra.mxu0 0
      %1143 = vmatprep.subr.bf16.mxu0 0
      %1144 = vmatpush1.bf16.msra.mxu0 0
      %1145 = vmatprep.subr.bf16.mxu0 0
      %1146 = vmatpush1.bf16.msra.mxu0 0
      %1147 = vmatprep.mubr.bf16.mxu0 0
      %1148 = vmatmul.mubr.bf16.gmra.mrb[0].mxu0 %v1104
      %v1149 = vpop.f32.mrb[0].mxu0
      %v1150 = vadd.f32 0.0, %v1149
      %v1151 = vpop.f32.mrb[0].mxu0
      %v1152 = vadd.f32 0.0, %v1151
      %v1153 = vpop.f32.mrb[0].mxu0
      %v1154 = vadd.f32 0.0, %v1153
      %v1155 = vpop.f32.mrb[0].mxu0
      %v1156 = vadd.f32 0.0, %v1155
      %1157 = vdwg.mxu0
      %1158 = vmatprep.subr.bf16.mxu0 0
      %1159 = vmatpush1.bf16.msra.mxu0 %v1113
      %1160 = vmatprep.subr.bf16.mxu0 0
      %1161 = vmatpush1.bf16.msra.mxu0 0
      %1162 = vmatprep.subr.bf16.mxu0 0
      %1163 = vmatpush1.bf16.msra.mxu0 0
      %1164 = vmatprep.subr.bf16.mxu0 0
      %1165 = vmatpush1.bf16.msra.mxu0 0
      %1166 = vmatprep.subr.bf16.mxu0 0
      %1167 = vmatpush1.bf16.msra.mxu0 0
      %1168 = vmatprep.subr.bf16.mxu0 0
      %1169 = vmatpush1.bf16.msra.mxu0 0
      %1170 = vmatprep.subr.bf16.mxu0 0
      %1171 = vmatpush1.bf16.msra.mxu0 0
      %1172 = vmatprep.subr.bf16.mxu0 0
      %1173 = vmatpush1.bf16.msra.mxu0 0
      %1174 = vmatprep.subr.bf16.mxu0 0
      %1175 = vmatpush1.bf16.msra.mxu0 0
      %1176 = vmatprep.subr.bf16.mxu0 0
      %1177 = vmatpush1.bf16.msra.mxu0 0
      %1178 = vmatprep.subr.bf16.mxu0 0
      %1179 = vmatpush1.bf16.msra.mxu0 0
      %1180 = vmatprep.subr.bf16.mxu0 0
      %1181 = vmatpush1.bf16.msra.mxu0 0
      %1182 = vmatprep.subr.bf16.mxu0 0
      %1183 = vmatpush1.bf16.msra.mxu0 0
      %1184 = vmatprep.subr.bf16.mxu0 0
      %1185 = vmatpush1.bf16.msra.mxu0 0
      %1186 = vmatprep.subr.bf16.mxu0 0
      %1187 = vmatpush1.bf16.msra.mxu0 0
      %1188 = vmatprep.subr.bf16.mxu0 0
      %1189 = vmatpush1.bf16.msra.mxu0 0
      %1190 = vmatprep.mubr.bf16.mxu0 0
      %1191 = vmatmul.mubr.bf16.gmra.mrb[0].mxu0 %v1104
      %v1192 = vpop.f32.mrb[0].mxu0
      %v1193 = vadd.f32 0.0, %v1192
      %v1194 = vpop.f32.mrb[0].mxu0
      %v1195 = vpop.f32.mrb[0].mxu0
      %v1196 = vadd.f32 0.0, %v1195
      %v1197 = vpop.f32.mrb[0].mxu0
      %1198 = vdwg.mxu0
      %v1199 = vadd.f32 %v1080, %v1150
      %v1200 = vadd.f32 %v1081, %v1152
      %v1201 = vadd.f32 %v1082, %v1193
      %v1202 = vadd.f32 %v1083, %v1154
      %v1203 = vadd.f32 %v1084, %v1156
      %v1204 = vadd.f32 %v1085, %v1196
      %v1205 = vpack.c.bf16 %v1202, %v1199
      %v1206 = vpack.c.bf16 %v1203, %v1200
      %v1207 = vpack.c.bf16 %v1204, %v1201
      %v1211 = vunpack.c.l.b16 %v1205
      %v1212 = vunpack.c.l.b16 %v1206
      %v1213 = vunpack.c.l.b16 %v1207
      %v1214 = vunpack.c.h.b16 %v1205
      %v1215 = vunpack.c.h.b16 %v1206
      %v1216 = vunpack.c.h.b16 %v1207
      %v1217 = vpack.c.b16 %v1212, %v1211
      %v1218 = vpack.c.b16 %v1213, %v1213
      %v1219 = vpack.c.b16 %v1215, %v1214
      %v1220 = vpack.c.b16 %v1216, %v1216
      %1225 = vst [vmem:[%s143] sm:$0xff] %v1217
      %vm1226 = vcmask 257024
      %1227 = vst.msk [vmem:[%s143 + $0x8] sm:$0xf] %vm1226, %v1218
      %1228 = vst [vmem:[%s143 + $0xc] sm:$0xff] %v1219
      %1229 = vst.msk [vmem:[%s143 + $0x14] sm:$0xf] %vm1226, %v1220
      %p1230 = scmp.lt.s32.totalorder %s13, 1
      %s1231 = scalar_select %p1230, %s13, 1
      %s1232 = smul.addr %s1231, 6
      %s1233 = smul.addr %s1232, 4
      %s1234 = scalar_lea.vmem %s2, %s1233
      // Predicated region
      $region29: #{nested_mdta_forward.9} parent=27 // pred_check
        %p1235 = pneg %p78
      $region30: #{nested_mdta_forward.9} parent=27 // pred_check_branch
        %1237 = sbr.rel (%p1235) target = $region32
      $region31: #{nested_mdta_forward.9} parent=27 // pred_region
        _
      $region32: #{nested_mdta_forward.9} parent=27 // pred_fallthru
        _
    $region28: #{nested_mdta_forward.9} parent=5 // pred_fallthru
      _
    %p1238 = scmp.le.s32.totalorder 2, %s8
    // Predicated region
    $region33: #{nested_mdta_forward.9} parent=5 // pred_check
      %p1239 = pneg %p1238
    $region34: #{nested_mdta_forward.9} parent=5 // pred_check_branch
      %1241 = sbr.rel (%p1239) target = $region36
    $region35: #{nested_mdta_forward.9} parent=5 // pred_region
      %s1242 = ssub.s32 %s8, 2
      // Predicated region
      $region37: #{nested_mdta_forward.9} parent=35 // pred_check
        %p1243 = pneg %p84
      $region38: #{nested_mdta_forward.9} parent=35 // pred_check_branch
        %1245 = sbr.rel (%p1243) target = $region40
      $region39: #{nested_mdta_forward.9} parent=35 // pred_region
        %p1246 = scmp.lt.s32.totalorder %s14, 1
        %s1247 = scalar_select %p1246, %s14, 1
        %s1248 = smul.addr %s1247, 6
        %s1249 = smul.addr %s1248, 4
        %s1250 = scalar_lea.vmem %s2, %s1249
      $region40: #{nested_mdta_forward.9} parent=35 // pred_fallthru
        _
    $region36: #{nested_mdta_forward.9} parent=5 // pred_fallthru
      _
  $region6: #{nested_mdta_forward.9} parent=0 // loop_footer
    %s12 = sadd.s32 1, %s8
  $region7: #{nested_mdta_forward.9} parent=0 // loop_footer_branch
    %7 = sbr.rel target = $region3
  $region8: #{nested_mdta_forward.9} parent=0 // loop_exit
    _

// kernel: nested_mdta_forward.11
$region0: #{nested_mdta_forward.11}
  #allocation0 [shape = 'u32[]', space=smem, size = 0x4, offset = 0x4, fixed_abs, tag = 'smem constant byte address 0x4 - core index']
  #allocation1 [shape = 'u32[144,128]{1,0:T(1,128)}', space=vmem, size = 0x12000, scoped, tag = 'internal scratch']
  %s0 = inlined_call_operand.vmem [shape: f32[2,2,4,4], index: 0, kind: input, shape index: {}]
  %s1 = inlined_call_operand.vmem [shape: bf16[2,2,4,256], index: 1, kind: input, shape index: {}]
  %s2 = inlined_call_operand.vmem [shape: bf16[2,2,4,256], index: 2, kind: output, shape index: {}]
  %s3 = sld [smem:[#allocation0]]
  $region41: #{nested_mdta_forward.11} parent=0
    _
  %s5 = ssub.s32 1, %s3
  %s6 = scalar_select 0, %s5, %s3
  loop: start=0, step=1, limit=4
  $region2: #{nested_mdta_forward.11} parent=0 // loop_pre_header
    _
  $region3: #{nested_mdta_forward.11} parent=0 // loop_header
    %s8 = sphi 0, %s12
    %p9 = scmp.ge.s32.totalorder %s8, 4
    %s15 = sphi 0, %s27
    %s16 = sphi 0, %s23
    %s17 = sphi 0, %s15
    %s18 = sphi 0, %s16
    %s19 = sphi 0, %s17
    %s20 = sphi 0, %s18
    %s30 = sphi 0, %s32
    %s33 = sphi 0, %s30
    %s34 = sphi 0, %s33
    %s50 = sphi 0, %s34
    %s58 = sphi 0, %s60
    %s61 = sphi 0, %s58
    %s62 = sphi 0, %s61
    %s78 = sphi 0, %s62
    %s86 = sphi 0, %s88
    %s89 = sphi 0, %s86
    %s90 = sphi 0, %s89
    %s106 = sphi 0, %s90
  $region4: #{nested_mdta_forward.11} parent=0 // loop_header_branch
    %11 = sbr.rel (%p9) target = $region8
  $region5: #{nested_mdta_forward.11} parent=0 // loop_body
    %s13 = ssub.s32 %s8, 1
    %s14 = ssub.s32 %s8, 2
    %s21 = sadd.s32 1, %s16
    %p22 = scmp.ge.s32.totalorder %s21, 1
    %s23 = scalar_select %p22, 0, %s21
    %s24 = sadd.s32 1, %s15
    %s25 = scalar_select %p22, %s24, %s15
    %p26 = scmp.ge.s32.totalorder %s25, 2
    %s27 = scalar_select %p26, 0, %s25
    %s28 = ssub.s32 %s15, %s27
    %p29 = scmp.eq.s32.totalorder %s28, 0
    %s31 = sadd.s32 %s30, 1
    %s32 = scalar_select %p29, %s30, %s31
    %p35 = pneg %p29
    %p36 = scmp.eq.s32.totalorder %s8, 1
    %p37 = por %p35, %p36
    %p38 = scmp.ne.s32.totalorder %s30, %s33
    %p39 = scmp.eq.s32.totalorder %s8, 0
    %p40 = por %p38, %p39
    %p41 = scmp.ne.s32.totalorder %s30, %s33
    %p42 = scmp.eq.s32.totalorder %s13, 1
    %p43 = por %p41, %p42
    %p44 = scmp.ne.s32.totalorder %s33, %s34
    %p45 = scmp.eq.s32.totalorder %s13, 0
    %p46 = por %p44, %p45
    %p47 = scmp.ne.s32.totalorder %s33, %s34
    %p48 = scmp.eq.s32.totalorder %s14, 1
    %p49 = por %p47, %p48
    %p51 = scmp.ne.s32.totalorder %s34, %s50
    %p52 = scmp.eq.s32.totalorder %s14, 0
    %p53 = por %p51, %p52
    %s54 = ssub.s32 %s15, %s27
    %s55 = ssub.s32 %s16, %s23
    %s56 = sor.u32 %s54, %s55
    %p57 = scmp.eq.s32.totalorder %s56, 0
    %s59 = sadd.s32 %s58, 1
    %s60 = scalar_select %p57, %s58, %s59
    %p63 = pneg %p57
    %p64 = scmp.eq.s32.totalorder %s8, 1
    %p65 = por %p63, %p64
    %p66 = scmp.ne.s32.totalorder %s58, %s61
    %p67 = scmp.eq.s32.totalorder %s8, 0
    %p68 = por %p66, %p67
    %p69 = scmp.ne.s32.totalorder %s58, %s61
    %p70 = scmp.eq.s32.totalorder %s13, 1
    %p71 = por %p69, %p70
    %p72 = scmp.ne.s32.totalorder %s61, %s62
    %p73 = scmp.eq.s32.totalorder %s13, 0
    %p74 = por %p72, %p73
    %p75 = scmp.ne.s32.totalorder %s61, %s62
    %p76 = scmp.eq.s32.totalorder %s14, 1
    %p77 = por %p75, %p76
    %p79 = scmp.ne.s32.totalorder %s62, %s78
    %p80 = scmp.eq.s32.totalorder %s14, 0
    %p81 = por %p79, %p80
    %s82 = ssub.s32 %s15, %s27
    %s83 = ssub.s32 %s16, %s23
    %s84 = sor.u32 %s82, %s83
    %p85 = scmp.eq.s32.totalorder %s84, 0
    %s87 = sadd.s32 %s86, 1
    %s88 = scalar_select %p85, %s86, %s87
    %p91 = pneg %p85
    %p92 = scmp.eq.s32.totalorder %s8, 1
    %p93 = por %p91, %p92
    %p94 = scmp.ne.s32.totalorder %s86, %s89
    %p95 = scmp.eq.s32.totalorder %s8, 0
    %p96 = por %p94, %p95
    %p97 = scmp.ne.s32.totalorder %s86, %s89
    %p98 = scmp.eq.s32.totalorder %s13, 1
    %p99 = por %p97, %p98
    %p100 = scmp.ne.s32.totalorder %s89, %s90
    %p101 = scmp.eq.s32.totalorder %s13, 0
    %p102 = por %p100, %p101
    %p103 = scmp.ne.s32.totalorder %s89, %s90
    %p104 = scmp.eq.s32.totalorder %s14, 1
    %p105 = por %p103, %p104
    %p107 = scmp.ne.s32.totalorder %s90, %s106
    %p108 = scmp.eq.s32.totalorder %s14, 0
    %p109 = por %p107, %p108
    %p110 = scmp.le.s32.totalorder 1, %s8
    %p111 = scmp.lt.s32.totalorder %s8, 3
    %p112 = pnand %p110, %p111
    %p113 = pneg %p112
    // Predicated region
    $region9: #{nested_mdta_forward.11} parent=5 // pred_check
      _
    $region10: #{nested_mdta_forward.11} parent=5 // pred_check_branch
      %115 = sbr.rel (%p112) target = $region12
    $region11: #{nested_mdta_forward.11} parent=5 // pred_region
      %s116 = ssub.s32 %s8, 1
    $region12: #{nested_mdta_forward.11} parent=5 // pred_fallthru
      _
    %p117 = scmp.lt.s32.totalorder %s8, 2
    // Predicated region
    $region13: #{nested_mdta_forward.11} parent=5 // pred_check
      %p118 = pneg %p117
    $region14: #{nested_mdta_forward.11} parent=5 // pred_check_branch
      %120 = sbr.rel (%p118) target = $region16
    $region15: #{nested_mdta_forward.11} parent=5 // pred_region
      // Predicated region
      $region17: #{nested_mdta_forward.11} parent=15 // pred_check
        %p121 = pneg %p40
      $region18: #{nested_mdta_forward.11} parent=15 // pred_check_branch
        %123 = sbr.rel (%p121) target = $region20
      $region19: #{nested_mdta_forward.11} parent=15 // pred_region
        %p124 = scmp.lt.s32.totalorder %s15, 1
        %s125 = scalar_select %p124, %s15, 1
        %s126 = smul.addr %s125, 2
        %s127 = smul.addr %s126, 4
        %s128 = scalar_lea.vmem %s0, %s127
      $region20: #{nested_mdta_forward.11} parent=15 // pred_fallthru
        _
      // Predicated region
      $region21: #{nested_mdta_forward.11} parent=15 // pred_check
        %p129 = pneg %p68
      $region22: #{nested_mdta_forward.11} parent=15 // pred_check_branch
        %131 = sbr.rel (%p129) target = $region24
      $region23: #{nested_mdta_forward.11} parent=15 // pred_region
        %s132 = smul.u32 2, %s16
        %p133 = scmp.lt.s32.totalorder %s15, 1
        %s134 = scalar_select %p133, %s15, 1
        %p135 = scmp.lt.s32.totalorder %s132, 1
        %s136 = scalar_select %p135, %s132, 1
        %s137 = smul.addr %s134, 4
        %s138 = sadd.s32 %s136, %s137
        %s139 = smul.addr %s138, 2
        %s140 = scalar_lea.vmem %s1, %s139
        %s141 = smul.u32 2, %s16
      $region24: #{nested_mdta_forward.11} parent=15 // pred_fallthru
        _
    $region16: #{nested_mdta_forward.11} parent=5 // pred_fallthru
      _
    %p142 = scmp.le.s32.totalorder 1, %s8
    %p143 = scmp.lt.s32.totalorder %s8, 3
    %p144 = pnand %p142, %p143
    %p145 = pneg %p144
    // Predicated region
    $region25: #{nested_mdta_forward.11} parent=5 // pred_check
      _
    $region26: #{nested_mdta_forward.11} parent=5 // pred_check_branch
      %147 = sbr.rel (%p144) target = $region28
    $region27: #{nested_mdta_forward.11} parent=5 // pred_region
      %s148 = ssub.s32 %s8, 1
      %p149 = scmp.lt.s32.totalorder %s17, 1
      %s150 = scalar_select %p149, %s17, 1
      %s151 = smul.addr %s150, 2
      %s152 = smul.addr %s151, 4
      %s153 = scalar_lea.vmem %s0, %s152
      %p154 = pneg %p46
      %p155 = pneg %p43
      %s156 = smul.u32 2, %s18
      %p157 = scmp.lt.s32.totalorder %s17, 1
      %s158 = scalar_select %p157, %s17, 1
      %p159 = scmp.lt.s32.totalorder %s156, 1
      %s160 = scalar_select %p159, %s156, 1
      %s161 = smul.addr %s158, 4
      %s162 = sadd.s32 %s160, %s161
      %s163 = smul.addr %s162, 2
      %s164 = scalar_lea.vmem %s1, %s163
      %p165 = pneg %p74
      %p166 = pneg %p71
      %p167 = pneg %p102
      %p168 = pneg %p99
      %s169 = smul.u32 2, %s18
      %p170 = scmp.lt.s32.totalorder %s17, 1
      %s171 = scalar_select %p170, %s17, 1
      %p172 = scmp.lt.s32.totalorder %s169, 1
      %s173 = scalar_select %p172, %s169, 1
      %s174 = smul.addr %s171, 4
      %s175 = sadd.s32 %s173, %s174
      %s176 = smul.addr %s175, 2
      %s177 = scalar_lea.vmem %s2, %s176
      %p178 = scmp.lt.s32.totalorder %s17, 1
      %s179 = scalar_select %p178, %s17, 1
      %s180 = smul.addr %s179, 2
      %s181 = smul.addr %s180, 4
      %s182 = scalar_lea.vmem %s0, %s181
      %s183 = smul.u32 2, %s18
      %p184 = scmp.lt.s32.totalorder %s17, 1
      %s185 = scalar_select %p184, %s17, 1
      %p186 = scmp.lt.s32.totalorder %s183, 1
      %s187 = scalar_select %p186, %s183, 1
      %s188 = smul.addr %s185, 4
      %s189 = sadd.s32 %s187, %s188
      %s190 = smul.addr %s189, 2
      %s191 = scalar_lea.vmem %s1, %s190
      %s192 = smul.u32 2, %s18
      %s193 = smul.u32 2, %s18
      %p194 = scmp.lt.s32.totalorder %s17, 1
      %s195 = scalar_select %p194, %s17, 1
      %p196 = scmp.lt.s32.totalorder %s193, 1
      %s197 = scalar_select %p196, %s193, 1
      %s198 = smul.addr %s195, 4
      %s199 = sadd.s32 %s197, %s198
      %s200 = smul.addr %s199, 2
      %s201 = scalar_lea.vmem %s2, %s200
      %s202 = smul.u32 2, %s18
      %v204 = vld [vmem:[%s182] sm:$0xf]
      %v205 = vld [vmem:[%s182 + $0x4] sm:$0xf]
      %v206 = vpack.c.bf16 %v204, %v204
      %v207 = vpack.c.bf16 %v205, %v205
      %v208 = vld [vmem:[%s191] sm:$0xf]
      %v209 = vld [vmem:[%s191 + $0x4] sm:$0xf]
      %v212 = vunpack.c.l.s4 1983009808
      %v213 = vunpack.c.0.s8 %v212
      %v214 = vlaneseq
      %v215 = vshrl.u32 %v214, 7
      %v216 = vsub.s32 %v213, %v215
      %v217 = vrot.slane %v208, %v216
      %v218 = vcombine.high %v217, %v217
      %vm219 = vcmask 31744
      %v221 = vsel %vm219, %v206, 0
      %vm223 = vcmask 1041408
      %v225 = vsel %vm223, %v217, 0
      %v228 = vsel %vm223, %v218, 0
      %230 = vmatprep.subr.bf16.mxu0 %v228
      %231 = vmatpush1.bf16.msra.mxu0 %v225
      %232 = vmatprep.subr.bf16.mxu0 0
      %233 = vmatpush1.bf16.msra.mxu0 0
      %234 = vmatprep.subr.bf16.mxu0 0
      %235 = vmatpush1.bf16.msra.mxu0 0
      %236 = vmatprep.subr.bf16.mxu0 0
      %237 = vmatpush1.bf16.msra.mxu0 0
      %238 = vmatprep.subr.bf16.mxu0 0
      %239 = vmatpush1.bf16.msra.mxu0 0
      %240 = vmatprep.subr.bf16.mxu0 0
      %241 = vmatpush1.bf16.msra.mxu0 0
      %242 = vmatprep.subr.bf16.mxu0 0
      %243 = vmatpush1.bf16.msra.mxu0 0
      %244 = vmatprep.subr.bf16.mxu0 0
      %245 = vmatpush1.bf16.msra.mxu0 0
      %246 = vmatprep.subr.bf16.mxu0 0
      %247 = vmatpush1.bf16.msra.mxu0 0
      %248 = vmatprep.subr.bf16.mxu0 0
      %249 = vmatpush1.bf16.msra.mxu0 0
      %250 = vmatprep.subr.bf16.mxu0 0
      %251 = vmatpush1.bf16.msra.mxu0 0
      %252 = vmatprep.subr.bf16.mxu0 0
      %253 = vmatpush1.bf16.msra.mxu0 0
      %254 = vmatprep.subr.bf16.mxu0 0
      %255 = vmatpush1.bf16.msra.mxu0 0
      %256 = vmatprep.subr.bf16.mxu0 0
      %257 = vmatpush1.bf16.msra.mxu0 0
      %258 = vmatprep.subr.bf16.mxu0 0
      %259 = vmatpush1.bf16.msra.mxu0 0
      %260 = vmatprep.subr.bf16.mxu0 0
      %261 = vmatpush1.bf16.msra.mxu0 0
      %262 = vmatprep.mubr.bf16.mxu0 0
      %263 = vmatmul.mubr.bf16.gmra.mrb[0].mxu0 %v221
      %v264 = vpop.f32.mrb[0].mxu0
      %v265 = vadd.f32 0.0, %v264
      %v266 = vpop.f32.mrb[0].mxu0
      %v267 = vadd.f32 0.0, %v266
      %v268 = vpop.f32.mrb[0].mxu0
      %v269 = vpop.f32.mrb[0].mxu0
      %270 = vdwg.mxu0
      %v273 = vunpack.c.l.s4 1983009808
      %v274 = vunpack.c.0.s8 %v273
      %v275 = vlaneseq
      %v276 = vshrl.u32 %v275, 7
      %v277 = vsub.s32 %v274, %v276
      %v278 = vrot.slane %v209, %v277
      %v279 = vcombine.high %v278, %v278
      %v281 = vsel %vm219, %v207, 0
      %v284 = vsel %vm223, %v278, 0
      %v287 = vsel %vm223, %v279, 0
      %289 = vmatprep.subr.bf16.mxu0 %v287
      %290 = vmatpush1.bf16.msra.mxu0 %v284
      %291 = vmatprep.subr.bf16.mxu0 0
      %292 = vmatpush1.bf16.msra.mxu0 0
      %293 = vmatprep.subr.bf16.mxu0 0
      %294 = vmatpush1.bf16.msra.mxu0 0
      %295 = vmatprep.subr.bf16.mxu0 0
      %296 = vmatpush1.bf16.msra.mxu0 0
      %297 = vmatprep.subr.bf16.mxu0 0
      %298 = vmatpush1.bf16.msra.mxu0 0
      %299 = vmatprep.subr.bf16.mxu0 0
      %300 = vmatpush1.bf16.msra.mxu0 0
      %301 = vmatprep.subr.bf16.mxu0 0
      %302 = vmatpush1.bf16.msra.mxu0 0
      %303 = vmatprep.subr.bf16.mxu0 0
      %304 = vmatpush1.bf16.msra.mxu0 0
      %305 = vmatprep.subr.bf16.mxu0 0
      %306 = vmatpush1.bf16.msra.mxu0 0
      %307 = vmatprep.subr.bf16.mxu0 0
      %308 = vmatpush1.bf16.msra.mxu0 0
      %309 = vmatprep.subr.bf16.mxu0 0
      %310 = vmatpush1.bf16.msra.mxu0 0
      %311 = vmatprep.subr.bf16.mxu0 0
      %312 = vmatpush1.bf16.msra.mxu0 0
      %313 = vmatprep.subr.bf16.mxu0 0
      %314 = vmatpush1.bf16.msra.mxu0 0
      %315 = vmatprep.subr.bf16.mxu0 0
      %316 = vmatpush1.bf16.msra.mxu0 0
      %317 = vmatprep.subr.bf16.mxu0 0
      %318 = vmatpush1.bf16.msra.mxu0 0
      %319 = vmatprep.subr.bf16.mxu0 0
      %320 = vmatpush1.bf16.msra.mxu0 0
      %321 = vmatprep.mubr.bf16.mxu0 0
      %322 = vmatmul.mubr.bf16.gmra.mrb[0].mxu0 %v281
      %v323 = vpop.f32.mrb[0].mxu0
      %v324 = vadd.f32 0.0, %v323
      %v325 = vpop.f32.mrb[0].mxu0
      %v326 = vadd.f32 0.0, %v325
      %v327 = vpop.f32.mrb[0].mxu0
      %v328 = vpop.f32.mrb[0].mxu0
      %329 = vdwg.mxu0
      %v330 = vpack.c.bf16 %v265, %v265
      %v331 = vpack.c.bf16 %v267, %v267
      %v332 = vpack.c.bf16 %v324, %v324
      %v333 = vpack.c.bf16 %v326, %v326
      %v338 = vcombine.low %v330, %v331
      %v340 = vunpack.c.l.s4 1983009808
      %v341 = vunpack.c.0.s8 %v340
      %v342 = vlaneseq
      %v343 = vshrl.u32 %v342, 7
      %v344 = vsub.s32 %v341, %v343
      %v345 = vrot.slane %v338, %v344
      %v346 = vcombine.low %v332, %v333
      %v348 = vunpack.c.l.s4 1983009808
      %v349 = vunpack.c.0.s8 %v348
      %v350 = vlaneseq
      %v351 = vshrl.u32 %v350, 7
      %v352 = vsub.s32 %v349, %v351
      %v353 = vrot.slane %v346, %v352
      %356 = vst [vmem:[%s201] sm:$0xf] %v345
      %357 = vst [vmem:[%s201 + $0x4] sm:$0xf] %v353
      %s358 = smul.u32 2, %s18
      %p359 = scmp.lt.s32.totalorder %s17, 1
      %s360 = scalar_select %p359, %s17, 1
      %p361 = scmp.lt.s32.totalorder %s358, 1
      %s362 = scalar_select %p361, %s358, 1
      %s363 = smul.addr %s360, 4
      %s364 = sadd.s32 %s362, %s363
      %s365 = smul.addr %s364, 2
      %s366 = scalar_lea.vmem %s2, %s365
      // Predicated region
      $region29: #{nested_mdta_forward.11} parent=27 // pred_check
        %p367 = pneg %p99
      $region30: #{nested_mdta_forward.11} parent=27 // pred_check_branch
        %369 = sbr.rel (%p367) target = $region32
      $region31: #{nested_mdta_forward.11} parent=27 // pred_region
        %s370 = smul.u32 2, %s18
      $region32: #{nested_mdta_forward.11} parent=27 // pred_fallthru
        _
    $region28: #{nested_mdta_forward.11} parent=5 // pred_fallthru
      _
    %p371 = scmp.le.s32.totalorder 2, %s8
    // Predicated region
    $region33: #{nested_mdta_forward.11} parent=5 // pred_check
      %p372 = pneg %p371
    $region34: #{nested_mdta_forward.11} parent=5 // pred_check_branch
      %374 = sbr.rel (%p372) target = $region36
    $region35: #{nested_mdta_forward.11} parent=5 // pred_region
      %s375 = ssub.s32 %s8, 2
      // Predicated region
      $region37: #{nested_mdta_forward.11} parent=35 // pred_check
        %p376 = pneg %p105
      $region38: #{nested_mdta_forward.11} parent=35 // pred_check_branch
        %378 = sbr.rel (%p376) target = $region40
      $region39: #{nested_mdta_forward.11} parent=35 // pred_region
        %s379 = smul.u32 2, %s20
        %p380 = scmp.lt.s32.totalorder %s19, 1
        %s381 = scalar_select %p380, %s19, 1
        %p382 = scmp.lt.s32.totalorder %s379, 1
        %s383 = scalar_select %p382, %s379, 1
        %s384 = smul.addr %s381, 4
        %s385 = sadd.s32 %s383, %s384
        %s386 = smul.addr %s385, 2
        %s387 = scalar_lea.vmem %s2, %s386
      $region40: #{nested_mdta_forward.11} parent=35 // pred_fallthru
        _
    $region36: #{nested_mdta_forward.11} parent=5 // pred_fallthru
      _
  $region6: #{nested_mdta_forward.11} parent=0 // loop_footer
    %s12 = sadd.s32 1, %s8
  $region7: #{nested_mdta_forward.11} parent=0 // loop_footer_branch
    %7 = sbr.rel target = $region3
  $region8: #{nested_mdta_forward.11} parent=0 // loop_exit
    _

// kernel: nested_mdta_forward.10
$region0: #{nested_mdta_forward.10}
  #allocation0 [shape = 'u32[]', space=smem, size = 0x4, offset = 0x4, fixed_abs, tag = 'smem constant byte address 0x4 - core index']
  #allocation1 [shape = 'u32[144,128]{1,0:T(1,128)}', space=vmem, size = 0x12000, scoped, tag = 'internal scratch']
  #allocation2 [shape = 'f32[2,4,4]{2,1,0:T(4,128)}', space=vmem, size = 0x1000, scoped, tag = 'scratch operand']
  #allocation3 [shape = 'f32[2,4,1]{2,1,0:T(4,128)}', space=vmem, size = 0x1000, scoped, tag = 'scratch operand']
  #allocation4 [shape = 'f32[2,1,4]{2,1,0:T(1,128)}', space=vmem, size = 0x400, scoped, tag = 'scratch operand']
  %s0 = inlined_call_operand.vmem [shape: f32[2,1,1], index: 0, kind: input, shape index: {}]
  %s1 = inlined_call_operand.vmem [shape: f32[2,2,4,256], index: 1, kind: input, shape index: {}]
  %s2 = inlined_call_operand.vmem [shape: bf16[2,2,4,256], index: 2, kind: input, shape index: {}]
  %s3 = inlined_call_operand.vmem [shape: f32[2,2,4,4], index: 3, kind: output, shape index: {}]
  %s4 = sld [smem:[#allocation0]]
  $region53: #{nested_mdta_forward.10} parent=0
    _
  %s6 = ssub.s32 1, %s4
  %s7 = scalar_select 0, %s6, %s4
  loop: start=0, step=1, limit=4
  $region2: #{nested_mdta_forward.10} parent=0 // loop_pre_header
    _
  $region3: #{nested_mdta_forward.10} parent=0 // loop_header
    %s9 = sphi 0, %s13
    %p10 = scmp.ge.s32.totalorder %s9, 4
    %s16 = sphi 0, %s28
    %s17 = sphi 0, %s24
    %s18 = sphi 0, %s16
    %s19 = sphi 0, %s17
    %s20 = sphi 0, %s18
    %s21 = sphi 0, %s19
    %s29 = sphi 0, %s29
    %s31 = sphi 0, %s29
    %s32 = sphi 0, %s31
    %s46 = sphi 0, %s32
    %s54 = sphi 0, %s56
    %s57 = sphi 0, %s54
    %s58 = sphi 0, %s57
    %s74 = sphi 0, %s58
    %s82 = sphi 0, %s84
    %s85 = sphi 0, %s82
    %s86 = sphi 0, %s85
    %s102 = sphi 0, %s86
    %s108 = sphi 0, %s110
    %s111 = sphi 0, %s108
    %s112 = sphi 0, %s111
    %s128 = sphi 0, %s112
  $region4: #{nested_mdta_forward.10} parent=0 // loop_header_branch
    %12 = sbr.rel (%p10) target = $region8
  $region5: #{nested_mdta_forward.10} parent=0 // loop_body
    %s14 = ssub.s32 %s9, 1
    %s15 = ssub.s32 %s9, 2
    %s22 = sadd.s32 1, %s17
    %p23 = scmp.ge.s32.totalorder %s22, 1
    %s24 = scalar_select %p23, 0, %s22
    %s25 = sadd.s32 1, %s16
    %s26 = scalar_select %p23, %s25, %s16
    %p27 = scmp.ge.s32.totalorder %s26, 2
    %s28 = scalar_select %p27, 0, %s26
    %s30 = sadd.s32 %s29, 1
    %p33 = scmp.eq.s32.totalorder %s9, 1
    %p34 = scmp.ne.s32.totalorder %s29, %s31
    %p35 = scmp.eq.s32.totalorder %s9, 0
    %p36 = por %p34, %p35
    %p37 = scmp.ne.s32.totalorder %s29, %s31
    %p38 = scmp.eq.s32.totalorder %s14, 1
    %p39 = por %p37, %p38
    %p40 = scmp.ne.s32.totalorder %s31, %s32
    %p41 = scmp.eq.s32.totalorder %s14, 0
    %p42 = por %p40, %p41
    %p43 = scmp.ne.s32.totalorder %s31, %s32
    %p44 = scmp.eq.s32.totalorder %s15, 1
    %p45 = por %p43, %p44
    %p47 = scmp.ne.s32.totalorder %s32, %s46
    %p48 = scmp.eq.s32.totalorder %s15, 0
    %p49 = por %p47, %p48
    %s50 = ssub.s32 %s16, %s28
    %s51 = ssub.s32 %s17, %s24
    %s52 = sor.u32 %s50, %s51
    %p53 = scmp.eq.s32.totalorder %s52, 0
    %s55 = sadd.s32 %s54, 1
    %s56 = scalar_select %p53, %s54, %s55
    %p59 = pneg %p53
    %p60 = scmp.eq.s32.totalorder %s9, 1
    %p61 = por %p59, %p60
    %p62 = scmp.ne.s32.totalorder %s54, %s57
    %p63 = scmp.eq.s32.totalorder %s9, 0
    %p64 = por %p62, %p63
    %p65 = scmp.ne.s32.totalorder %s54, %s57
    %p66 = scmp.eq.s32.totalorder %s14, 1
    %p67 = por %p65, %p66
    %p68 = scmp.ne.s32.totalorder %s57, %s58
    %p69 = scmp.eq.s32.totalorder %s14, 0
    %p70 = por %p68, %p69
    %p71 = scmp.ne.s32.totalorder %s57, %s58
    %p72 = scmp.eq.s32.totalorder %s15, 1
    %p73 = por %p71, %p72
    %p75 = scmp.ne.s32.totalorder %s58, %s74
    %p76 = scmp.eq.s32.totalorder %s15, 0
    %p77 = por %p75, %p76
    %s78 = ssub.s32 %s16, %s28
    %s79 = ssub.s32 %s17, %s24
    %s80 = sor.u32 %s78, %s79
    %p81 = scmp.eq.s32.totalorder %s80, 0
    %s83 = sadd.s32 %s82, 1
    %s84 = scalar_select %p81, %s82, %s83
    %p87 = pneg %p81
    %p88 = scmp.eq.s32.totalorder %s9, 1
    %p89 = por %p87, %p88
    %p90 = scmp.ne.s32.totalorder %s82, %s85
    %p91 = scmp.eq.s32.totalorder %s9, 0
    %p92 = por %p90, %p91
    %p93 = scmp.ne.s32.totalorder %s82, %s85
    %p94 = scmp.eq.s32.totalorder %s14, 1
    %p95 = por %p93, %p94
    %p96 = scmp.ne.s32.totalorder %s85, %s86
    %p97 = scmp.eq.s32.totalorder %s14, 0
    %p98 = por %p96, %p97
    %p99 = scmp.ne.s32.totalorder %s85, %s86
    %p100 = scmp.eq.s32.totalorder %s15, 1
    %p101 = por %p99, %p100
    %p103 = scmp.ne.s32.totalorder %s86, %s102
    %p104 = scmp.eq.s32.totalorder %s15, 0
    %p105 = por %p103, %p104
    %s106 = ssub.s32 %s16, %s28
    %p107 = scmp.eq.s32.totalorder %s106, 0
    %s109 = sadd.s32 %s108, 1
    %s110 = scalar_select %p107, %s108, %s109
    %p113 = pneg %p107
    %p114 = scmp.eq.s32.totalorder %s9, 1
    %p115 = por %p113, %p114
    %p116 = scmp.ne.s32.totalorder %s108, %s111
    %p117 = scmp.eq.s32.totalorder %s9, 0
    %p118 = por %p116, %p117
    %p119 = scmp.ne.s32.totalorder %s108, %s111
    %p120 = scmp.eq.s32.totalorder %s14, 1
    %p121 = por %p119, %p120
    %p122 = scmp.ne.s32.totalorder %s111, %s112
    %p123 = scmp.eq.s32.totalorder %s14, 0
    %p124 = por %p122, %p123
    %p125 = scmp.ne.s32.totalorder %s111, %s112
    %p126 = scmp.eq.s32.totalorder %s15, 1
    %p127 = por %p125, %p126
    %p129 = scmp.ne.s32.totalorder %s112, %s128
    %p130 = scmp.eq.s32.totalorder %s15, 0
    %p131 = por %p129, %p130
    %p132 = scmp.le.s32.totalorder 1, %s9
    %p133 = scmp.lt.s32.totalorder %s9, 3
    %p134 = pnand %p132, %p133
    %p135 = pneg %p134
    // Predicated region
    $region9: #{nested_mdta_forward.10} parent=5 // pred_check
      _
    $region10: #{nested_mdta_forward.10} parent=5 // pred_check_branch
      %137 = sbr.rel (%p134) target = $region12
    $region11: #{nested_mdta_forward.10} parent=5 // pred_region
      %s138 = ssub.s32 %s9, 1
      // Predicated region
      $region13: #{nested_mdta_forward.10} parent=11 // pred_check
        %p139 = pneg %p42
      $region14: #{nested_mdta_forward.10} parent=11 // pred_check_branch
        %141 = sbr.rel (%p139) target = $region16
      $region15: #{nested_mdta_forward.10} parent=11 // pred_region
        _
      $region16: #{nested_mdta_forward.10} parent=11 // pred_fallthru
        _
    $region12: #{nested_mdta_forward.10} parent=5 // pred_fallthru
      _
    %p142 = scmp.lt.s32.totalorder %s9, 2
    // Predicated region
    $region17: #{nested_mdta_forward.10} parent=5 // pred_check
      %p143 = pneg %p142
    $region18: #{nested_mdta_forward.10} parent=5 // pred_check_branch
      %145 = sbr.rel (%p143) target = $region20
    $region19: #{nested_mdta_forward.10} parent=5 // pred_region
      // Predicated region
      $region21: #{nested_mdta_forward.10} parent=19 // pred_check
        %p146 = pneg %p64
      $region22: #{nested_mdta_forward.10} parent=19 // pred_check_branch
        %148 = sbr.rel (%p146) target = $region24
      $region23: #{nested_mdta_forward.10} parent=19 // pred_region
        %s149 = smul.u32 2, %s17
        %p150 = scmp.lt.s32.totalorder %s16, 1
        %s151 = scalar_select %p150, %s16, 1
        %p152 = scmp.lt.s32.totalorder %s149, 1
        %s153 = scalar_select %p152, %s149, 1
        %s154 = smul.addr %s151, 4
        %s155 = sadd.s32 %s153, %s154
        %s156 = smul.addr %s155, 4
        %s157 = scalar_lea.vmem %s1, %s156
        %s158 = smul.u32 2, %s17
      $region24: #{nested_mdta_forward.10} parent=19 // pred_fallthru
        _
      // Predicated region
      $region25: #{nested_mdta_forward.10} parent=19 // pred_check
        %p159 = pneg %p92
      $region26: #{nested_mdta_forward.10} parent=19 // pred_check_branch
        %161 = sbr.rel (%p159) target = $region28
      $region27: #{nested_mdta_forward.10} parent=19 // pred_region
        %s162 = smul.u32 2, %s17
        %p163 = scmp.lt.s32.totalorder %s16, 1
        %s164 = scalar_select %p163, %s16, 1
        %p165 = scmp.lt.s32.totalorder %s162, 1
        %s166 = scalar_select %p165, %s162, 1
        %s167 = smul.addr %s164, 4
        %s168 = sadd.s32 %s166, %s167
        %s169 = smul.addr %s168, 2
        %s170 = scalar_lea.vmem %s2, %s169
        %s171 = smul.u32 2, %s17
      $region28: #{nested_mdta_forward.10} parent=19 // pred_fallthru
        _
    $region20: #{nested_mdta_forward.10} parent=5 // pred_fallthru
      _
    %p172 = scmp.le.s32.totalorder 1, %s9
    %p173 = scmp.lt.s32.totalorder %s9, 3
    %p174 = pnand %p172, %p173
    %p175 = pneg %p174
    // Predicated region
    $region29: #{nested_mdta_forward.10} parent=5 // pred_check
      _
    $region30: #{nested_mdta_forward.10} parent=5 // pred_check_branch
      %177 = sbr.rel (%p174) target = $region32
    $region31: #{nested_mdta_forward.10} parent=5 // pred_region
      %s178 = ssub.s32 %s9, 1
      %p179 = pneg %p42
      %p180 = pneg %p39
      %s181 = smul.u32 2, %s19
      %p182 = scmp.lt.s32.totalorder %s18, 1
      %s183 = scalar_select %p182, %s18, 1
      %p184 = scmp.lt.s32.totalorder %s181, 1
      %s185 = scalar_select %p184, %s181, 1
      %s186 = smul.addr %s183, 4
      %s187 = sadd.s32 %s185, %s186
      %s188 = smul.addr %s187, 4
      %s189 = scalar_lea.vmem %s1, %s188
      %p190 = pneg %p70
      %p191 = pneg %p67
      %s192 = smul.u32 2, %s19
      %p193 = scmp.lt.s32.totalorder %s18, 1
      %s194 = scalar_select %p193, %s18, 1
      %p195 = scmp.lt.s32.totalorder %s192, 1
      %s196 = scalar_select %p195, %s192, 1
      %s197 = smul.addr %s194, 4
      %s198 = sadd.s32 %s196, %s197
      %s199 = smul.addr %s198, 2
      %s200 = scalar_lea.vmem %s2, %s199
      %p201 = pneg %p98
      %p202 = pneg %p95
      %p203 = pneg %p124
      %p204 = pneg %p121
      %p205 = scmp.lt.s32.totalorder %s18, 1
      %s206 = scalar_select %p205, %s18, 1
      %s207 = smul.addr %s206, 2
      %s208 = smul.addr %s207, 4
      %s209 = scalar_lea.vmem %s3, %s208
      %s210 = smul.u32 2, %s19
      %p211 = scmp.lt.s32.totalorder %s18, 1
      %s212 = scalar_select %p211, %s18, 1
      %p213 = scmp.lt.s32.totalorder %s210, 1
      %s214 = scalar_select %p213, %s210, 1
      %s215 = smul.addr %s212, 4
      %s216 = sadd.s32 %s214, %s215
      %s217 = smul.addr %s216, 4
      %s218 = scalar_lea.vmem %s1, %s217
      %s219 = smul.u32 2, %s19
      %s220 = smul.u32 2, %s19
      %p221 = scmp.lt.s32.totalorder %s18, 1
      %s222 = scalar_select %p221, %s18, 1
      %p223 = scmp.lt.s32.totalorder %s220, 1
      %s224 = scalar_select %p223, %s220, 1
      %s225 = smul.addr %s222, 4
      %s226 = sadd.s32 %s224, %s225
      %s227 = smul.addr %s226, 2
      %s228 = scalar_lea.vmem %s2, %s227
      %s229 = smul.u32 2, %s19
      %p230 = scmp.lt.s32.totalorder %s18, 1
      %s231 = scalar_select %p230, %s18, 1
      %s232 = smul.addr %s231, 2
      %s233 = smul.addr %s232, 4
      %s234 = scalar_lea.vmem %s3, %s233
      %p236 = scmp.eq.s32.totalorder %s19, 0
      // Predicated region
      $region33: #{nested_mdta_forward.10} parent=31 // pred_check
        %p237 = pneg %p236
      $region34: #{nested_mdta_forward.10} parent=31 // pred_check_branch
        %239 = sbr.rel (%p237) target = $region36
      $region35: #{nested_mdta_forward.10} parent=31 // pred_region
        %vm240 = vcmask 27648
        %241 = vst.msk [vmem:[#allocation2] sm:$0xf] %vm240, 0.0
        %242 = vst.msk [vmem:[#allocation2 + $0x4] sm:$0xf] %vm240, 0.0
        %vm243 = vcmask 3072
        %244 = vst.msk [vmem:[#allocation3] sm:$0xf] %vm243, 0.0
        %245 = vst.msk [vmem:[#allocation3 + $0x4] sm:$0xf] %vm243, 0.0
        %vm246 = vcmask 24576
        %247 = vst.msk [vmem:[#allocation4] sm:$0x1] %vm246, 0.0
        %248 = vst.msk [vmem:[#allocation4 + $0x1] sm:$0x1] %vm246, 0.0
      $region36: #{nested_mdta_forward.10} parent=31 // pred_fallthru
        _
      %v249 = vld [vmem:[%s218] sm:$0xff]
      %v250 = vld [vmem:[%s218 + $0x8] sm:$0xff]
      %v251 = vld [vmem:[%s228] sm:$0xf]
      %v252 = vld [vmem:[%s228 + $0x4] sm:$0xf]
      %v253 = vunpack.c.l.bf16 %v251
      %v254 = vunpack.c.l.bf16 %v252
      %v255 = vld [vmem:[#allocation2] sm:$0xf]
      %v256 = vld [vmem:[#allocation2 + $0x4] sm:$0xf]
      %v259 = vcombine.high %v249, %v249
      %v260 = vcombine.high %v250, %v250
      %v263 = vpack.c.bf16 %v249, %v249
      %v264 = vpack.c.bf16 %v259, %v259
      %v265 = vpack.c.bf16 %v250, %v250
      %v266 = vpack.c.bf16 %v260, %v260
      %v269 = vunpack.c.l.s4 1983009808
      %v270 = vunpack.c.0.s8 %v269
      %v271 = vlaneseq
      %v272 = vshrl.u32 %v271, 7
      %v273 = vsub.s32 %v270, %v272
      %v274 = vrot.slane %v251, %v273
      %v275 = vcombine.high %v274, %v274
      %278 = vmatprep.subr.bf16.mxu0 %v275
      %279 = vmatpush1.bf16.xpose.msra.mxu0 %v274
      %280 = vmatprep.subr.bf16.mxu0 0
      %281 = vmatpush1.bf16.xpose.msra.mxu0 0
      %282 = vmatprep.subr.bf16.mxu0 0
      %283 = vmatpush1.bf16.xpose.msra.mxu0 0
      %284 = vmatprep.subr.bf16.mxu0 0
      %285 = vmatpush1.bf16.xpose.msra.mxu0 0
      %286 = vmatprep.subr.bf16.mxu0 0
      %287 = vmatpush1.bf16.xpose.msra.mxu0 0
      %288 = vmatprep.subr.bf16.mxu0 0
      %289 = vmatpush1.bf16.xpose.msra.mxu0 0
      %290 = vmatprep.subr.bf16.mxu0 0
      %291 = vmatpush1.bf16.xpose.msra.mxu0 0
      %292 = vmatprep.subr.bf16.mxu0 0
      %293 = vmatpush1.bf16.xpose.msra.mxu0 0
      %294 = vmatprep.subr.bf16.mxu0 0
      %295 = vmatpush1.bf16.xpose.msra.mxu0 0
      %296 = vmatprep.subr.bf16.mxu0 0
      %297 = vmatpush1.bf16.xpose.msra.mxu0 0
      %298 = vmatprep.subr.bf16.mxu0 0
      %299 = vmatpush1.bf16.xpose.msra.mxu0 0
      %300 = vmatprep.subr.bf16.mxu0 0
      %301 = vmatpush1.bf16.xpose.msra.mxu0 0
      %302 = vmatprep.subr.bf16.mxu0 0
      %303 = vmatpush1.bf16.xpose.msra.mxu0 0
      %304 = vmatprep.subr.bf16.mxu0 0
      %305 = vmatpush1.bf16.xpose.msra.mxu0 0
      %306 = vmatprep.subr.bf16.mxu0 0
      %307 = vmatpush1.bf16.xpose.msra.mxu0 0
      %308 = vmatprep.subr.bf16.mxu0 0
      %309 = vmatpush1.bf16.xpose.msra.mxu0 0
      %310 = vmatprep.mubr.bf16.mxu0 %v264
      %311 = vmatmul.mubr.bf16.gmra.mrb[0].mxu0 %v263
      %v312 = vpop.f32.mrb[0].mxu0
      %v313 = vadd.f32 0.0, %v312
      %v314 = vpop.f32.mrb[0].mxu0
      %v315 = vpop.f32.mrb[0].mxu0
      %v316 = vpop.f32.mrb[0].mxu0
      %317 = vdwg.mxu0
      %v320 = vunpack.c.l.s4 1983009808
      %v321 = vunpack.c.0.s8 %v320
      %v322 = vlaneseq
      %v323 = vshrl.u32 %v322, 7
      %v324 = vsub.s32 %v321, %v323
      %v325 = vrot.slane %v252, %v324
      %v326 = vcombine.high %v325, %v325
      %329 = vmatprep.subr.bf16.mxu0 %v326
      %330 = vmatpush1.bf16.xpose.msra.mxu0 %v325
      %331 = vmatprep.subr.bf16.mxu0 0
      %332 = vmatpush1.bf16.xpose.msra.mxu0 0
      %333 = vmatprep.subr.bf16.mxu0 0
      %334 = vmatpush1.bf16.xpose.msra.mxu0 0
      %335 = vmatprep.subr.bf16.mxu0 0
      %336 = vmatpush1.bf16.xpose.msra.mxu0 0
      %337 = vmatprep.subr.bf16.mxu0 0
      %338 = vmatpush1.bf16.xpose.msra.mxu0 0
      %339 = vmatprep.subr.bf16.mxu0 0
      %340 = vmatpush1.bf16.xpose.msra.mxu0 0
      %341 = vmatprep.subr.bf16.mxu0 0
      %342 = vmatpush1.bf16.xpose.msra.mxu0 0
      %343 = vmatprep.subr.bf16.mxu0 0
      %344 = vmatpush1.bf16.xpose.msra.mxu0 0
      %345 = vmatprep.subr.bf16.mxu0 0
      %346 = vmatpush1.bf16.xpose.msra.mxu0 0
      %347 = vmatprep.subr.bf16.mxu0 0
      %348 = vmatpush1.bf16.xpose.msra.mxu0 0
      %349 = vmatprep.subr.bf16.mxu0 0
      %350 = vmatpush1.bf16.xpose.msra.mxu0 0
      %351 = vmatprep.subr.bf16.mxu0 0
      %352 = vmatpush1.bf16.xpose.msra.mxu0 0
      %353 = vmatprep.subr.bf16.mxu0 0
      %354 = vmatpush1.bf16.xpose.msra.mxu0 0
      %355 = vmatprep.subr.bf16.mxu0 0
      %356 = vmatpush1.bf16.xpose.msra.mxu0 0
      %357 = vmatprep.subr.bf16.mxu0 0
      %358 = vmatpush1.bf16.xpose.msra.mxu0 0
      %359 = vmatprep.subr.bf16.mxu0 0
      %360 = vmatpush1.bf16.xpose.msra.mxu0 0
      %361 = vmatprep.mubr.bf16.mxu0 %v266
      %362 = vmatmul.mubr.bf16.gmra.mrb[0].mxu0 %v265
      %v363 = vpop.f32.mrb[0].mxu0
      %v364 = vadd.f32 0.0, %v363
      %v365 = vpop.f32.mrb[0].mxu0
      %v366 = vpop.f32.mrb[0].mxu0
      %v367 = vpop.f32.mrb[0].mxu0
      %368 = vdwg.mxu0
      %v369 = vadd.f32 %v255, %v313
      %v370 = vadd.f32 %v256, %v364
      %vm371 = vcmask 27648
      %372 = vst.msk [vmem:[#allocation2] sm:$0xf] %vm371, %v369
      %373 = vst.msk [vmem:[#allocation2 + $0x4] sm:$0xf] %vm371, %v370
      %v374 = vld [vmem:[#allocation3] sm:$0xf]
      %v375 = vld [vmem:[#allocation3 + $0x4] sm:$0xf]
      %v376 = vmul.f32 %v249, %v249
      %v377 = vmul.f32 %v250, %v250
      %v380 = vcombine.high %v376, %v376
      %v381 = vcombine.high %v377, %v377
      %vm384 = vcmask 1043456
      %v385 = vsel %vm384, %v376, 0.0
      %v386 = vsel %vm384, %v380, 0.0
      %v387 = vadd.f32 %v385, %v386
      %388 = vadd.xlane.f32.xlu0 %v387
      %v389 = vpop.xlane.xlu0 %388
      %v390 = vsel %vm384, %v377, 0.0
      %v391 = vsel %vm384, %v381, 0.0
      %v392 = vadd.f32 %v390, %v391
      %393 = vadd.xlane.f32.xlu0 %v392
      %v394 = vpop.xlane.xlu0 %393
      %v395 = vadd.f32 %v374, %v389
      %v396 = vadd.f32 %v375, %v394
      %vm397 = vcmask 3072
      %398 = vst.msk [vmem:[#allocation3] sm:$0xf] %vm397, %v395
      %399 = vst.msk [vmem:[#allocation3 + $0x4] sm:$0xf] %vm397, %v396
      %v400 = vld [vmem:[#allocation4] sm:$0x1]
      %v401 = vld [vmem:[#allocation4 + $0x1] sm:$0x1]
      %v402 = vmul.f32 %v253, %v253
      %v403 = vmul.f32 %v254, %v254
      %v405 = vcombine.high %v402, %v402
      %407 = vmatprep.subr.mxu0 %v405
      %408 = vmatpush1.xpose.msra.mxu0 %v402
      %409 = vmatprep.subr.mxu0 0.0
      %410 = vmatpush1.xpose.msra.mxu0 0.0
      %411 = vmatprep.subr.mxu0 0.0
      %412 = vmatpush1.xpose.msra.mxu0 0.0
      %413 = vmatprep.subr.mxu0 0.0
      %414 = vmatpush1.xpose.msra.mxu0 0.0
      %415 = vmatprep.subr.mxu0 0.0
      %416 = vmatpush1.xpose.msra.mxu0 0.0
      %417 = vmatprep.subr.mxu0 0.0
      %418 = vmatpush1.xpose.msra.mxu0 0.0
      %419 = vmatprep.subr.mxu0 0.0
      %420 = vmatpush1.xpose.msra.mxu0 0.0
      %421 = vmatprep.subr.mxu0 0.0
      %422 = vmatpush1.xpose.msra.mxu0 0.0
      %423 = vmatprep.subr.mxu0 0.0
      %424 = vmatpush1.xpose.msra.mxu0 0.0
      %425 = vmatprep.subr.mxu0 0.0
      %426 = vmatpush1.xpose.msra.mxu0 0.0
      %427 = vmatprep.subr.mxu0 0.0
      %428 = vmatpush1.xpose.msra.mxu0 0.0
      %429 = vmatprep.subr.mxu0 0.0
      %430 = vmatpush1.xpose.msra.mxu0 0.0
      %431 = vmatprep.subr.mxu0 0.0
      %432 = vmatpush1.xpose.msra.mxu0 0.0
      %433 = vmatprep.subr.mxu0 0.0
      %434 = vmatpush1.xpose.msra.mxu0 0.0
      %435 = vmatprep.subr.mxu0 0.0
      %436 = vmatpush1.xpose.msra.mxu0 0.0
      %437 = vmatprep.subr.mxu0 0.0
      %438 = vmatpush1.xpose.msra.mxu0 0.0
      %439 = vmatprep.subr.mxu0 0.0
      %440 = vmatpush1.xpose.msra.mxu0 0.0
      %441 = vmatprep.subr.mxu0 0.0
      %442 = vmatpush1.xpose.msra.mxu0 0.0
      %443 = vmatprep.subr.mxu0 0.0
      %444 = vmatpush1.xpose.msra.mxu0 0.0
      %445 = vmatprep.subr.mxu0 0.0
      %446 = vmatpush1.xpose.msra.mxu0 0.0
      %447 = vmatprep.subr.mxu0 0.0
      %448 = vmatpush1.xpose.msra.mxu0 0.0
      %449 = vmatprep.subr.mxu0 0.0
      %450 = vmatpush1.xpose.msra.mxu0 0.0
      %451 = vmatprep.subr.mxu0 0.0
      %452 = vmatpush1.xpose.msra.mxu0 0.0
      %453 = vmatprep.subr.mxu0 0.0
      %454 = vmatpush1.xpose.msra.mxu0 0.0
      %455 = vmatprep.subr.mxu0 0.0
      %456 = vmatpush1.xpose.msra.mxu0 0.0
      %457 = vmatprep.subr.mxu0 0.0
      %458 = vmatpush1.xpose.msra.mxu0 0.0
      %459 = vmatprep.subr.mxu0 0.0
      %460 = vmatpush1.xpose.msra.mxu0 0.0
      %461 = vmatprep.subr.mxu0 0.0
      %462 = vmatpush1.xpose.msra.mxu0 0.0
      %463 = vmatprep.subr.mxu0 0.0
      %464 = vmatpush1.xpose.msra.mxu0 0.0
      %465 = vmatprep.subr.mxu0 0.0
      %466 = vmatpush1.xpose.msra.mxu0 0.0
      %467 = vmatprep.subr.mxu0 0.0
      %468 = vmatpush1.xpose.msra.mxu0 0.0
      %469 = vmatprep.subr.mxu0 0.0
      %470 = vmatpush1.xpose.msra.mxu0 0.0
      %471 = vmatprep.mubr.f32.mxu0 1.0
      %472 = vmatmul.mubr.f32.gmra.mrb[0].mxu0 1.0
      %v473 = vpop.f32.mrb[0].mxu0
      %v474 = vadd.f32 0.0, %v473
      %v475 = vpop.f32.mrb[0].mxu0
      %476 = vdwg.mxu0
      %v478 = vcombine.high %v403, %v403
      %480 = vmatprep.subr.mxu0 %v478
      %481 = vmatpush1.xpose.msra.mxu0 %v403
      %482 = vmatprep.subr.mxu0 0.0
      %483 = vmatpush1.xpose.msra.mxu0 0.0
      %484 = vmatprep.subr.mxu0 0.0
      %485 = vmatpush1.xpose.msra.mxu0 0.0
      %486 = vmatprep.subr.mxu0 0.0
      %487 = vmatpush1.xpose.msra.mxu0 0.0
      %488 = vmatprep.subr.mxu0 0.0
      %489 = vmatpush1.xpose.msra.mxu0 0.0
      %490 = vmatprep.subr.mxu0 0.0
      %491 = vmatpush1.xpose.msra.mxu0 0.0
      %492 = vmatprep.subr.mxu0 0.0
      %493 = vmatpush1.xpose.msra.mxu0 0.0
      %494 = vmatprep.subr.mxu0 0.0
      %495 = vmatpush1.xpose.msra.mxu0 0.0
      %496 = vmatprep.subr.mxu0 0.0
      %497 = vmatpush1.xpose.msra.mxu0 0.0
      %498 = vmatprep.subr.mxu0 0.0
      %499 = vmatpush1.xpose.msra.mxu0 0.0
      %500 = vmatprep.subr.mxu0 0.0
      %501 = vmatpush1.xpose.msra.mxu0 0.0
      %502 = vmatprep.subr.mxu0 0.0
      %503 = vmatpush1.xpose.msra.mxu0 0.0
      %504 = vmatprep.subr.mxu0 0.0
      %505 = vmatpush1.xpose.msra.mxu0 0.0
      %506 = vmatprep.subr.mxu0 0.0
      %507 = vmatpush1.xpose.msra.mxu0 0.0
      %508 = vmatprep.subr.mxu0 0.0
      %509 = vmatpush1.xpose.msra.mxu0 0.0
      %510 = vmatprep.subr.mxu0 0.0
      %511 = vmatpush1.xpose.msra.mxu0 0.0
      %512 = vmatprep.subr.mxu0 0.0
      %513 = vmatpush1.xpose.msra.mxu0 0.0
      %514 = vmatprep.subr.mxu0 0.0
      %515 = vmatpush1.xpose.msra.mxu0 0.0
      %516 = vmatprep.subr.mxu0 0.0
      %517 = vmatpush1.xpose.msra.mxu0 0.0
      %518 = vmatprep.subr.mxu0 0.0
      %519 = vmatpush1.xpose.msra.mxu0 0.0
      %520 = vmatprep.subr.mxu0 0.0
      %521 = vmatpush1.xpose.msra.mxu0 0.0
      %522 = vmatprep.subr.mxu0 0.0
      %523 = vmatpush1.xpose.msra.mxu0 0.0
      %524 = vmatprep.subr.mxu0 0.0
      %525 = vmatpush1.xpose.msra.mxu0 0.0
      %526 = vmatprep.subr.mxu0 0.0
      %527 = vmatpush1.xpose.msra.mxu0 0.0
      %528 = vmatprep.subr.mxu0 0.0
      %529 = vmatpush1.xpose.msra.mxu0 0.0
      %530 = vmatprep.subr.mxu0 0.0
      %531 = vmatpush1.xpose.msra.mxu0 0.0
      %532 = vmatprep.subr.mxu0 0.0
      %533 = vmatpush1.xpose.msra.mxu0 0.0
      %534 = vmatprep.subr.mxu0 0.0
      %535 = vmatpush1.xpose.msra.mxu0 0.0
      %536 = vmatprep.subr.mxu0 0.0
      %537 = vmatpush1.xpose.msra.mxu0 0.0
      %538 = vmatprep.subr.mxu0 0.0
      %539 = vmatpush1.xpose.msra.mxu0 0.0
      %540 = vmatprep.subr.mxu0 0.0
      %541 = vmatpush1.xpose.msra.mxu0 0.0
      %542 = vmatprep.subr.mxu0 0.0
      %543 = vmatpush1.xpose.msra.mxu0 0.0
      %544 = vmatprep.mubr.f32.mxu0 1.0
      %545 = vmatmul.mubr.f32.gmra.mrb[0].mxu0 1.0
      %v546 = vpop.f32.mrb[0].mxu0
      %v547 = vadd.f32 0.0, %v546
      %v548 = vpop.f32.mrb[0].mxu0
      %549 = vdwg.mxu0
      %v550 = vadd.f32 %v400, %v474
      %v551 = vadd.f32 %v401, %v547
      %vm552 = vcmask 24576
      %553 = vst.msk [vmem:[#allocation4] sm:$0x1] %vm552, %v550
      %554 = vst.msk [vmem:[#allocation4 + $0x1] sm:$0x1] %vm552, %v551
      // Predicated region
      $region37: #{nested_mdta_forward.10} parent=31 // pred_check
        %p555 = pneg %p236
      $region38: #{nested_mdta_forward.10} parent=31 // pred_check_branch
        %557 = sbr.rel (%p555) target = $region40
      $region39: #{nested_mdta_forward.10} parent=31 // pred_region
        %v558 = vld [vmem:[#allocation3] sm:$0xf]
        %v559 = vld [vmem:[#allocation3 + $0x4] sm:$0xf]
        %v560 = vmax.f32 %v558, 1e-24
        %v561 = vmax.f32 %v559, 1e-24
        %v562 = vrsqrt.pop %v560
        %v563 = vrsqrt.pop %v561
        %v564 = vld [vmem:[#allocation4] sm:$0x1]
        %v565 = vld [vmem:[#allocation4 + $0x1] sm:$0x1]
        %v566 = vmax.f32 %v564, 1e-24
        %v567 = vmax.f32 %v565, 1e-24
        %v568 = vrsqrt.pop %v566
        %v569 = vrsqrt.pop %v567
        %v570 = vld [vmem:[#allocation2] sm:$0xf]
        %v571 = vld [vmem:[#allocation2 + $0x4] sm:$0xf]
        %573 = vset.pattern.permute.xlu0 0
        %574 = vperm.xlu0 %573, %v562
        %v575 = vpop.permute.xlu0 %574
        %578 = vset.pattern.permute.xlu0 0
        %579 = vperm.xlu0 %578, %v563
        %v580 = vpop.permute.xlu0 %579
        %v582 = vmul.f32 %v570, %v575
        %v583 = vmul.f32 %v571, %v580
        %v586 = vlaneseq
        %v587 = vshrl.u32 %v586, 7
        %v588 = vsub.s32 0, %v587
        %v589 = vrot.slane %v568, %v588
        %v590 = vlaneseq
        %v591 = vshrl.u32 %v590, 7
        %v592 = vsub.s32 0, %v591
        %v593 = vrot.slane %v569, %v592
        %v596 = vmul.f32 %v582, %v589
        %v597 = vmul.f32 %v583, %v593
        %v598 = vld [vmem:[%s0] sm:$0x1]
        %v599 = vld [vmem:[%s0 + $0x1] sm:$0x1]
        %v602 = vlaneseq
        %v603 = vshrl.u32 %v602, 7
        %v604 = vsub.s32 0, %v603
        %v605 = vrot.slane %v598, %v604
        %v606 = vlaneseq
        %v607 = vshrl.u32 %v606, 7
        %v608 = vsub.s32 0, %v607
        %v609 = vrot.slane %v599, %v608
        %610 = vset.pattern.permute.xlu0 0
        %611 = vperm.xlu0 %610, %v605
        %v612 = vpop.permute.xlu0 %611
        %614 = vset.pattern.permute.xlu0 0
        %615 = vperm.xlu0 %614, %v609
        %v616 = vpop.permute.xlu0 %615
        %v618 = vmul.f32 %v596, %v612
        %v619 = vmul.f32 %v597, %v616
        %v620 = vsel %vm371, %v618, -inf
        %621 = vmax.xlane.f32.xlu0 %v620
        %v622 = vpop.xlane.xlu0 %621
        %v623 = vsel %vm371, %v619, -inf
        %624 = vmax.xlane.f32.xlu0 %v623
        %v625 = vpop.xlane.xlu0 %624
        %v626 = vsub.f32 %v618, %v622
        %v627 = vsub.f32 %v619, %v625
        %v628 = vmul.f32 %v626, 1.442695
        %v629 = vpow.pop %v628
        %v630 = vmul.f32 %v627, 1.442695
        %v631 = vpow.pop %v630
        %v632 = vsel %vm371, %v629, 0.0
        %633 = vadd.xlane.f32.xlu0 %v632
        %v634 = vpop.xlane.xlu0 %633
        %v635 = vsel %vm371, %v631, 0.0
        %636 = vadd.xlane.f32.xlu0 %v635
        %v637 = vpop.xlane.xlu0 %636
        %v638 = vrcp.pop %v634
        %v639 = vrcp.pop %v637
        %v640 = vmul.f32 %v629, %v638
        %v641 = vmul.f32 %v631, %v639
        %642 = vst.msk [vmem:[%s234] sm:$0xf] %vm371, %v640
        %643 = vst.msk [vmem:[%s234 + $0x4] sm:$0xf] %vm371, %v641
      $region40: #{nested_mdta_forward.10} parent=31 // pred_fallthru
        _
      %p644 = scmp.lt.s32.totalorder %s18, 1
      %s645 = scalar_select %p644, %s18, 1
      %s646 = smul.addr %s645, 2
      %s647 = smul.addr %s646, 4
      %s648 = scalar_lea.vmem %s3, %s647
      // Predicated region
      $region41: #{nested_mdta_forward.10} parent=31 // pred_check
        %p649 = pneg %p121
      $region42: #{nested_mdta_forward.10} parent=31 // pred_check_branch
        %651 = sbr.rel (%p649) target = $region44
      $region43: #{nested_mdta_forward.10} parent=31 // pred_region
        _
      $region44: #{nested_mdta_forward.10} parent=31 // pred_fallthru
        _
    $region32: #{nested_mdta_forward.10} parent=5 // pred_fallthru
      _
    %p652 = scmp.le.s32.totalorder 2, %s9
    // Predicated region
    $region45: #{nested_mdta_forward.10} parent=5 // pred_check
      %p653 = pneg %p652
    $region46: #{nested_mdta_forward.10} parent=5 // pred_check_branch
      %655 = sbr.rel (%p653) target = $region48
    $region47: #{nested_mdta_forward.10} parent=5 // pred_region
      %s656 = ssub.s32 %s9, 2
      // Predicated region
      $region49: #{nested_mdta_forward.10} parent=47 // pred_check
        %p657 = pneg %p127
      $region50: #{nested_mdta_forward.10} parent=47 // pred_check_branch
        %659 = sbr.rel (%p657) target = $region52
      $region51: #{nested_mdta_forward.10} parent=47 // pred_region
        %p660 = scmp.lt.s32.totalorder %s20, 1
        %s661 = scalar_select %p660, %s20, 1
        %s662 = smul.addr %s661, 2
        %s663 = smul.addr %s662, 4
        %s664 = scalar_lea.vmem %s3, %s663
      $region52: #{nested_mdta_forward.10} parent=47 // pred_fallthru
        _
    $region48: #{nested_mdta_forward.10} parent=5 // pred_fallthru
      _
  $region6: #{nested_mdta_forward.10} parent=0 // loop_footer
    %s13 = sadd.s32 1, %s9
  $region7: #{nested_mdta_forward.10} parent=0 // loop_footer_branch
    %8 = sbr.rel target = $region3
  $region8: #{nested_mdta_forward.10} parent=0 // loop_exit
    _

// kernel: nested_mdta_forward.12
$region0: #{nested_mdta_forward.12}
  #allocation0 [shape = 'u32[]', space=smem, size = 0x4, offset = 0x4, fixed_abs, tag = 'smem constant byte address 0x4 - core index']
  #allocation1 [shape = 'u32[144,128]{1,0:T(1,128)}', space=vmem, size = 0x12000, scoped, tag = 'internal scratch']
  %s0 = inlined_call_operand.vmem [shape: bf16[8,8], index: 0, kind: input, shape index: {}]
  %s1 = inlined_call_operand.vmem [shape: bf16[2,8,256], index: 1, kind: input, shape index: {}]
  %s2 = inlined_call_operand.vmem [shape: f32[2,8,256], index: 2, kind: output, shape index: {}]
  %s3 = sld [smem:[#allocation0]]
  $region41: #{nested_mdta_forward.12} parent=0
    _
  %s5 = ssub.s32 1, %s3
  %s6 = scalar_select 0, %s5, %s3
  loop: start=0, step=1, limit=4
  $region2: #{nested_mdta_forward.12} parent=0 // loop_pre_header
    _
  $region3: #{nested_mdta_forward.12} parent=0 // loop_header
    %s8 = sphi 0, %s12
    %p9 = scmp.ge.s32.totalorder %s8, 4
    %s15 = sphi 0, %s27
    %s16 = sphi 0, %s23
    %s17 = sphi 0, %s15
    %s18 = sphi 0, %s16
    %s19 = sphi 0, %s17
    %s20 = sphi 0, %s18
    %s28 = sphi 0, %s28
    %s30 = sphi 0, %s28
    %s31 = sphi 0, %s30
    %s45 = sphi 0, %s31
    %s53 = sphi 0, %s55
    %s56 = sphi 0, %s53
    %s57 = sphi 0, %s56
    %s73 = sphi 0, %s57
    %s81 = sphi 0, %s83
    %s84 = sphi 0, %s81
    %s85 = sphi 0, %s84
    %s101 = sphi 0, %s85
  $region4: #{nested_mdta_forward.12} parent=0 // loop_header_branch
    %11 = sbr.rel (%p9) target = $region8
  $region5: #{nested_mdta_forward.12} parent=0 // loop_body
    %s13 = ssub.s32 %s8, 1
    %s14 = ssub.s32 %s8, 2
    %s21 = sadd.s32 1, %s16
    %p22 = scmp.ge.s32.totalorder %s21, 1
    %s23 = scalar_select %p22, 0, %s21
    %s24 = sadd.s32 1, %s15
    %s25 = scalar_select %p22, %s24, %s15
    %p26 = scmp.ge.s32.totalorder %s25, 2
    %s27 = scalar_select %p26, 0, %s25
    %s29 = sadd.s32 %s28, 1
    %p32 = scmp.eq.s32.totalorder %s8, 1
    %p33 = scmp.ne.s32.totalorder %s28, %s30
    %p34 = scmp.eq.s32.totalorder %s8, 0
    %p35 = por %p33, %p34
    %p36 = scmp.ne.s32.totalorder %s28, %s30
    %p37 = scmp.eq.s32.totalorder %s13, 1
    %p38 = por %p36, %p37
    %p39 = scmp.ne.s32.totalorder %s30, %s31
    %p40 = scmp.eq.s32.totalorder %s13, 0
    %p41 = por %p39, %p40
    %p42 = scmp.ne.s32.totalorder %s30, %s31
    %p43 = scmp.eq.s32.totalorder %s14, 1
    %p44 = por %p42, %p43
    %p46 = scmp.ne.s32.totalorder %s31, %s45
    %p47 = scmp.eq.s32.totalorder %s14, 0
    %p48 = por %p46, %p47
    %s49 = ssub.s32 %s15, %s27
    %s50 = ssub.s32 %s16, %s23
    %s51 = sor.u32 %s49, %s50
    %p52 = scmp.eq.s32.totalorder %s51, 0
    %s54 = sadd.s32 %s53, 1
    %s55 = scalar_select %p52, %s53, %s54
    %p58 = pneg %p52
    %p59 = scmp.eq.s32.totalorder %s8, 1
    %p60 = por %p58, %p59
    %p61 = scmp.ne.s32.totalorder %s53, %s56
    %p62 = scmp.eq.s32.totalorder %s8, 0
    %p63 = por %p61, %p62
    %p64 = scmp.ne.s32.totalorder %s53, %s56
    %p65 = scmp.eq.s32.totalorder %s13, 1
    %p66 = por %p64, %p65
    %p67 = scmp.ne.s32.totalorder %s56, %s57
    %p68 = scmp.eq.s32.totalorder %s13, 0
    %p69 = por %p67, %p68
    %p70 = scmp.ne.s32.totalorder %s56, %s57
    %p71 = scmp.eq.s32.totalorder %s14, 1
    %p72 = por %p70, %p71
    %p74 = scmp.ne.s32.totalorder %s57, %s73
    %p75 = scmp.eq.s32.totalorder %s14, 0
    %p76 = por %p74, %p75
    %s77 = ssub.s32 %s15, %s27
    %s78 = ssub.s32 %s16, %s23
    %s79 = sor.u32 %s77, %s78
    %p80 = scmp.eq.s32.totalorder %s79, 0
    %s82 = sadd.s32 %s81, 1
    %s83 = scalar_select %p80, %s81, %s82
    %p86 = pneg %p80
    %p87 = scmp.eq.s32.totalorder %s8, 1
    %p88 = por %p86, %p87
    %p89 = scmp.ne.s32.totalorder %s81, %s84
    %p90 = scmp.eq.s32.totalorder %s8, 0
    %p91 = por %p89, %p90
    %p92 = scmp.ne.s32.totalorder %s81, %s84
    %p93 = scmp.eq.s32.totalorder %s13, 1
    %p94 = por %p92, %p93
    %p95 = scmp.ne.s32.totalorder %s84, %s85
    %p96 = scmp.eq.s32.totalorder %s13, 0
    %p97 = por %p95, %p96
    %p98 = scmp.ne.s32.totalorder %s84, %s85
    %p99 = scmp.eq.s32.totalorder %s14, 1
    %p100 = por %p98, %p99
    %p102 = scmp.ne.s32.totalorder %s85, %s101
    %p103 = scmp.eq.s32.totalorder %s14, 0
    %p104 = por %p102, %p103
    %p105 = scmp.le.s32.totalorder 1, %s8
    %p106 = scmp.lt.s32.totalorder %s8, 3
    %p107 = pnand %p105, %p106
    %p108 = pneg %p107
    // Predicated region
    $region9: #{nested_mdta_forward.12} parent=5 // pred_check
      _
    $region10: #{nested_mdta_forward.12} parent=5 // pred_check_branch
      %110 = sbr.rel (%p107) target = $region12
    $region11: #{nested_mdta_forward.12} parent=5 // pred_region
      %s111 = ssub.s32 %s8, 1
      // Predicated region
      $region13: #{nested_mdta_forward.12} parent=11 // pred_check
        %p112 = pneg %p41
      $region14: #{nested_mdta_forward.12} parent=11 // pred_check_branch
        %114 = sbr.rel (%p112) target = $region16
      $region15: #{nested_mdta_forward.12} parent=11 // pred_region
        _
      $region16: #{nested_mdta_forward.12} parent=11 // pred_fallthru
        _
    $region12: #{nested_mdta_forward.12} parent=5 // pred_fallthru
      _
    %p115 = scmp.lt.s32.totalorder %s8, 2
    // Predicated region
    $region17: #{nested_mdta_forward.12} parent=5 // pred_check
      %p116 = pneg %p115
    $region18: #{nested_mdta_forward.12} parent=5 // pred_check_branch
      %118 = sbr.rel (%p116) target = $region20
    $region19: #{nested_mdta_forward.12} parent=5 // pred_region
      // Predicated region
      $region21: #{nested_mdta_forward.12} parent=19 // pred_check
        %p119 = pneg %p63
      $region22: #{nested_mdta_forward.12} parent=19 // pred_check_branch
        %121 = sbr.rel (%p119) target = $region24
      $region23: #{nested_mdta_forward.12} parent=19 // pred_region
        %s122 = smul.u32 2, %s16
        %p123 = scmp.lt.s32.totalorder %s15, 1
        %s124 = scalar_select %p123, %s15, 1
        %p125 = scmp.lt.s32.totalorder %s122, 1
        %s126 = scalar_select %p125, %s122, 1
        %s127 = smul.addr %s124, 2
        %s128 = sadd.s32 %s126, %s127
        %s129 = smul.addr %s128, 4
        %s130 = scalar_lea.vmem %s1, %s129
        %s131 = smul.u32 2, %s16
      $region24: #{nested_mdta_forward.12} parent=19 // pred_fallthru
        _
    $region20: #{nested_mdta_forward.12} parent=5 // pred_fallthru
      _
    %p132 = scmp.le.s32.totalorder 1, %s8
    %p133 = scmp.lt.s32.totalorder %s8, 3
    %p134 = pnand %p132, %p133
    %p135 = pneg %p134
    // Predicated region
    $region25: #{nested_mdta_forward.12} parent=5 // pred_check
      _
    $region26: #{nested_mdta_forward.12} parent=5 // pred_check_branch
      %137 = sbr.rel (%p134) target = $region28
    $region27: #{nested_mdta_forward.12} parent=5 // pred_region
      %s138 = ssub.s32 %s8, 1
      %p139 = pneg %p41
      %p140 = pneg %p38
      %s141 = smul.u32 2, %s18
      %p142 = scmp.lt.s32.totalorder %s17, 1
      %s143 = scalar_select %p142, %s17, 1
      %p144 = scmp.lt.s32.totalorder %s141, 1
      %s145 = scalar_select %p144, %s141, 1
      %s146 = smul.addr %s143, 2
      %s147 = sadd.s32 %s145, %s146
      %s148 = smul.addr %s147, 4
      %s149 = scalar_lea.vmem %s1, %s148
      %p150 = pneg %p69
      %p151 = pneg %p66
      %p152 = pneg %p97
      %p153 = pneg %p94
      %s154 = smul.u32 2, %s18
      %p155 = scmp.lt.s32.totalorder %s17, 1
      %s156 = scalar_select %p155, %s17, 1
      %p157 = scmp.lt.s32.totalorder %s154, 1
      %s158 = scalar_select %p157, %s154, 1
      %s159 = smul.addr %s156, 2
      %s160 = sadd.s32 %s158, %s159
      %s161 = smul.addr %s160, 8
      %s162 = scalar_lea.vmem %s2, %s161
      %s163 = smul.u32 2, %s18
      %p164 = scmp.lt.s32.totalorder %s17, 1
      %s165 = scalar_select %p164, %s17, 1
      %p166 = scmp.lt.s32.totalorder %s163, 1
      %s167 = scalar_select %p166, %s163, 1
      %s168 = smul.addr %s165, 2
      %s169 = sadd.s32 %s167, %s168
      %s170 = smul.addr %s169, 4
      %s171 = scalar_lea.vmem %s1, %s170
      %s172 = smul.u32 2, %s18
      %s173 = smul.u32 2, %s18
      %p174 = scmp.lt.s32.totalorder %s17, 1
      %s175 = scalar_select %p174, %s17, 1
      %p176 = scmp.lt.s32.totalorder %s173, 1
      %s177 = scalar_select %p176, %s173, 1
      %s178 = smul.addr %s175, 2
      %s179 = sadd.s32 %s177, %s178
      %s180 = smul.addr %s179, 8
      %s181 = scalar_lea.vmem %s2, %s180
      %s182 = smul.u32 2, %s18
      %v184 = vld [vmem:[%s0] sm:$0xf]
      %v185 = vld [vmem:[%s171] sm:$0xff]
      %v187 = vunpack.c.l.b16 %v185
      %v188 = vunpack.c.h.b16 %v185
      %v189 = vpack.c.b16 %v187, %v187
      %v190 = vpack.c.b16 %v188, %v188
      %vm191 = vcmask 64512
      %v193 = vsel %vm191, %v184, 0
      %vm195 = vcmask 1043456
      %v197 = vsel %vm195, %v189, 0
      %v200 = vsel %vm195, %v190, 0
      %202 = vmatprep.subr.bf16.mxu0 %v200
      %203 = vmatpush1.bf16.msra.mxu0 %v197
      %204 = vmatprep.subr.bf16.mxu0 0
      %205 = vmatpush1.bf16.msra.mxu0 0
      %206 = vmatprep.subr.bf16.mxu0 0
      %207 = vmatpush1.bf16.msra.mxu0 0
      %208 = vmatprep.subr.bf16.mxu0 0
      %209 = vmatpush1.bf16.msra.mxu0 0
      %210 = vmatprep.subr.bf16.mxu0 0
      %211 = vmatpush1.bf16.msra.mxu0 0
      %212 = vmatprep.subr.bf16.mxu0 0
      %213 = vmatpush1.bf16.msra.mxu0 0
      %214 = vmatprep.subr.bf16.mxu0 0
      %215 = vmatpush1.bf16.msra.mxu0 0
      %216 = vmatprep.subr.bf16.mxu0 0
      %217 = vmatpush1.bf16.msra.mxu0 0
      %218 = vmatprep.subr.bf16.mxu0 0
      %219 = vmatpush1.bf16.msra.mxu0 0
      %220 = vmatprep.subr.bf16.mxu0 0
      %221 = vmatpush1.bf16.msra.mxu0 0
      %222 = vmatprep.subr.bf16.mxu0 0
      %223 = vmatpush1.bf16.msra.mxu0 0
      %224 = vmatprep.subr.bf16.mxu0 0
      %225 = vmatpush1.bf16.msra.mxu0 0
      %226 = vmatprep.subr.bf16.mxu0 0
      %227 = vmatpush1.bf16.msra.mxu0 0
      %228 = vmatprep.subr.bf16.mxu0 0
      %229 = vmatpush1.bf16.msra.mxu0 0
      %230 = vmatprep.subr.bf16.mxu0 0
      %231 = vmatpush1.bf16.msra.mxu0 0
      %232 = vmatprep.subr.bf16.mxu0 0
      %233 = vmatpush1.bf16.msra.mxu0 0
      %234 = vmatprep.mubr.bf16.mxu0 0
      %235 = vmatmul.mubr.bf16.gmra.mrb[0].mxu0 %v193
      %v236 = vpop.f32.mrb[0].mxu0
      %v237 = vadd.f32 0.0, %v236
      %v238 = vpop.f32.mrb[0].mxu0
      %v239 = vadd.f32 0.0, %v238
      %v240 = vpop.f32.mrb[0].mxu0
      %v241 = vpop.f32.mrb[0].mxu0
      %242 = vdwg.mxu0
      %243 = vst [vmem:[%s181] sm:$0xff] %v237
      %244 = vst [vmem:[%s181 + $0x8] sm:$0xff] %v239
      %s245 = smul.u32 2, %s18
      %p246 = scmp.lt.s32.totalorder %s17, 1
      %s247 = scalar_select %p246, %s17, 1
      %p248 = scmp.lt.s32.totalorder %s245, 1
      %s249 = scalar_select %p248, %s245, 1
      %s250 = smul.addr %s247, 2
      %s251 = sadd.s32 %s249, %s250
      %s252 = smul.addr %s251, 8
      %s253 = scalar_lea.vmem %s2, %s252
      // Predicated region
      $region29: #{nested_mdta_forward.12} parent=27 // pred_check
        %p254 = pneg %p94
      $region30: #{nested_mdta_forward.12} parent=27 // pred_check_branch
        %256 = sbr.rel (%p254) target = $region32
      $region31: #{nested_mdta_forward.12} parent=27 // pred_region
        %s257 = smul.u32 2, %s18
      $region32: #{nested_mdta_forward.12} parent=27 // pred_fallthru
        _
    $region28: #{nested_mdta_forward.12} parent=5 // pred_fallthru
      _
    %p258 = scmp.le.s32.totalorder 2, %s8
    // Predicated region
    $region33: #{nested_mdta_forward.12} parent=5 // pred_check
      %p259 = pneg %p258
    $region34: #{nested_mdta_forward.12} parent=5 // pred_check_branch
      %261 = sbr.rel (%p259) target = $region36
    $region35: #{nested_mdta_forward.12} parent=5 // pred_region
      %s262 = ssub.s32 %s8, 2
      // Predicated region
      $region37: #{nested_mdta_forward.12} parent=35 // pred_check
        %p263 = pneg %p100
      $region38: #{nested_mdta_forward.12} parent=35 // pred_check_branch
        %265 = sbr.rel (%p263) target = $region40
      $region39: #{nested_mdta_forward.12} parent=35 // pred_region
        %s266 = smul.u32 2, %s20
        %p267 = scmp.lt.s32.totalorder %s19, 1
        %s268 = scalar_select %p267, %s19, 1
        %p269 = scmp.lt.s32.totalorder %s266, 1
        %s270 = scalar_select %p269, %s266, 1
        %s271 = smul.addr %s268, 2
        %s272 = sadd.s32 %s270, %s271
        %s273 = smul.addr %s272, 8
        %s274 = scalar_lea.vmem %s2, %s273
      $region40: #{nested_mdta_forward.12} parent=35 // pred_fallthru
        _
    $region36: #{nested_mdta_forward.12} parent=5 // pred_fallthru
      _
  $region6: #{nested_mdta_forward.12} parent=0 // loop_footer
    %s12 = sadd.s32 1, %s8
  $region7: #{nested_mdta_forward.12} parent=0 // loop_footer_branch
    %7 = sbr.rel target = $region3
  $region8: #{nested_mdta_forward.12} parent=0 // loop_exit
    _

// kernel: nested_mdta_forward.17
$region0: #{nested_mdta_forward.17}
  #allocation0 [shape = 'u32[]', space=smem, size = 0x4, offset = 0x4, fixed_abs, tag = 'smem constant byte address 0x4 - core index']
  #allocation1 [shape = 'u32[144,128]{1,0:T(1,128)}', space=vmem, size = 0x12000, scoped, tag = 'internal scratch']
  %s0 = inlined_call_operand.vmem [shape: f32[4,4,4], index: 0, kind: input, shape index: {}]
  %s1 = inlined_call_operand.vmem [shape: f32[4,4,4], index: 1, kind: input, shape index: {}]
  %s2 = inlined_call_operand.hbm [shape: f32[4,4,4], index: 2, kind: output, shape index: {}]
  %s3 = sld [smem:[#allocation0]]
  $region18: #{nested_mdta_forward.17} parent=0
    _
  %s5 = ssub.s32 1, %s3
  %s6 = scalar_select 0, %s5, %s3
  $region1: #{nested_mdta_forward.17} parent=0
    #allocation2 [shape = 'u8[8192]{0}', space=vmem, size = 0x2000, scoped, tag = 'output window, operand 0, single buffered']
    #allocation3 [shape = 's32[1]{0}', space=sflag, size = 0x4, scoped, tag = 'scoped memory for nested_mdta_forward.17']
    %7 = vsyncpa [#allocation3], 0
    // Predicated region
    $region2: #{nested_mdta_forward.17} parent=1 // pred_check
      _
    $region3: #{nested_mdta_forward.17} parent=1 // pred_check_branch
      %9 = sbr.rel (0) target = $region5
    $region4: #{nested_mdta_forward.17} parent=1 // pred_region
      _
    $region5: #{nested_mdta_forward.17} parent=1 // pred_fallthru
      _
    // Predicated region
    $region6: #{nested_mdta_forward.17} parent=1 // pred_check
      _
    $region7: #{nested_mdta_forward.17} parent=1 // pred_check_branch
      %11 = sbr.rel (0) target = $region9
    $region8: #{nested_mdta_forward.17} parent=1 // pred_region
      _
    $region9: #{nested_mdta_forward.17} parent=1 // pred_fallthru
      _
    %v12 = vld [vmem:[%s0] sm:$0xf]
    %v13 = vld [vmem:[%s0 + $0x4] sm:$0xf]
    %v14 = vld [vmem:[%s0 + $0x8] sm:$0xf]
    %v15 = vld [vmem:[%s0 + $0xc] sm:$0xf]
    %v16 = vld [vmem:[%s1] sm:$0xf]
    %v17 = vld [vmem:[%s1 + $0x4] sm:$0xf]
    %v18 = vld [vmem:[%s1 + $0x8] sm:$0xf]
    %v19 = vld [vmem:[%s1 + $0xc] sm:$0xf]
    %vm20 = vcmask 31744
    %v22 = vsel %vm20, %v12, 0
    %vm24 = vcmask 1043456
    %v26 = vsel %vm24, %v16, 0
    %28 = vmatprep.subr.mxu0 0.0
    %29 = vmatpush1.msra.mxu0 %v26
    %30 = vmatprep.subr.mxu0 0.0
    %31 = vmatpush1.msra.mxu0 0.0
    %32 = vmatprep.subr.mxu0 0.0
    %33 = vmatpush1.msra.mxu0 0.0
    %34 = vmatprep.subr.mxu0 0.0
    %35 = vmatpush1.msra.mxu0 0.0
    %36 = vmatprep.subr.mxu0 0.0
    %37 = vmatpush1.msra.mxu0 0.0
    %38 = vmatprep.subr.mxu0 0.0
    %39 = vmatpush1.msra.mxu0 0.0
    %40 = vmatprep.subr.mxu0 0.0
    %41 = vmatpush1.msra.mxu0 0.0
    %42 = vmatprep.subr.mxu0 0.0
    %43 = vmatpush1.msra.mxu0 0.0
    %44 = vmatprep.subr.mxu0 0.0
    %45 = vmatpush1.msra.mxu0 0.0
    %46 = vmatprep.subr.mxu0 0.0
    %47 = vmatpush1.msra.mxu0 0.0
    %48 = vmatprep.subr.mxu0 0.0
    %49 = vmatpush1.msra.mxu0 0.0
    %50 = vmatprep.subr.mxu0 0.0
    %51 = vmatpush1.msra.mxu0 0.0
    %52 = vmatprep.subr.mxu0 0.0
    %53 = vmatpush1.msra.mxu0 0.0
    %54 = vmatprep.subr.mxu0 0.0
    %55 = vmatpush1.msra.mxu0 0.0
    %56 = vmatprep.subr.mxu0 0.0
    %57 = vmatpush1.msra.mxu0 0.0
    %58 = vmatprep.subr.mxu0 0.0
    %59 = vmatpush1.msra.mxu0 0.0
    %60 = vmatprep.subr.mxu0 0.0
    %61 = vmatpush1.msra.mxu0 0.0
    %62 = vmatprep.subr.mxu0 0.0
    %63 = vmatpush1.msra.mxu0 0.0
    %64 = vmatprep.subr.mxu0 0.0
    %65 = vmatpush1.msra.mxu0 0.0
    %66 = vmatprep.subr.mxu0 0.0
    %67 = vmatpush1.msra.mxu0 0.0
    %68 = vmatprep.subr.mxu0 0.0
    %69 = vmatpush1.msra.mxu0 0.0
    %70 = vmatprep.subr.mxu0 0.0
    %71 = vmatpush1.msra.mxu0 0.0
    %72 = vmatprep.subr.mxu0 0.0
    %73 = vmatpush1.msra.mxu0 0.0
    %74 = vmatprep.subr.mxu0 0.0
    %75 = vmatpush1.msra.mxu0 0.0
    %76 = vmatprep.subr.mxu0 0.0
    %77 = vmatpush1.msra.mxu0 0.0
    %78 = vmatprep.subr.mxu0 0.0
    %79 = vmatpush1.msra.mxu0 0.0
    %80 = vmatprep.subr.mxu0 0.0
    %81 = vmatpush1.msra.mxu0 0.0
    %82 = vmatprep.subr.mxu0 0.0
    %83 = vmatpush1.msra.mxu0 0.0
    %84 = vmatprep.subr.mxu0 0.0
    %85 = vmatpush1.msra.mxu0 0.0
    %86 = vmatprep.subr.mxu0 0.0
    %87 = vmatpush1.msra.mxu0 0.0
    %88 = vmatprep.subr.mxu0 0.0
    %89 = vmatpush1.msra.mxu0 0.0
    %90 = vmatprep.subr.mxu0 0.0
    %91 = vmatpush1.msra.mxu0 0.0
    %92 = vmatprep.mubr.f32.mxu0 0.0
    %93 = vmatmul.mubr.f32.gmra.mrb[0].mxu0 %v22
    %v94 = vpop.f32.mrb[0].mxu0
    %v95 = vadd.f32 0.0, %v94
    %v96 = vpop.f32.mrb[0].mxu0
    %97 = vdwg.mxu0
    %v99 = vsel %vm20, %v13, 0
    %v102 = vsel %vm24, %v17, 0
    %104 = vmatprep.subr.mxu0 0.0
    %105 = vmatpush1.msra.mxu0 %v102
    %106 = vmatprep.subr.mxu0 0.0
    %107 = vmatpush1.msra.mxu0 0.0
    %108 = vmatprep.subr.mxu0 0.0
    %109 = vmatpush1.msra.mxu0 0.0
    %110 = vmatprep.subr.mxu0 0.0
    %111 = vmatpush1.msra.mxu0 0.0
    %112 = vmatprep.subr.mxu0 0.0
    %113 = vmatpush1.msra.mxu0 0.0
    %114 = vmatprep.subr.mxu0 0.0
    %115 = vmatpush1.msra.mxu0 0.0
    %116 = vmatprep.subr.mxu0 0.0
    %117 = vmatpush1.msra.mxu0 0.0
    %118 = vmatprep.subr.mxu0 0.0
    %119 = vmatpush1.msra.mxu0 0.0
    %120 = vmatprep.subr.mxu0 0.0
    %121 = vmatpush1.msra.mxu0 0.0
    %122 = vmatprep.subr.mxu0 0.0
    %123 = vmatpush1.msra.mxu0 0.0
    %124 = vmatprep.subr.mxu0 0.0
    %125 = vmatpush1.msra.mxu0 0.0
    %126 = vmatprep.subr.mxu0 0.0
    %127 = vmatpush1.msra.mxu0 0.0
    %128 = vmatprep.subr.mxu0 0.0
    %129 = vmatpush1.msra.mxu0 0.0
    %130 = vmatprep.subr.mxu0 0.0
    %131 = vmatpush1.msra.mxu0 0.0
    %132 = vmatprep.subr.mxu0 0.0
    %133 = vmatpush1.msra.mxu0 0.0
    %134 = vmatprep.subr.mxu0 0.0
    %135 = vmatpush1.msra.mxu0 0.0
    %136 = vmatprep.subr.mxu0 0.0
    %137 = vmatpush1.msra.mxu0 0.0
    %138 = vmatprep.subr.mxu0 0.0
    %139 = vmatpush1.msra.mxu0 0.0
    %140 = vmatprep.subr.mxu0 0.0
    %141 = vmatpush1.msra.mxu0 0.0
    %142 = vmatprep.subr.mxu0 0.0
    %143 = vmatpush1.msra.mxu0 0.0
    %144 = vmatprep.subr.mxu0 0.0
    %145 = vmatpush1.msra.mxu0 0.0
    %146 = vmatprep.subr.mxu0 0.0
    %147 = vmatpush1.msra.mxu0 0.0
    %148 = vmatprep.subr.mxu0 0.0
    %149 = vmatpush1.msra.mxu0 0.0
    %150 = vmatprep.subr.mxu0 0.0
    %151 = vmatpush1.msra.mxu0 0.0
    %152 = vmatprep.subr.mxu0 0.0
    %153 = vmatpush1.msra.mxu0 0.0
    %154 = vmatprep.subr.mxu0 0.0
    %155 = vmatpush1.msra.mxu0 0.0
    %156 = vmatprep.subr.mxu0 0.0
    %157 = vmatpush1.msra.mxu0 0.0
    %158 = vmatprep.subr.mxu0 0.0
    %159 = vmatpush1.msra.mxu0 0.0
    %160 = vmatprep.subr.mxu0 0.0
    %161 = vmatpush1.msra.mxu0 0.0
    %162 = vmatprep.subr.mxu0 0.0
    %163 = vmatpush1.msra.mxu0 0.0
    %164 = vmatprep.subr.mxu0 0.0
    %165 = vmatpush1.msra.mxu0 0.0
    %166 = vmatprep.subr.mxu0 0.0
    %167 = vmatpush1.msra.mxu0 0.0
    %168 = vmatprep.mubr.f32.mxu0 0.0
    %169 = vmatmul.mubr.f32.gmra.mrb[0].mxu0 %v99
    %v170 = vpop.f32.mrb[0].mxu0
    %v171 = vadd.f32 0.0, %v170
    %v172 = vpop.f32.mrb[0].mxu0
    %173 = vdwg.mxu0
    %v175 = vsel %vm20, %v14, 0
    %v178 = vsel %vm24, %v18, 0
    %180 = vmatprep.subr.mxu0 0.0
    %181 = vmatpush1.msra.mxu0 %v178
    %182 = vmatprep.subr.mxu0 0.0
    %183 = vmatpush1.msra.mxu0 0.0
    %184 = vmatprep.subr.mxu0 0.0
    %185 = vmatpush1.msra.mxu0 0.0
    %186 = vmatprep.subr.mxu0 0.0
    %187 = vmatpush1.msra.mxu0 0.0
    %188 = vmatprep.subr.mxu0 0.0
    %189 = vmatpush1.msra.mxu0 0.0
    %190 = vmatprep.subr.mxu0 0.0
    %191 = vmatpush1.msra.mxu0 0.0
    %192 = vmatprep.subr.mxu0 0.0
    %193 = vmatpush1.msra.mxu0 0.0
    %194 = vmatprep.subr.mxu0 0.0
    %195 = vmatpush1.msra.mxu0 0.0
    %196 = vmatprep.subr.mxu0 0.0
    %197 = vmatpush1.msra.mxu0 0.0
    %198 = vmatprep.subr.mxu0 0.0
    %199 = vmatpush1.msra.mxu0 0.0
    %200 = vmatprep.subr.mxu0 0.0
    %201 = vmatpush1.msra.mxu0 0.0
    %202 = vmatprep.subr.mxu0 0.0
    %203 = vmatpush1.msra.mxu0 0.0
    %204 = vmatprep.subr.mxu0 0.0
    %205 = vmatpush1.msra.mxu0 0.0
    %206 = vmatprep.subr.mxu0 0.0
    %207 = vmatpush1.msra.mxu0 0.0
    %208 = vmatprep.subr.mxu0 0.0
    %209 = vmatpush1.msra.mxu0 0.0
    %210 = vmatprep.subr.mxu0 0.0
    %211 = vmatpush1.msra.mxu0 0.0
    %212 = vmatprep.subr.mxu0 0.0
    %213 = vmatpush1.msra.mxu0 0.0
    %214 = vmatprep.subr.mxu0 0.0
    %215 = vmatpush1.msra.mxu0 0.0
    %216 = vmatprep.subr.mxu0 0.0
    %217 = vmatpush1.msra.mxu0 0.0
    %218 = vmatprep.subr.mxu0 0.0
    %219 = vmatpush1.msra.mxu0 0.0
    %220 = vmatprep.subr.mxu0 0.0
    %221 = vmatpush1.msra.mxu0 0.0
    %222 = vmatprep.subr.mxu0 0.0
    %223 = vmatpush1.msra.mxu0 0.0
    %224 = vmatprep.subr.mxu0 0.0
    %225 = vmatpush1.msra.mxu0 0.0
    %226 = vmatprep.subr.mxu0 0.0
    %227 = vmatpush1.msra.mxu0 0.0
    %228 = vmatprep.subr.mxu0 0.0
    %229 = vmatpush1.msra.mxu0 0.0
    %230 = vmatprep.subr.mxu0 0.0
    %231 = vmatpush1.msra.mxu0 0.0
    %232 = vmatprep.subr.mxu0 0.0
    %233 = vmatpush1.msra.mxu0 0.0
    %234 = vmatprep.subr.mxu0 0.0
    %235 = vmatpush1.msra.mxu0 0.0
    %236 = vmatprep.subr.mxu0 0.0
    %237 = vmatpush1.msra.mxu0 0.0
    %238 = vmatprep.subr.mxu0 0.0
    %239 = vmatpush1.msra.mxu0 0.0
    %240 = vmatprep.subr.mxu0 0.0
    %241 = vmatpush1.msra.mxu0 0.0
    %242 = vmatprep.subr.mxu0 0.0
    %243 = vmatpush1.msra.mxu0 0.0
    %244 = vmatprep.mubr.f32.mxu0 0.0
    %245 = vmatmul.mubr.f32.gmra.mrb[0].mxu0 %v175
    %v246 = vpop.f32.mrb[0].mxu0
    %v247 = vadd.f32 0.0, %v246
    %v248 = vpop.f32.mrb[0].mxu0
    %249 = vdwg.mxu0
    %v251 = vsel %vm20, %v15, 0
    %v254 = vsel %vm24, %v19, 0
    %256 = vmatprep.subr.mxu0 0.0
    %257 = vmatpush1.msra.mxu0 %v254
    %258 = vmatprep.subr.mxu0 0.0
    %259 = vmatpush1.msra.mxu0 0.0
    %260 = vmatprep.subr.mxu0 0.0
    %261 = vmatpush1.msra.mxu0 0.0
    %262 = vmatprep.subr.mxu0 0.0
    %263 = vmatpush1.msra.mxu0 0.0
    %264 = vmatprep.subr.mxu0 0.0
    %265 = vmatpush1.msra.mxu0 0.0
    %266 = vmatprep.subr.mxu0 0.0
    %267 = vmatpush1.msra.mxu0 0.0
    %268 = vmatprep.subr.mxu0 0.0
    %269 = vmatpush1.msra.mxu0 0.0
    %270 = vmatprep.subr.mxu0 0.0
    %271 = vmatpush1.msra.mxu0 0.0
    %272 = vmatprep.subr.mxu0 0.0
    %273 = vmatpush1.msra.mxu0 0.0
    %274 = vmatprep.subr.mxu0 0.0
    %275 = vmatpush1.msra.mxu0 0.0
    %276 = vmatprep.subr.mxu0 0.0
    %277 = vmatpush1.msra.mxu0 0.0
    %278 = vmatprep.subr.mxu0 0.0
    %279 = vmatpush1.msra.mxu0 0.0
    %280 = vmatprep.subr.mxu0 0.0
    %281 = vmatpush1.msra.mxu0 0.0
    %282 = vmatprep.subr.mxu0 0.0
    %283 = vmatpush1.msra.mxu0 0.0
    %284 = vmatprep.subr.mxu0 0.0
    %285 = vmatpush1.msra.mxu0 0.0
    %286 = vmatprep.subr.mxu0 0.0
    %287 = vmatpush1.msra.mxu0 0.0
    %288 = vmatprep.subr.mxu0 0.0
    %289 = vmatpush1.msra.mxu0 0.0
    %290 = vmatprep.subr.mxu0 0.0
    %291 = vmatpush1.msra.mxu0 0.0
    %292 = vmatprep.subr.mxu0 0.0
    %293 = vmatpush1.msra.mxu0 0.0
    %294 = vmatprep.subr.mxu0 0.0
    %295 = vmatpush1.msra.mxu0 0.0
    %296 = vmatprep.subr.mxu0 0.0
    %297 = vmatpush1.msra.mxu0 0.0
    %298 = vmatprep.subr.mxu0 0.0
    %299 = vmatpush1.msra.mxu0 0.0
    %300 = vmatprep.subr.mxu0 0.0
    %301 = vmatpush1.msra.mxu0 0.0
    %302 = vmatprep.subr.mxu0 0.0
    %303 = vmatpush1.msra.mxu0 0.0
    %304 = vmatprep.subr.mxu0 0.0
    %305 = vmatpush1.msra.mxu0 0.0
    %306 = vmatprep.subr.mxu0 0.0
    %307 = vmatpush1.msra.mxu0 0.0
    %308 = vmatprep.subr.mxu0 0.0
    %309 = vmatpush1.msra.mxu0 0.0
    %310 = vmatprep.subr.mxu0 0.0
    %311 = vmatpush1.msra.mxu0 0.0
    %312 = vmatprep.subr.mxu0 0.0
    %313 = vmatpush1.msra.mxu0 0.0
    %314 = vmatprep.subr.mxu0 0.0
    %315 = vmatpush1.msra.mxu0 0.0
    %316 = vmatprep.subr.mxu0 0.0
    %317 = vmatpush1.msra.mxu0 0.0
    %318 = vmatprep.subr.mxu0 0.0
    %319 = vmatpush1.msra.mxu0 0.0
    %320 = vmatprep.mubr.f32.mxu0 0.0
    %321 = vmatmul.mubr.f32.gmra.mrb[0].mxu0 %v251
    %v322 = vpop.f32.mrb[0].mxu0
    %v323 = vadd.f32 0.0, %v322
    %v324 = vpop.f32.mrb[0].mxu0
    %325 = vdwg.mxu0
    %vm326 = vcmask 27648
    %327 = vst.msk [vmem:[#allocation2] sm:$0xf] %vm326, %v95
    %328 = vst.msk [vmem:[#allocation2 + $0x4] sm:$0xf] %vm326, %v171
    %329 = vst.msk [vmem:[#allocation2 + $0x8] sm:$0xf] %vm326, %v247
    %330 = vst.msk [vmem:[#allocation2 + $0xc] sm:$0xf] %vm326, %v323
    // Predicated region
    $region10: #{nested_mdta_forward.17} parent=1 // pred_check
      _
    $region11: #{nested_mdta_forward.17} parent=1 // pred_check_branch
      %332 = sbr.rel (0) target = $region13
    $region12: #{nested_mdta_forward.17} parent=1 // pred_region
      %s334 = ssub.s32 256, 256
      %335 = vsyncadd [#allocation3], %s334
      %s336 = sshll.u32 [#allocation2], 4
      %s337 = int_to_ptr.vmem [resolvable:$true] %s336
      %342 = dma.vmem_to_hbm [thread:$0]  %s337, 256, %s2, [#allocation3], 64, 64, 4
    $region13: #{nested_mdta_forward.17} parent=1 // pred_fallthru
      _
    // Predicated region
    $region14: #{nested_mdta_forward.17} parent=1 // pred_check
      _
    $region15: #{nested_mdta_forward.17} parent=1 // pred_check_branch
      %344 = sbr.rel (0) target = $region17
    $region16: #{nested_mdta_forward.17} parent=1 // pred_region
      %345 = dma.done [#allocation3], 256
    $region17: #{nested_mdta_forward.17} parent=1 // pred_fallthru
      _
    %346 = vsyncpa [#allocation3], 1

</llo_original>
